<compile_context>
chip_gen: v7x
topology: tpu7x:2x2x1
jax: 0.10.0
libtpu: 0.0.40
codegen_flags: <defaults>
</compile_context>

<pallas_src>
import functools
import math

import jax
import jax.numpy as jnp
from jax.experimental import pallas as pl
from jax.experimental.pallas import tpu as pltpu


_VMEM_LIMIT = 32 * 1024 * 1024  # safe on v5e/v6e (128 MiB) and v7x (64 MiB/TC)


def _ceil_to(x, m):
    return ((x + m - 1) // m) * m


def _pick_tile(total, cap):
    """Largest tile <= cap that divides `total` (total is a multiple of 128)."""
    if total <= cap:
        return total
    n = -(-total // cap)
    while total % n:
        n += 1
    return total // n


# ----------------------------- linear kernels ------------------------------ #

def _linear_kernel(x_ref, w_ref, b_ref, o_ref, *, pre_relu, out_scale):
    x = x_ref[...]
    if pre_relu:
        x = jnp.maximum(x, 0.0)
    y = jnp.dot(x.astype(jnp.bfloat16), w_ref[...],
                preferred_element_type=jnp.float32) + b_ref[...]
    if out_scale != 1.0:
        y = y * jnp.float32(out_scale)
    o_ref[...] = y.astype(o_ref.dtype)


def linear(x, w, b, *, out_dtype=jnp.float32, pre_relu=False, out_scale=1.0,
           tm=256, tn=1536):
    """epilogue(x @ w + b).  w, b pre-padded/bf16 from prepare_params().

    x: (M, K) any float dtype; w: (Kp, Np) bf16; b: (1, Np) f32.
    Returns (M, Np); caller slices columns if N < Np (only fc1)."""
    M, K = x.shape
    Kp, Np = w.shape
    TM = min(tm, _ceil_to(M, 16))
    Mp = _ceil_to(M, TM)
    TN = _pick_tile(Np, tn)
    if (Mp, Kp) != (M, K):
        x = jnp.pad(x, ((0, Mp - M), (0, Kp - K)))

    out = pl.pallas_call(
        functools.partial(_linear_kernel, pre_relu=pre_relu, out_scale=out_scale),
        out_shape=jax.ShapeDtypeStruct((Mp, Np), out_dtype),
        grid=(Mp // TM, Np // TN),
        in_specs=[pl.BlockSpec((TM, Kp), lambda i, j: (i, 0)),
                  pl.BlockSpec((Kp, TN), lambda i, j: (0, j)),
                  pl.BlockSpec((1, TN), lambda i, j: (0, j))],
        out_specs=pl.BlockSpec((TM, TN), lambda i, j: (i, j)),
        compiler_params=pltpu.CompilerParams(
            dimension_semantics=("parallel", "parallel"),
            vmem_limit_bytes=_VMEM_LIMIT),
        cost_estimate=pl.CostEstimate(
            flops=int(2 * Mp * Np * Kp), transcendentals=0,
            bytes_accessed=int(Kp * Np * 2 + Mp * Kp * 4 + Mp * Np * 4)),
    )(x, w, b)
    return out[:M] if Mp != M else out


# ------------------ matmul with fused residual-add + LayerNorm -------------- #

def _linear_add_ln_kernel(x_ref, w_ref, b_ref, res_ref, g_ref, bt_ref, o_ref, *, eps):
    y = jnp.dot(x_ref[...].astype(jnp.bfloat16), w_ref[...],
                preferred_element_type=jnp.float32) + b_ref[...]
    y = y + res_ref[...]
    mu = jnp.mean(y, axis=-1, keepdims=True)
    var = jnp.mean(jnp.square(y - mu), axis=-1, keepdims=True)  # biased, like torch
    o_ref[...] = ((y - mu) * jax.lax.rsqrt(var + eps)) * g_ref[...] + bt_ref[...]


def linear_add_ln(x, w, b, residual, gamma, beta, *, eps=1e-5, tm=256):
    """LayerNorm(residual + x @ w + b); full-E tile so LN lives in the epilogue."""
    M, K = x.shape
    Kp, E = w.shape
    TM = min(tm, _ceil_to(M, 16))
    Mp = _ceil_to(M, TM)
    if (Mp, Kp) != (M, K):
        x = jnp.pad(x, ((0, Mp - M), (0, Kp - K)))
    if Mp != M:
        residual = jnp.pad(residual, ((0, Mp - M), (0, 0)))

    out = pl.pallas_call(
        functools.partial(_linear_add_ln_kernel, eps=eps),
        out_shape=jax.ShapeDtypeStruct((Mp, E), jnp.float32),
        grid=(Mp // TM,),
        in_specs=[pl.BlockSpec((TM, Kp), lambda i: (i, 0)),
                  pl.BlockSpec((Kp, E), lambda i: (0, 0)),
                  pl.BlockSpec((1, E), lambda i: (0, 0)),
                  pl.BlockSpec((TM, E), lambda i: (i, 0)),
                  pl.BlockSpec((1, E), lambda i: (0, 0)),
                  pl.BlockSpec((1, E), lambda i: (0, 0))],
        out_specs=pl.BlockSpec((TM, E), lambda i: (i, 0)),
        compiler_params=pltpu.CompilerParams(
            dimension_semantics=("parallel",),
            vmem_limit_bytes=_VMEM_LIMIT),
        cost_estimate=pl.CostEstimate(
            flops=int(2 * Mp * E * Kp), transcendentals=0,
            bytes_accessed=int(Kp * E * 2 + Mp * (Kp + 2 * E) * 4)),
    )(x, w, b, residual, gamma, beta)
    return out[:M] if Mp != M else out


# --------- fused feed-forward (w1 + relu + w2 + residual + LayerNorm) -------- #

def _ffn_ln_kernel(x_ref, w1_ref, b1_ref, w2_ref, b2_ref, res_ref, g_ref, bt_ref,
                   o_ref, acc_ref, *, n_f, eps):
    f = pl.program_id(1)

    @pl.when(f == 0)
    def _():
        acc_ref[...] = jnp.zeros_like(acc_ref)

    h = jnp.dot(x_ref[...].astype(jnp.bfloat16), w1_ref[...],
                preferred_element_type=jnp.float32) + b1_ref[...]
    h = jnp.maximum(h, 0.0)
    acc_ref[...] += jnp.dot(h.astype(jnp.bfloat16), w2_ref[...],
                            preferred_element_type=jnp.float32)

    @pl.when(f == n_f - 1)
    def _():
        y = acc_ref[...] + b2_ref[...] + res_ref[...]
        mu = jnp.mean(y, axis=-1, keepdims=True)
        var = jnp.mean(jnp.square(y - mu), axis=-1, keepdims=True)
        o_ref[...] = ((y - mu) * jax.lax.rsqrt(var + eps)) * g_ref[...] + bt_ref[...]


def ffn_ln(x, w1, b1, w2, b2, residual, gamma, beta, *, eps=1e-5, tm=256, tf=1024):
    """LayerNorm(residual + relu(x @ w1 + b1) @ w2 + b2); hidden stays in VMEM."""
    M, E = x.shape
    Fp = w1.shape[1]
    TM = min(tm, _ceil_to(M, 16))
    Mp = _ceil_to(M, TM)
    TF = _pick_tile(Fp, tf)
    n_f = Fp // TF
    if Mp != M:
        x = jnp.pad(x, ((0, Mp - M), (0, 0)))
        residual = jnp.pad(residual, ((0, Mp - M), (0, 0)))

    out = pl.pallas_call(
        functools.partial(_ffn_ln_kernel, n_f=n_f, eps=eps),
        out_shape=jax.ShapeDtypeStruct((Mp, E), jnp.float32),
        grid=(Mp // TM, n_f),
        in_specs=[pl.BlockSpec((TM, E), lambda i, f: (i, 0)),
                  pl.BlockSpec((E, TF), lambda i, f: (0, f)),
                  pl.BlockSpec((1, TF), lambda i, f: (0, f)),
                  pl.BlockSpec((TF, E), lambda i, f: (f, 0)),
                  pl.BlockSpec((1, E), lambda i, f: (0, 0)),
                  pl.BlockSpec((TM, E), lambda i, f: (i, 0)),
                  pl.BlockSpec((1, E), lambda i, f: (0, 0)),
                  pl.BlockSpec((1, E), lambda i, f: (0, 0))],
        out_specs=pl.BlockSpec((TM, E), lambda i, f: (i, 0)),
        scratch_shapes=[pltpu.VMEM((TM, E), jnp.float32)],
        compiler_params=pltpu.CompilerParams(
            dimension_semantics=("parallel", "arbitrary"),
            vmem_limit_bytes=_VMEM_LIMIT),
        cost_estimate=pl.CostEstimate(
            flops=int(4 * Mp * E * Fp), transcendentals=0,
            bytes_accessed=int(2 * E * Fp * 2 + 3 * Mp * E * 4)),
    )(x, w1, b1, w2, b2, residual, gamma, beta)
    return out[:M] if Mp != M else out


# ------------------------ scaled dot-product attention ----------------------- #

def _attention_kernel(q_ref, k_ref, v_ref, o_ref):
    # One (batch, head) per grid step; head_dim on the lane axis.
    # 1/sqrt(Dh) is folded into the q-projection weights at prepare time.
    q = q_ref[...]                                   # (Lq, Dh) bf16
    k = k_ref[...]                                   # (Lk, Dh) bf16
    v = v_ref[...]                                   # (Lk, Dh) bf16
    s = jax.lax.dot_general(q, k, (((1,), (1,)), ((), ())),
                            preferred_element_type=jnp.float32)   # (Lq, Lk)
    m = jnp.max(s, axis=-1, keepdims=True)
    p = jnp.exp(s - m)
    l = jnp.sum(p, axis=-1, keepdims=True)
    o = jnp.dot(p.astype(jnp.bfloat16), v, preferred_element_type=jnp.float32)
    o = o * pl.reciprocal(l, approx=True)            # normalize AFTER PV matmul
    o_ref[...] = o.astype(o_ref.dtype)


def attention(q_arr, kv_arr, *, num_heads, head_dim, k_off, v_off):
    """q_arr: (B, Lq, >=H*Dh) bf16 (q in first H*Dh columns);
    kv_arr: (B, Lk, ...) bf16 with k at column-block k_off*Dh, v at v_off*Dh.
    Returns (B, Lq, H*Dh) bf16.  No transposes anywhere — heads are indexed
    straight out of the fused projection layout via BlockSpec."""
    B, Lq, _ = q_arr.shape
    Lk = kv_arr.shape[1]
    Dh = head_dim
    return pl.pallas_call(
        _attention_kernel,
        out_shape=jax.ShapeDtypeStruct((B, Lq, num_heads * Dh), jnp.bfloat16),
        grid=(B, num_heads),
        in_specs=[pl.BlockSpec((None, Lq, Dh), lambda b, h: (b, 0, h)),
                  pl.BlockSpec((None, Lk, Dh), lambda b, h: (b, 0, k_off + h)),
                  pl.BlockSpec((None, Lk, Dh), lambda b, h: (b, 0, v_off + h))],
        out_specs=pl.BlockSpec((None, Lq, Dh), lambda b, h: (b, 0, h)),
        compiler_params=pltpu.CompilerParams(
            dimension_semantics=("parallel", "parallel"),
            vmem_limit_bytes=_VMEM_LIMIT),
        cost_estimate=pl.CostEstimate(
            flops=int(4 * B * num_heads * Lq * Lk * Dh),
            transcendentals=int(B * num_heads * Lq * Lk),
            bytes_accessed=int(B * num_heads * (2 * Lq + 2 * Lk) * Dh * 2)),
    )(q_arr, kv_arr, kv_arr)


# ----------------------------- attention blocks ------------------------------ #

def self_attention(x, p, *, batch, seqlen, num_heads, head_dim):
    """x: (batch*seqlen, E) -> (batch*seqlen, E) bf16 (pre out-projection)."""
    E = num_heads * head_dim
    qkv = linear(x, p["w_qkv"], p["b_qkv"], out_dtype=jnp.bfloat16)      # (M, 3E)
    qkv = qkv[:batch * seqlen].reshape(batch, seqlen, 3 * E)
    o = attention(qkv, qkv, num_heads=num_heads, head_dim=head_dim,
                  k_off=num_heads, v_off=2 * num_heads)                  # (B, L, E)
    return o.reshape(batch * seqlen, E)


def cross_attention(tgt, memory, p, *, batch, tgt_len, src_len, num_heads, head_dim):
    """tgt: (batch*tgt_len, E); memory: (batch*src_len, E) -> (batch*tgt_len, E)."""
    E = num_heads * head_dim
    q = linear(tgt, p["wq"], p["bq"], out_dtype=jnp.bfloat16)
    q = q[:batch * tgt_len].reshape(batch, tgt_len, E)
    kv = linear(memory, p["w_kv"], p["b_kv"], out_dtype=jnp.bfloat16)
    kv = kv[:batch * src_len].reshape(batch, src_len, 2 * E)
    o = attention(q, kv, num_heads=num_heads, head_dim=head_dim,
                  k_off=0, v_off=num_heads)
    return o.reshape(batch * tgt_len, E)


# ----------------------------- transformer layers ----------------------------- #

def encoder_layer(x, p, *, batch, seqlen, num_heads, head_dim):
    """Post-norm TransformerEncoderLayer (relu activation, eval)."""
    a = self_attention(x, p["self_attn"], batch=batch, seqlen=seqlen,
                       num_heads=num_heads, head_dim=head_dim)
    h = linear_add_ln(a, p["self_attn"]["wo"], p["self_attn"]["bo"],
                      residual=x, gamma=p["norm1_g"], beta=p["norm1_b"])
    return ffn_ln(h, p["ff_w1"], p["ff_b1"], p["ff_w2"], p["ff_b2"],
                  residual=h, gamma=p["norm2_g"], beta=p["norm2_b"])


def decoder_layer(tgt, memory, p, *, batch, tgt_len, src_len, num_heads, head_dim):
    """Post-norm TransformerDecoderLayer (relu, eval, no masks — as in the ref)."""
    a = self_attention(tgt, p["self_attn"], batch=batch, seqlen=tgt_len,
                       num_heads=num_heads, head_dim=head_dim)
    h = linear_add_ln(a, p["self_attn"]["wo"], p["self_attn"]["bo"],
                      residual=tgt, gamma=p["norm1_g"], beta=p["norm1_b"])
    c = cross_attention(h, memory, p["cross_attn"], batch=batch, tgt_len=tgt_len,
                        src_len=src_len, num_heads=num_heads, head_dim=head_dim)
    h = linear_add_ln(c, p["cross_attn"]["wo"], p["cross_attn"]["bo"],
                      residual=h, gamma=p["norm2_g"], beta=p["norm2_b"])
    return ffn_ln(h, p["ff_w1"], p["ff_b1"], p["ff_w2"], p["ff_b2"],
                  residual=h, gamma=p["norm3_g"], beta=p["norm3_b"])


def transformer_forward(params, input_feature, *, num_heads, head_dim, lookahead,
                        out_features):
    """input_feature: (S, B, input_dims) -> (lookahead+1, B, out_features)."""
    S, B, _ = input_feature.shape
    E = num_heads * head_dim
    # Batch-major 2-D activations throughout; one tiny transpose of the raw input.
    x = jnp.transpose(input_feature, (1, 0, 2)).reshape(B * S, -1)
    # x = Linear(input) * sqrt(enc_input_dims)  (enc_input_dims == E; scale fused)
    x = linear(x, params["encoder_w"], params["encoder_b"], out_scale=math.sqrt(E))
    for lp in params["enc_layers"]:
        x = encoder_layer(x, lp, batch=B, seqlen=S,
                          num_heads=num_heads, head_dim=head_dim)
    T = lookahead + 1
    tgt = jnp.zeros((B * T, E), jnp.float32)
    for lp in params["dec_layers"]:
        tgt = decoder_layer(tgt, x, lp, batch=B, tgt_len=T, src_len=S,
                            num_heads=num_heads, head_dim=head_dim)
    # out = fc1(relu(x))  (relu fused as pre-activation in the matmul kernel)
    out = linear(tgt, params["fc1_w"], params["fc1_b"], pre_relu=True)
    out = out[:, :out_features].reshape(B, T, out_features)
    return jnp.transpose(out, (1, 0, 2))


# ------------------------------ parameters ----------------------------------- #

def init_params(key, cfg):
    """Logical f32 parameters (same structure as the PyTorch module)."""
    keys = iter(jax.random.split(key, 512))

    def dense(fan_in, fan_out):
        w = jax.random.normal(next(keys), (fan_in, fan_out), jnp.float32) / math.sqrt(fan_in)
        b = jax.random.normal(next(keys), (fan_out,), jnp.float32) * 0.01
        return w, b

    E, F = cfg["E"], cfg["ff"]

    def mha():
        wq, bq = dense(E, E); wk, bk = dense(E, E)
        wv, bv = dense(E, E); wo, bo = dense(E, E)
        return dict(wq=wq, bq=bq, wk=wk, bk=bk, wv=wv, bv=bv, wo=wo, bo=bo)

    def layer(dec=False):
        w1, b1 = dense(E, F); w2, b2 = dense(F, E)
        d = dict(self_attn=mha(),
                 norm1_g=jnp.ones((E,), jnp.float32), norm1_b=jnp.zeros((E,), jnp.float32),
                 norm2_g=jnp.ones((E,), jnp.float32), norm2_b=jnp.zeros((E,), jnp.float32),
                 ff_w1=w1, ff_b1=b1, ff_w2=w2, ff_b2=b2)
        if dec:
            d.update(cross_attn=mha(),
                     norm3_g=jnp.ones((E,), jnp.float32),
                     norm3_b=jnp.zeros((E,), jnp.float32))
        return d

    enc_w, enc_b = dense(cfg["input_dims"], E)
    fc1_w, fc1_b = dense(E, 3)
    return dict(encoder_w=enc_w, encoder_b=enc_b,
                enc_layers=[layer() for _ in range(cfg["num_layers"])],
                dec_layers=[layer(dec=True) for _ in range(cfg["num_layers"])],
                fc1_w=fc1_w, fc1_b=fc1_b)


def _prep_w(w, b):
    """Pad to lane-aligned shape and cast to bf16 ONCE (outside the jitted fwd)."""
    K, N = w.shape
    Kp, Np = _ceil_to(K, 128), _ceil_to(N, 128)
    wp = jnp.pad(w, ((0, Kp - K), (0, Np - N))).astype(jnp.bfloat16)
    bp = jnp.pad(b, (0, Np - N)).astype(jnp.float32).reshape(1, Np)
    return wp, bp


def prepare_params(raw, cfg):
    """Kernel-ready params: fused QKV/KV, folded q-scale, padded bf16 weights."""
    E = cfg["E"]
    Dh = E // cfg["num_heads"]
    qs = 1.0 / math.sqrt(Dh)

    def prep_ln(g, b):
        return (g.reshape(1, -1).astype(jnp.float32),
                b.reshape(1, -1).astype(jnp.float32))

    def prep_self(a):
        w_qkv = jnp.concatenate([a["wq"] * qs, a["wk"], a["wv"]], axis=1)
        b_qkv = jnp.concatenate([a["bq"] * qs, a["bk"], a["bv"]], axis=0)
        wqkv, bqkv = _prep_w(w_qkv, b_qkv)
        wo, bo = _prep_w(a["wo"], a["bo"])
        return dict(w_qkv=wqkv, b_qkv=bqkv, wo=wo, bo=bo)

    def prep_cross(a):
        wq, bq = _prep_w(a["wq"] * qs, a["bq"] * qs)
        w_kv = jnp.concatenate([a["wk"], a["wv"]], axis=1)
        b_kv = jnp.concatenate([a["bk"], a["bv"]], axis=0)
        wkv, bkv = _prep_w(w_kv, b_kv)
        wo, bo = _prep_w(a["wo"], a["bo"])
        return dict(wq=wq, bq=bq, w_kv=wkv, b_kv=bkv, wo=wo, bo=bo)

    def prep_layer(lp, dec=False):
        n1g, n1b = prep_ln(lp["norm1_g"], lp["norm1_b"])
        n2g, n2b = prep_ln(lp["norm2_g"], lp["norm2_b"])
        w1, b1 = _prep_w(lp["ff_w1"], lp["ff_b1"])
        w2, b2 = _prep_w(lp["ff_w2"], lp["ff_b2"])
        d = dict(self_attn=prep_self(lp["self_attn"]),
                 norm1_g=n1g, norm1_b=n1b, norm2_g=n2g, norm2_b=n2b,
                 ff_w1=w1, ff_b1=b1, ff_w2=w2, ff_b2=b2)
        if dec:
            n3g, n3b = prep_ln(lp["norm3_g"], lp["norm3_b"])
            d.update(cross_attn=prep_cross(lp["cross_attn"]),
                     norm3_g=n3g, norm3_b=n3b)
        return d

    enc_w, enc_b = _prep_w(raw["encoder_w"], raw["encoder_b"])
    fc1_w, fc1_b = _prep_w(raw["fc1_w"], raw["fc1_b"])
    return dict(encoder_w=enc_w, encoder_b=enc_b,
                enc_layers=[prep_layer(lp) for lp in raw["enc_layers"]],
                dec_layers=[prep_layer(lp, dec=True) for lp in raw["dec_layers"]],
                fc1_w=fc1_w, fc1_b=fc1_b)


# ----------------------------------- main ------------------------------------ #

if __name__ == "__main__":
    # Reduced config (same structure as the PyTorch module, smaller widths).
    # Production: input_dims=55, E=1024, heads=8 (Dh=128), ff=2048, 12 layers,
    # lookahead=10.  Demo keeps Dh = E/heads = 128 (lane-dense, same as prod).
    cfg = dict(input_dims=55, E=256, num_heads=2, ff=512, num_layers=2, lookahead=4)

    key = jax.random.PRNGKey(0)
    pkey, xkey = jax.random.split(key)
    raw_params = init_params(pkey, cfg)
    params = prepare_params(raw_params, cfg)          # pad + bf16 + fold q-scale, once

    S, B = 8, 2
    input_feature = jax.random.normal(xkey, (S, B, cfg["input_dims"]), jnp.float32)

    fwd = jax.jit(functools.partial(
        transformer_forward,
        num_heads=cfg["num_heads"],
        head_dim=cfg["E"] // cfg["num_heads"],
        lookahead=cfg["lookahead"],
        out_features=3))
    out = jax.block_until_ready(fwd(params, input_feature))

    assert out.shape == (cfg["lookahead"] + 1, B, 3), out.shape
    assert bool(jnp.all(jnp.isfinite(out)))
    print("KERNEL_OK")
</pallas_src>

<mosaic_0001>
module attributes {stable_mosaic.version = 11 : i64} {
  func.func @_linear_kernel(%arg0: i32, %arg1: i32, %arg2: memref<16x256xf32, #tpu.memory_space<vmem>>, %arg3: memref<256x768xbf16, #tpu.memory_space<vmem>>, %arg4: memref<1x768xf32, #tpu.memory_space<vmem>>, %arg5: memref<16x768xbf16, #tpu.memory_space<vmem>>) attributes {dimension_semantics = [#tpu.dimension_semantics<parallel>, #tpu.dimension_semantics<parallel>], iteration_bounds = array<i64: 1, 1>, scalar_prefetch = 0 : i64, scratch_operands = 0 : i64, tpu.core_type = #tpu.core_type<tc>, window_params = [{transform_indices = @transform_0, window_bounds = array<i64: 16, 256>}, {transform_indices = @transform_1, window_bounds = array<i64: 256, 768>}, {transform_indices = @transform_2, window_bounds = array<i64: 1, 768>}, {transform_indices = @transform_3, window_bounds = array<i64: 16, 768>}]} {
    %c0 = arith.constant 0 : index
    %c0_0 = arith.constant 0 : index
    %0 = vector.load %arg2[%c0, %c0_0] : memref<16x256xf32, #tpu.memory_space<vmem>>, vector<16x256xf32>
    %1 = arith.truncf %0 : vector<16x256xf32> to vector<16x256xbf16>
    %c0_1 = arith.constant 0 : index
    %c0_2 = arith.constant 0 : index
    %2 = vector.load %arg3[%c0_1, %c0_2] : memref<256x768xbf16, #tpu.memory_space<vmem>>, vector<256x768xbf16>
    %cst = arith.constant dense<0.000000e+00> : vector<16x768xf32>
    %3 = tpu.matmul %1, %2, %cst {dimension_numbers = #tpu.dot_dimension_numbers<[1], [0], [0], [1], [0, 0, 1, 1], [], []>} : vector<16x256xbf16>, vector<256x768xbf16>, vector<16x768xf32> -> vector<16x768xf32>
    %c0_3 = arith.constant 0 : index
    %c0_4 = arith.constant 0 : index
    %4 = vector.load %arg4[%c0_3, %c0_4] : memref<1x768xf32, #tpu.memory_space<vmem>>, vector<1x768xf32>
    %5 = vector.broadcast %4 : vector<1x768xf32> to vector<16x768xf32>
    %6 = arith.addf %3, %5 : vector<16x768xf32>
    %7 = arith.truncf %6 : vector<16x768xf32> to vector<16x768xbf16>
    %c0_5 = arith.constant 0 : index
    %c0_6 = arith.constant 0 : index
    %8 = vector.load %arg5[%c0_5, %c0_6] : memref<16x768xbf16, #tpu.memory_space<vmem>>, vector<16x768xbf16>
    tpu.vector_store %arg5[%c0_5, %c0_6], %7 {strides = array<i32>} : memref<16x768xbf16, #tpu.memory_space<vmem>>, vector<16x768xbf16>,
    return
  }
  func.func @transform_0(%arg0: i32, %arg1: i32) -> (i32, i32) {
    %c0_i32 = arith.constant 0 : i32
    %c0_i32_0 = arith.constant 0 : i32
    return %arg0, %c0_i32 : i32, i32
  }
  func.func @transform_1(%arg0: i32, %arg1: i32) -> (i32, i32) {
    %c0_i32 = arith.constant 0 : i32
    %c0_i32_0 = arith.constant 0 : i32
    return %c0_i32, %arg1 : i32, i32
  }
  func.func @transform_2(%arg0: i32, %arg1: i32) -> (i32, i32) {
    %c0_i32 = arith.constant 0 : i32
    %c0_i32_0 = arith.constant 0 : i32
    return %c0_i32, %arg1 : i32, i32
  }
  func.func @transform_3(%arg0: i32, %arg1: i32) -> (i32, i32) {
    %c0_i32 = arith.constant 0 : i32
    return %arg0, %arg1 : i32, i32
  }
}

module attributes {stable_mosaic.version = 11 : i64} {
  func.func @_linear_kernel(%arg0: i32, %arg1: i32, %arg2: memref<16x128xf32, #tpu.memory_space<vmem>>, %arg3: memref<128x256xbf16, #tpu.memory_space<vmem>>, %arg4: memref<1x256xf32, #tpu.memory_space<vmem>>, %arg5: memref<16x256xf32, #tpu.memory_space<vmem>>) attributes {dimension_semantics = [#tpu.dimension_semantics<parallel>, #tpu.dimension_semantics<parallel>], iteration_bounds = array<i64: 1, 1>, scalar_prefetch = 0 : i64, scratch_operands = 0 : i64, tpu.core_type = #tpu.core_type<tc>, window_params = [{transform_indices = @transform_0, window_bounds = array<i64: 16, 128>}, {transform_indices = @transform_1, window_bounds = array<i64: 128, 256>}, {transform_indices = @transform_2, window_bounds = array<i64: 1, 256>}, {transform_indices = @transform_3, window_bounds = array<i64: 16, 256>}]} {
    %c0 = arith.constant 0 : index
    %c0_0 = arith.constant 0 : index
    %0 = vector.load %arg2[%c0, %c0_0] : memref<16x128xf32, #tpu.memory_space<vmem>>, vector<16x128xf32>
    %1 = arith.truncf %0 : vector<16x128xf32> to vector<16x128xbf16>
    %c0_1 = arith.constant 0 : index
    %c0_2 = arith.constant 0 : index
    %2 = vector.load %arg3[%c0_1, %c0_2] : memref<128x256xbf16, #tpu.memory_space<vmem>>, vector<128x256xbf16>
    %cst = arith.constant dense<0.000000e+00> : vector<16x256xf32>
    %3 = tpu.matmul %1, %2, %cst {dimension_numbers = #tpu.dot_dimension_numbers<[1], [0], [0], [1], [0, 0, 1, 1], [], []>} : vector<16x128xbf16>, vector<128x256xbf16>, vector<16x256xf32> -> vector<16x256xf32>
    %c0_3 = arith.constant 0 : index
    %c0_4 = arith.constant 0 : index
    %4 = vector.load %arg4[%c0_3, %c0_4] : memref<1x256xf32, #tpu.memory_space<vmem>>, vector<1x256xf32>
    %5 = vector.broadcast %4 : vector<1x256xf32> to vector<16x256xf32>
    %6 = arith.addf %3, %5 : vector<16x256xf32>
    %cst_5 = arith.constant 1.600000e+01 : f32
    %7 = vector.broadcast %cst_5 : f32 to vector<16x256xf32>
    %8 = arith.mulf %6, %7 : vector<16x256xf32>
    %c0_6 = arith.constant 0 : index
    %c0_7 = arith.constant 0 : index
    %9 = vector.load %arg5[%c0_6, %c0_7] : memref<16x256xf32, #tpu.memory_space<vmem>>, vector<16x256xf32>
    tpu.vector_store %arg5[%c0_6, %c0_7], %8 {strides = array<i32>} : memref<16x256xf32, #tpu.memory_space<vmem>>, vector<16x256xf32>,
    return
  }
  func.func @transform_0(%arg0: i32, %arg1: i32) -> (i32, i32) {
    %c0_i32 = arith.constant 0 : i32
    %c0_i32_0 = arith.constant 0 : i32
    return %arg0, %c0_i32 : i32, i32
  }
  func.func @transform_1(%arg0: i32, %arg1: i32) -> (i32, i32) {
    %c0_i32 = arith.constant 0 : i32
    %c0_i32_0 = arith.constant 0 : i32
    return %c0_i32, %arg1 : i32, i32
  }
  func.func @transform_2(%arg0: i32, %arg1: i32) -> (i32, i32) {
    %c0_i32 = arith.constant 0 : i32
    %c0_i32_0 = arith.constant 0 : i32
    return %c0_i32, %arg1 : i32, i32
  }
  func.func @transform_3(%arg0: i32, %arg1: i32) -> (i32, i32) {
    %c0_i32 = arith.constant 0 : i32
    return %arg0, %arg1 : i32, i32
  }
}

module attributes {stable_mosaic.version = 11 : i64} {
  func.func @_attention_kernel(%arg0: i32, %arg1: i32, %arg2: memref<1x5x128xbf16, #tpu.memory_space<vmem>>, %arg3: memref<1x5x128xbf16, #tpu.memory_space<vmem>>, %arg4: memref<1x5x128xbf16, #tpu.memory_space<vmem>>, %arg5: memref<1x5x128xbf16, #tpu.memory_space<vmem>>) attributes {dimension_semantics = [#tpu.dimension_semantics<parallel>, #tpu.dimension_semantics<parallel>], iteration_bounds = array<i64: 2, 2>, scalar_prefetch = 0 : i64, scratch_operands = 0 : i64, tpu.core_type = #tpu.core_type<tc>, window_params = [{transform_indices = @transform_0, window_bounds = array<i64: 1, 5, 128>}, {transform_indices = @transform_1, window_bounds = array<i64: 1, 5, 128>}, {transform_indices = @transform_2, window_bounds = array<i64: 1, 5, 128>}, {transform_indices = @transform_3, window_bounds = array<i64: 1, 5, 128>}]} {
    %c0 = arith.constant 0 : index
    %c0_0 = arith.constant 0 : index
    %c0_1 = arith.constant 0 : index
    %0 = vector.load %arg2[%c0, %c0_0, %c0_1] : memref<1x5x128xbf16, #tpu.memory_space<vmem>>, vector<1x5x128xbf16>
    %1 = vector.shape_cast %0 : vector<1x5x128xbf16> to vector<5x128xbf16>
    %c0_2 = arith.constant 0 : index
    %c0_3 = arith.constant 0 : index
    %c0_4 = arith.constant 0 : index
    %2 = vector.load %arg3[%c0_2, %c0_3, %c0_4] : memref<1x5x128xbf16, #tpu.memory_space<vmem>>, vector<1x5x128xbf16>
    %3 = vector.shape_cast %2 : vector<1x5x128xbf16> to vector<5x128xbf16>
    %c0_5 = arith.constant 0 : index
    %c0_6 = arith.constant 0 : index
    %c0_7 = arith.constant 0 : index
    %4 = vector.load %arg4[%c0_5, %c0_6, %c0_7] : memref<1x5x128xbf16, #tpu.memory_space<vmem>>, vector<1x5x128xbf16>
    %5 = vector.shape_cast %4 : vector<1x5x128xbf16> to vector<5x128xbf16>
    %cst = arith.constant dense<0.000000e+00> : vector<5x5xf32>
    %6 = tpu.matmul %1, %3, %cst {dimension_numbers = #tpu.dot_dimension_numbers<[1], [1], [0], [0], [0, 0, 1, 0], [], []>} : vector<5x128xbf16>, vector<5x128xbf16>, vector<5x5xf32> -> vector<5x5xf32>
    %cst_8 = arith.constant dense<0xFF800000> : vector<5xf32>
    %7 = vector.multi_reduction <maximumf>, %6, %cst_8 [1] : vector<5x5xf32> to vector<5xf32>
    %8 = vector.shape_cast %7 : vector<5xf32> to vector<5x1xf32>
    %9 = vector.broadcast %8 : vector<5x1xf32> to vector<5x5xf32>
    %10 = arith.subf %6, %9 : vector<5x5xf32>
    %11 = math.exp %10 : vector<5x5xf32>
    %cst_9 = arith.constant dense<0.000000e+00> : vector<5xf32>
    %12 = vector.multi_reduction <add>, %11, %cst_9 [1] : vector<5x5xf32> to vector<5xf32>
    %13 = vector.shape_cast %12 : vector<5xf32> to vector<5x1xf32>
    %14 = arith.truncf %11 : vector<5x5xf32> to vector<5x5xbf16>
    %cst_10 = arith.constant dense<0.000000e+00> : vector<5x128xf32>
    %15 = tpu.matmul %14, %5, %cst_10 {dimension_numbers = #tpu.dot_dimension_numbers<[1], [0], [0], [1], [0, 0, 1, 1], [], []>} : vector<5x5xbf16>, vector<5x128xbf16>, vector<5x128xf32> -> vector<5x128xf32>
    %16 = tpu.reciprocal %13 {approx = true} : vector<5x1xf32> -> vector<5x1xf32>
    %17 = vector.broadcast %16 : vector<5x1xf32> to vector<5x128xf32>
    %18 = arith.mulf %15, %17 : vector<5x128xf32>
    %19 = arith.truncf %18 : vector<5x128xf32> to vector<5x128xbf16>
    %c0_11 = arith.constant 0 : index
    %c0_12 = arith.constant 0 : index
    %c0_13 = arith.constant 0 : index
    %20 = vector.load %arg5[%c0_11, %c0_12, %c0_13] : memref<1x5x128xbf16, #tpu.memory_space<vmem>>, vector<1x5x128xbf16>
    %21 = vector.shape_cast %20 : vector<1x5x128xbf16> to vector<5x128xbf16>
    %22 = vector.shape_cast %19 : vector<5x128xbf16> to vector<1x5x128xbf16>
    tpu.vector_store %arg5[%c0_11, %c0_12, %c0_13], %22 {strides = array<i32>} : memref<1x5x128xbf16, #tpu.memory_space<vmem>>, vector<1x5x128xbf16>,
    return
  }
  func.func @transform_0(%arg0: i32, %arg1: i32) -> (i32, i32, i32) {
    %c0_i32 = arith.constant 0 : i32
    %c0_i32_0 = arith.constant 0 : i32
    return %arg0, %c0_i32, %arg1 : i32, i32, i32
  }
  func.func @transform_1(%arg0: i32, %arg1: i32) -> (i32, i32, i32) {
    %c2_i32 = arith.constant 2 : i32
    %0 = arith.addi %c2_i32, %arg1 : i32
    %c0_i32 = arith.constant 0 : i32
    %c0_i32_0 = arith.constant 0 : i32
    return %arg0, %c0_i32, %0 : i32, i32, i32
  }
  func.func @transform_2(%arg0: i32, %arg1: i32) -> (i32, i32, i32) {
    %c4_i32 = arith.constant 4 : i32
    %0 = arith.addi %c4_i32, %arg1 : i32
    %c0_i32 = arith.constant 0 : i32
    %c0_i32_0 = arith.constant 0 : i32
    return %arg0, %c0_i32, %0 : i32, i32, i32
  }
  func.func @transform_3(%arg0: i32, %arg1: i32) -> (i32, i32, i32) {
    %c0_i32 = arith.constant 0 : i32
    %c0_i32_0 = arith.constant 0 : i32
    return %arg0, %c0_i32, %arg1 : i32, i32, i32
  }
}

module attributes {stable_mosaic.version = 11 : i64} {
  func.func @_linear_add_ln_kernel(%arg0: i32, %arg1: memref<16x256xbf16, #tpu.memory_space<vmem>>, %arg2: memref<256x256xbf16, #tpu.memory_space<vmem>>, %arg3: memref<1x256xf32, #tpu.memory_space<vmem>>, %arg4: memref<16x256xf32, #tpu.memory_space<vmem>>, %arg5: memref<1x256xf32, #tpu.memory_space<vmem>>, %arg6: memref<1x256xf32, #tpu.memory_space<vmem>>, %arg7: memref<16x256xf32, #tpu.memory_space<vmem>>) attributes {dimension_semantics = [#tpu.dimension_semantics<parallel>], iteration_bounds = array<i64: 1>, scalar_prefetch = 0 : i64, scratch_operands = 0 : i64, tpu.core_type = #tpu.core_type<tc>, window_params = [{transform_indices = @transform_0, window_bounds = array<i64: 16, 256>}, {pipeline_mode = #tpu.pipeline_mode<synchronous>, transform_indices = @transform_1, window_bounds = array<i64: 256, 256>}, {pipeline_mode = #tpu.pipeline_mode<synchronous>, transform_indices = @transform_2, window_bounds = array<i64: 1, 256>}, {transform_indices = @transform_3, window_bounds = array<i64: 16, 256>}, {pipeline_mode = #tpu.pipeline_mode<synchronous>, transform_indices = @transform_4, window_bounds = array<i64: 1, 256>}, {pipeline_mode = #tpu.pipeline_mode<synchronous>, transform_indices = @transform_5, window_bounds = array<i64: 1, 256>}, {transform_indices = @transform_6, window_bounds = array<i64: 16, 256>}]} {
    %c0 = arith.constant 0 : index
    %c0_0 = arith.constant 0 : index
    %0 = vector.load %arg1[%c0, %c0_0] : memref<16x256xbf16, #tpu.memory_space<vmem>>, vector<16x256xbf16>
    %c0_1 = arith.constant 0 : index
    %c0_2 = arith.constant 0 : index
    %1 = vector.load %arg2[%c0_1, %c0_2] : memref<256x256xbf16, #tpu.memory_space<vmem>>, vector<256x256xbf16>
    %cst = arith.constant dense<0.000000e+00> : vector<16x256xf32>
    %2 = tpu.matmul %0, %1, %cst {dimension_numbers = #tpu.dot_dimension_numbers<[1], [0], [0], [1], [0, 0, 1, 1], [], []>} : vector<16x256xbf16>, vector<256x256xbf16>, vector<16x256xf32> -> vector<16x256xf32>
    %c0_3 = arith.constant 0 : index
    %c0_4 = arith.constant 0 : index
    %3 = vector.load %arg3[%c0_3, %c0_4] : memref<1x256xf32, #tpu.memory_space<vmem>>, vector<1x256xf32>
    %4 = vector.broadcast %3 : vector<1x256xf32> to vector<16x256xf32>
    %5 = arith.addf %2, %4 : vector<16x256xf32>
    %c0_5 = arith.constant 0 : index
    %c0_6 = arith.constant 0 : index
    %6 = vector.load %arg4[%c0_5, %c0_6] : memref<16x256xf32, #tpu.memory_space<vmem>>, vector<16x256xf32>
    %7 = arith.addf %5, %6 : vector<16x256xf32>
    %cst_7 = arith.constant dense<0.000000e+00> : vector<16xf32>
    %8 = vector.multi_reduction <add>, %7, %cst_7 [1] : vector<16x256xf32> to vector<16xf32>
    %9 = vector.shape_cast %8 : vector<16xf32> to vector<16x1xf32>
    %cst_8 = arith.constant 2.560000e+02 : f32
    %10 = vector.broadcast %cst_8 : f32 to vector<16x1xf32>
    %11 = arith.divf %9, %10 : vector<16x1xf32>
    %12 = vector.broadcast %11 : vector<16x1xf32> to vector<16x256xf32>
    %13 = arith.subf %7, %12 : vector<16x256xf32>
    %14 = arith.mulf %13, %13 : vector<16x256xf32>
    %cst_9 = arith.constant dense<0.000000e+00> : vector<16xf32>
    %15 = vector.multi_reduction <add>, %14, %cst_9 [1] : vector<16x256xf32> to vector<16xf32>
    %16 = vector.shape_cast %15 : vector<16xf32> to vector<16x1xf32>
    %cst_10 = arith.constant 2.560000e+02 : f32
    %17 = vector.broadcast %cst_10 : f32 to vector<16x1xf32>
    %18 = arith.divf %16, %17 : vector<16x1xf32>
    %19 = vector.broadcast %11 : vector<16x1xf32> to vector<16x256xf32>
    %20 = arith.subf %7, %19 : vector<16x256xf32>
    %cst_11 = arith.constant 9.99999974E-6 : f32
    %21 = vector.broadcast %cst_11 : f32 to vector<16x1xf32>
    %22 = arith.addf %18, %21 : vector<16x1xf32>
    %23 = math.rsqrt %22 : vector<16x1xf32>
    %24 = vector.broadcast %23 : vector<16x1xf32> to vector<16x256xf32>
    %25 = arith.mulf %20, %24 : vector<16x256xf32>
    %c0_12 = arith.constant 0 : index
    %c0_13 = arith.constant 0 : index
    %26 = vector.load %arg5[%c0_12, %c0_13] : memref<1x256xf32, #tpu.memory_space<vmem>>, vector<1x256xf32>
    %27 = vector.broadcast %26 : vector<1x256xf32> to vector<16x256xf32>
    %28 = arith.mulf %25, %27 : vector<16x256xf32>
    %c0_14 = arith.constant 0 : index
    %c0_15 = arith.constant 0 : index
    %29 = vector.load %arg6[%c0_14, %c0_15] : memref<1x256xf32, #tpu.memory_space<vmem>>, vector<1x256xf32>
    %30 = vector.broadcast %29 : vector<1x256xf32> to vector<16x256xf32>
    %31 = arith.addf %28, %30 : vector<16x256xf32>
    %c0_16 = arith.constant 0 : index
    %c0_17 = arith.constant 0 : index
    %32 = vector.load %arg7[%c0_16, %c0_17] : memref<16x256xf32, #tpu.memory_space<vmem>>, vector<16x256xf32>
    tpu.vector_store %arg7[%c0_16, %c0_17], %31 {strides = array<i32>} : memref<16x256xf32, #tpu.memory_space<vmem>>, vector<16x256xf32>,
    return
  }
  func.func @transform_0(%arg0: i32) -> (i32, i32) {
    %c0_i32 = arith.constant 0 : i32
    %c0_i32_0 = arith.constant 0 : i32
    return %arg0, %c0_i32 : i32, i32
  }
  func.func @transform_1(%arg0: i32) -> (i32, i32) {
    %c0_i32 = arith.constant 0 : i32
    %c0_i32_0 = arith.constant 0 : i32
    %c0_i32_1 = arith.constant 0 : i32
    return %c0_i32, %c0_i32_0 : i32, i32
  }
  func.func @transform_2(%arg0: i32) -> (i32, i32) {
    %c0_i32 = arith.constant 0 : i32
    %c0_i32_0 = arith.constant 0 : i32
    %c0_i32_1 = arith.constant 0 : i32
    return %c0_i32, %c0_i32_0 : i32, i32
  }
  func.func @transform_3(%arg0: i32) -> (i32, i32) {
    %c0_i32 = arith.constant 0 : i32
    %c0_i32_0 = arith.constant 0 : i32
    return %arg0, %c0_i32 : i32, i32
  }
  func.func @transform_4(%arg0: i32) -> (i32, i32) {
    %c0_i32 = arith.constant 0 : i32
    %c0_i32_0 = arith.constant 0 : i32
    %c0_i32_1 = arith.constant 0 : i32
    return %c0_i32, %c0_i32_0 : i32, i32
  }
  func.func @transform_5(%arg0: i32) -> (i32, i32) {
    %c0_i32 = arith.constant 0 : i32
    %c0_i32_0 = arith.constant 0 : i32
    %c0_i32_1 = arith.constant 0 : i32
    return %c0_i32, %c0_i32_0 : i32, i32
  }
  func.func @transform_6(%arg0: i32) -> (i32, i32) {
    %c0_i32 = arith.constant 0 : i32
    %c0_i32_0 = arith.constant 0 : i32
    return %arg0, %c0_i32 : i32, i32
  }
}

module attributes {stable_mosaic.version = 11 : i64} {
  func.func @_linear_kernel(%arg0: i32, %arg1: i32, %arg2: memref<16x256xf32, #tpu.memory_space<vmem>>, %arg3: memref<256x256xbf16, #tpu.memory_space<vmem>>, %arg4: memref<1x256xf32, #tpu.memory_space<vmem>>, %arg5: memref<16x256xbf16, #tpu.memory_space<vmem>>) attributes {dimension_semantics = [#tpu.dimension_semantics<parallel>, #tpu.dimension_semantics<parallel>], iteration_bounds = array<i64: 1, 1>, scalar_prefetch = 0 : i64, scratch_operands = 0 : i64, tpu.core_type = #tpu.core_type<tc>, window_params = [{transform_indices = @transform_0, window_bounds = array<i64: 16, 256>}, {transform_indices = @transform_1, window_bounds = array<i64: 256, 256>}, {transform_indices = @transform_2, window_bounds = array<i64: 1, 256>}, {transform_indices = @transform_3, window_bounds = array<i64: 16, 256>}]} {
    %c0 = arith.constant 0 : index
    %c0_0 = arith.constant 0 : index
    %0 = vector.load %arg2[%c0, %c0_0] : memref<16x256xf32, #tpu.memory_space<vmem>>, vector<16x256xf32>
    %1 = arith.truncf %0 : vector<16x256xf32> to vector<16x256xbf16>
    %c0_1 = arith.constant 0 : index
    %c0_2 = arith.constant 0 : index
    %2 = vector.load %arg3[%c0_1, %c0_2] : memref<256x256xbf16, #tpu.memory_space<vmem>>, vector<256x256xbf16>
    %cst = arith.constant dense<0.000000e+00> : vector<16x256xf32>
    %3 = tpu.matmul %1, %2, %cst {dimension_numbers = #tpu.dot_dimension_numbers<[1], [0], [0], [1], [0, 0, 1, 1], [], []>} : vector<16x256xbf16>, vector<256x256xbf16>, vector<16x256xf32> -> vector<16x256xf32>
    %c0_3 = arith.constant 0 : index
    %c0_4 = arith.constant 0 : index
    %4 = vector.load %arg4[%c0_3, %c0_4] : memref<1x256xf32, #tpu.memory_space<vmem>>, vector<1x256xf32>
    %5 = vector.broadcast %4 : vector<1x256xf32> to vector<16x256xf32>
    %6 = arith.addf %3, %5 : vector<16x256xf32>
    %7 = arith.truncf %6 : vector<16x256xf32> to vector<16x256xbf16>
    %c0_5 = arith.constant 0 : index
    %c0_6 = arith.constant 0 : index
    %8 = vector.load %arg5[%c0_5, %c0_6] : memref<16x256xbf16, #tpu.memory_space<vmem>>, vector<16x256xbf16>
    tpu.vector_store %arg5[%c0_5, %c0_6], %7 {strides = array<i32>} : memref<16x256xbf16, #tpu.memory_space<vmem>>, vector<16x256xbf16>,
    return
  }
  func.func @transform_0(%arg0: i32, %arg1: i32) -> (i32, i32) {
    %c0_i32 = arith.constant 0 : i32
    %c0_i32_0 = arith.constant 0 : i32
    return %arg0, %c0_i32 : i32, i32
  }
  func.func @transform_1(%arg0: i32, %arg1: i32) -> (i32, i32) {
    %c0_i32 = arith.constant 0 : i32
    %c0_i32_0 = arith.constant 0 : i32
    return %c0_i32, %arg1 : i32, i32
  }
  func.func @transform_2(%arg0: i32, %arg1: i32) -> (i32, i32) {
    %c0_i32 = arith.constant 0 : i32
    %c0_i32_0 = arith.constant 0 : i32
    return %c0_i32, %arg1 : i32, i32
  }
  func.func @transform_3(%arg0: i32, %arg1: i32) -> (i32, i32) {
    %c0_i32 = arith.constant 0 : i32
    return %arg0, %arg1 : i32, i32
  }
}

module attributes {stable_mosaic.version = 11 : i64} {
  func.func @_attention_kernel(%arg0: i32, %arg1: i32, %arg2: memref<1x8x128xbf16, #tpu.memory_space<vmem>>, %arg3: memref<1x8x128xbf16, #tpu.memory_space<vmem>>, %arg4: memref<1x8x128xbf16, #tpu.memory_space<vmem>>, %arg5: memref<1x8x128xbf16, #tpu.memory_space<vmem>>) attributes {dimension_semantics = [#tpu.dimension_semantics<parallel>, #tpu.dimension_semantics<parallel>], iteration_bounds = array<i64: 2, 2>, scalar_prefetch = 0 : i64, scratch_operands = 0 : i64, tpu.core_type = #tpu.core_type<tc>, window_params = [{transform_indices = @transform_0, window_bounds = array<i64: 1, 8, 128>}, {transform_indices = @transform_1, window_bounds = array<i64: 1, 8, 128>}, {transform_indices = @transform_2, window_bounds = array<i64: 1, 8, 128>}, {transform_indices = @transform_3, window_bounds = array<i64: 1, 8, 128>}]} {
    %c0 = arith.constant 0 : index
    %c0_0 = arith.constant 0 : index
    %c0_1 = arith.constant 0 : index
    %0 = vector.load %arg2[%c0, %c0_0, %c0_1] : memref<1x8x128xbf16, #tpu.memory_space<vmem>>, vector<1x8x128xbf16>
    %1 = vector.shape_cast %0 : vector<1x8x128xbf16> to vector<8x128xbf16>
    %c0_2 = arith.constant 0 : index
    %c0_3 = arith.constant 0 : index
    %c0_4 = arith.constant 0 : index
    %2 = vector.load %arg3[%c0_2, %c0_3, %c0_4] : memref<1x8x128xbf16, #tpu.memory_space<vmem>>, vector<1x8x128xbf16>
    %3 = vector.shape_cast %2 : vector<1x8x128xbf16> to vector<8x128xbf16>
    %c0_5 = arith.constant 0 : index
    %c0_6 = arith.constant 0 : index
    %c0_7 = arith.constant 0 : index
    %4 = vector.load %arg4[%c0_5, %c0_6, %c0_7] : memref<1x8x128xbf16, #tpu.memory_space<vmem>>, vector<1x8x128xbf16>
    %5 = vector.shape_cast %4 : vector<1x8x128xbf16> to vector<8x128xbf16>
    %cst = arith.constant dense<0.000000e+00> : vector<8x8xf32>
    %6 = tpu.matmul %1, %3, %cst {dimension_numbers = #tpu.dot_dimension_numbers<[1], [1], [0], [0], [0, 0, 1, 0], [], []>} : vector<8x128xbf16>, vector<8x128xbf16>, vector<8x8xf32> -> vector<8x8xf32>
    %cst_8 = arith.constant dense<0xFF800000> : vector<8xf32>
    %7 = vector.multi_reduction <maximumf>, %6, %cst_8 [1] : vector<8x8xf32> to vector<8xf32>
    %8 = vector.shape_cast %7 : vector<8xf32> to vector<8x1xf32>
    %9 = vector.broadcast %8 : vector<8x1xf32> to vector<8x8xf32>
    %10 = arith.subf %6, %9 : vector<8x8xf32>
    %11 = math.exp %10 : vector<8x8xf32>
    %cst_9 = arith.constant dense<0.000000e+00> : vector<8xf32>
    %12 = vector.multi_reduction <add>, %11, %cst_9 [1] : vector<8x8xf32> to vector<8xf32>
    %13 = vector.shape_cast %12 : vector<8xf32> to vector<8x1xf32>
    %14 = arith.truncf %11 : vector<8x8xf32> to vector<8x8xbf16>
    %cst_10 = arith.constant dense<0.000000e+00> : vector<8x128xf32>
    %15 = tpu.matmul %14, %5, %cst_10 {dimension_numbers = #tpu.dot_dimension_numbers<[1], [0], [0], [1], [0, 0, 1, 1], [], []>} : vector<8x8xbf16>, vector<8x128xbf16>, vector<8x128xf32> -> vector<8x128xf32>
    %16 = tpu.reciprocal %13 {approx = true} : vector<8x1xf32> -> vector<8x1xf32>
    %17 = vector.broadcast %16 : vector<8x1xf32> to vector<8x128xf32>
    %18 = arith.mulf %15, %17 : vector<8x128xf32>
    %19 = arith.truncf %18 : vector<8x128xf32> to vector<8x128xbf16>
    %c0_11 = arith.constant 0 : index
    %c0_12 = arith.constant 0 : index
    %c0_13 = arith.constant 0 : index
    %20 = vector.load %arg5[%c0_11, %c0_12, %c0_13] : memref<1x8x128xbf16, #tpu.memory_space<vmem>>, vector<1x8x128xbf16>
    %21 = vector.shape_cast %20 : vector<1x8x128xbf16> to vector<8x128xbf16>
    %22 = vector.shape_cast %19 : vector<8x128xbf16> to vector<1x8x128xbf16>
    tpu.vector_store %arg5[%c0_11, %c0_12, %c0_13], %22 {strides = array<i32>} : memref<1x8x128xbf16, #tpu.memory_space<vmem>>, vector<1x8x128xbf16>,
    return
  }
  func.func @transform_0(%arg0: i32, %arg1: i32) -> (i32, i32, i32) {
    %c0_i32 = arith.constant 0 : i32
    %c0_i32_0 = arith.constant 0 : i32
    return %arg0, %c0_i32, %arg1 : i32, i32, i32
  }
  func.func @transform_1(%arg0: i32, %arg1: i32) -> (i32, i32, i32) {
    %c2_i32 = arith.constant 2 : i32
    %0 = arith.addi %c2_i32, %arg1 : i32
    %c0_i32 = arith.constant 0 : i32
    %c0_i32_0 = arith.constant 0 : i32
    return %arg0, %c0_i32, %0 : i32, i32, i32
  }
  func.func @transform_2(%arg0: i32, %arg1: i32) -> (i32, i32, i32) {
    %c4_i32 = arith.constant 4 : i32
    %0 = arith.addi %c4_i32, %arg1 : i32
    %c0_i32 = arith.constant 0 : i32
    %c0_i32_0 = arith.constant 0 : i32
    return %arg0, %c0_i32, %0 : i32, i32, i32
  }
  func.func @transform_3(%arg0: i32, %arg1: i32) -> (i32, i32, i32) {
    %c0_i32 = arith.constant 0 : i32
    %c0_i32_0 = arith.constant 0 : i32
    return %arg0, %c0_i32, %arg1 : i32, i32, i32
  }
}

module attributes {stable_mosaic.version = 11 : i64} {
  func.func @_ffn_ln_kernel(%arg0: i32, %arg1: i32, %arg2: memref<16x256xf32, #tpu.memory_space<vmem>>, %arg3: memref<256x512xbf16, #tpu.memory_space<vmem>>, %arg4: memref<1x512xf32, #tpu.memory_space<vmem>>, %arg5: memref<512x256xbf16, #tpu.memory_space<vmem>>, %arg6: memref<1x256xf32, #tpu.memory_space<vmem>>, %arg7: memref<16x256xf32, #tpu.memory_space<vmem>>, %arg8: memref<1x256xf32, #tpu.memory_space<vmem>>, %arg9: memref<1x256xf32, #tpu.memory_space<vmem>>, %arg10: memref<16x256xf32, #tpu.memory_space<vmem>>, %arg11: memref<16x256xf32, #tpu.memory_space<vmem>>) attributes {dimension_semantics = [#tpu.dimension_semantics<parallel>, #tpu.dimension_semantics<arbitrary>], iteration_bounds = array<i64: 1, 1>, scalar_prefetch = 0 : i64, scratch_operands = 1 : i64, tpu.core_type = #tpu.core_type<tc>, window_params = [{transform_indices = @transform_0, window_bounds = array<i64: 16, 256>}, {transform_indices = @transform_1, window_bounds = array<i64: 256, 512>}, {transform_indices = @transform_2, window_bounds = array<i64: 1, 512>}, {transform_indices = @transform_3, window_bounds = array<i64: 512, 256>}, {pipeline_mode = #tpu.pipeline_mode<synchronous>, transform_indices = @transform_4, window_bounds = array<i64: 1, 256>}, {transform_indices = @transform_5, window_bounds = array<i64: 16, 256>}, {pipeline_mode = #tpu.pipeline_mode<synchronous>, transform_indices = @transform_6, window_bounds = array<i64: 1, 256>}, {pipeline_mode = #tpu.pipeline_mode<synchronous>, transform_indices = @transform_7, window_bounds = array<i64: 1, 256>}, {transform_indices = @transform_8, window_bounds = array<i64: 16, 256>}]} {
    %c0_i32 = arith.constant 0 : i32
    %0 = arith.cmpi eq, %arg1, %c0_i32 : i32
    %1 = arith.extui %0 : i1 to i32
    %c0_i32_0 = arith.constant 0 : i32
    %2 = arith.cmpi ne, %1, %c0_i32_0 : i32
    scf.if %2 {
      %cst_16 = arith.constant 0.000000e+00 : f32
      %21 = vector.broadcast %cst_16 : f32 to vector<16x256xf32>
      %c0_17 = arith.constant 0 : index
      %c0_18 = arith.constant 0 : index
      %22 = vector.load %arg11[%c0_17, %c0_18] : memref<16x256xf32, #tpu.memory_space<vmem>>, vector<16x256xf32>
      tpu.vector_store %arg11[%c0_17, %c0_18], %21 {strides = array<i32>} : memref<16x256xf32, #tpu.memory_space<vmem>>, vector<16x256xf32>,
    } else {
    }
    %c0 = arith.constant 0 : index
    %c0_1 = arith.constant 0 : index
    %3 = vector.load %arg2[%c0, %c0_1] : memref<16x256xf32, #tpu.memory_space<vmem>>, vector<16x256xf32>
    %4 = arith.truncf %3 : vector<16x256xf32> to vector<16x256xbf16>
    %c0_2 = arith.constant 0 : index
    %c0_3 = arith.constant 0 : index
    %5 = vector.load %arg3[%c0_2, %c0_3] : memref<256x512xbf16, #tpu.memory_space<vmem>>, vector<256x512xbf16>
    %cst = arith.constant dense<0.000000e+00> : vector<16x512xf32>
    %6 = tpu.matmul %4, %5, %cst {dimension_numbers = #tpu.dot_dimension_numbers<[1], [0], [0], [1], [0, 0, 1, 1], [], []>} : vector<16x256xbf16>, vector<256x512xbf16>, vector<16x512xf32> -> vector<16x512xf32>
    %c0_4 = arith.constant 0 : index
    %c0_5 = arith.constant 0 : index
    %7 = vector.load %arg4[%c0_4, %c0_5] : memref<1x512xf32, #tpu.memory_space<vmem>>, vector<1x512xf32>
    %8 = vector.broadcast %7 : vector<1x512xf32> to vector<16x512xf32>
    %9 = arith.addf %6, %8 : vector<16x512xf32>
    %cst_6 = arith.constant 0.000000e+00 : f32
    %10 = vector.broadcast %cst_6 : f32 to vector<16x512xf32>
    %11 = arith.maximumf %9, %10 : vector<16x512xf32>
    %c0_7 = arith.constant 0 : index
    %c0_8 = arith.constant 0 : index
    %12 = vector.load %arg11[%c0_7, %c0_8] : memref<16x256xf32, #tpu.memory_space<vmem>>, vector<16x256xf32>
    %13 = arith.truncf %11 : vector<16x512xf32> to vector<16x512xbf16>
    %c0_9 = arith.constant 0 : index
    %c0_10 = arith.constant 0 : index
    %14 = vector.load %arg5[%c0_9, %c0_10] : memref<512x256xbf16, #tpu.memory_space<vmem>>, vector<512x256xbf16>
    %cst_11 = arith.constant dense<0.000000e+00> : vector<16x256xf32>
    %15 = tpu.matmul %13, %14, %cst_11 {dimension_numbers = #tpu.dot_dimension_numbers<[1], [0], [0], [1], [0, 0, 1, 1], [], []>} : vector<16x512xbf16>, vector<512x256xbf16>, vector<16x256xf32> -> vector<16x256xf32>
    %16 = arith.addf %12, %15 : vector<16x256xf32>
    %c0_12 = arith.constant 0 : index
    %c0_13 = arith.constant 0 : index
    %17 = vector.load %arg11[%c0_12, %c0_13] : memref<16x256xf32, #tpu.memory_space<vmem>>, vector<16x256xf32>
    tpu.vector_store %arg11[%c0_12, %c0_13], %16 {strides = array<i32>} : memref<16x256xf32, #tpu.memory_space<vmem>>, vector<16x256xf32>,
    %c0_i32_14 = arith.constant 0 : i32
    %18 = arith.cmpi eq, %arg1, %c0_i32_14 : i32
    %19 = arith.extui %18 : i1 to i32
    %c0_i32_15 = arith.constant 0 : i32
    %20 = arith.cmpi ne, %19, %c0_i32_15 : i32
    scf.if %20 {
      %c0_16 = arith.constant 0 : index
      %c0_17 = arith.constant 0 : index
      %21 = vector.load %arg11[%c0_16, %c0_17] : memref<16x256xf32, #tpu.memory_space<vmem>>, vector<16x256xf32>
      %c0_18 = arith.constant 0 : index
      %c0_19 = arith.constant 0 : index
      %22 = vector.load %arg6[%c0_18, %c0_19] : memref<1x256xf32, #tpu.memory_space<vmem>>, vector<1x256xf32>
      %23 = vector.broadcast %22 : vector<1x256xf32> to vector<16x256xf32>
      %24 = arith.addf %21, %23 : vector<16x256xf32>
      %c0_20 = arith.constant 0 : index
      %c0_21 = arith.constant 0 : index
      %25 = vector.load %arg7[%c0_20, %c0_21] : memref<16x256xf32, #tpu.memory_space<vmem>>, vector<16x256xf32>
      %26 = arith.addf %24, %25 : vector<16x256xf32>
      %cst_22 = arith.constant dense<0.000000e+00> : vector<16xf32>
      %27 = vector.multi_reduction <add>, %26, %cst_22 [1] : vector<16x256xf32> to vector<16xf32>
      %28 = vector.shape_cast %27 : vector<16xf32> to vector<16x1xf32>
      %cst_23 = arith.constant 2.560000e+02 : f32
      %29 = vector.broadcast %cst_23 : f32 to vector<16x1xf32>
      %30 = arith.divf %28, %29 : vector<16x1xf32>
      %31 = vector.broadcast %30 : vector<16x1xf32> to vector<16x256xf32>
      %32 = arith.subf %26, %31 : vector<16x256xf32>
      %33 = arith.mulf %32, %32 : vector<16x256xf32>
      %cst_24 = arith.constant dense<0.000000e+00> : vector<16xf32>
      %34 = vector.multi_reduction <add>, %33, %cst_24 [1] : vector<16x256xf32> to vector<16xf32>
      %35 = vector.shape_cast %34 : vector<16xf32> to vector<16x1xf32>
      %cst_25 = arith.constant 2.560000e+02 : f32
      %36 = vector.broadcast %cst_25 : f32 to vector<16x1xf32>
      %37 = arith.divf %35, %36 : vector<16x1xf32>
      %38 = vector.broadcast %30 : vector<16x1xf32> to vector<16x256xf32>
      %39 = arith.subf %26, %38 : vector<16x256xf32>
      %cst_26 = arith.constant 9.99999974E-6 : f32
      %40 = vector.broadcast %cst_26 : f32 to vector<16x1xf32>
      %41 = arith.addf %37, %40 : vector<16x1xf32>
      %42 = math.rsqrt %41 : vector<16x1xf32>
      %43 = vector.broadcast %42 : vector<16x1xf32> to vector<16x256xf32>
      %44 = arith.mulf %39, %43 : vector<16x256xf32>
      %c0_27 = arith.constant 0 : index
      %c0_28 = arith.constant 0 : index
      %45 = vector.load %arg8[%c0_27, %c0_28] : memref<1x256xf32, #tpu.memory_space<vmem>>, vector<1x256xf32>
      %46 = vector.broadcast %45 : vector<1x256xf32> to vector<16x256xf32>
      %47 = arith.mulf %44, %46 : vector<16x256xf32>
      %c0_29 = arith.constant 0 : index
      %c0_30 = arith.constant 0 : index
      %48 = vector.load %arg9[%c0_29, %c0_30] : memref<1x256xf32, #tpu.memory_space<vmem>>, vector<1x256xf32>
      %49 = vector.broadcast %48 : vector<1x256xf32> to vector<16x256xf32>
      %50 = arith.addf %47, %49 : vector<16x256xf32>
      %c0_31 = arith.constant 0 : index
      %c0_32 = arith.constant 0 : index
      %51 = vector.load %arg10[%c0_31, %c0_32] : memref<16x256xf32, #tpu.memory_space<vmem>>, vector<16x256xf32>
      tpu.vector_store %arg10[%c0_31, %c0_32], %50 {strides = array<i32>} : memref<16x256xf32, #tpu.memory_space<vmem>>, vector<16x256xf32>,
    } else {
    }
    return
  }
  func.func @transform_0(%arg0: i32, %arg1: i32) -> (i32, i32) {
    %c0_i32 = arith.constant 0 : i32
    %c0_i32_0 = arith.constant 0 : i32
    return %arg0, %c0_i32 : i32, i32
  }
  func.func @transform_1(%arg0: i32, %arg1: i32) -> (i32, i32) {
    %c0_i32 = arith.constant 0 : i32
    %c0_i32_0 = arith.constant 0 : i32
    return %c0_i32, %arg1 : i32, i32
  }
  func.func @transform_2(%arg0: i32, %arg1: i32) -> (i32, i32) {
    %c0_i32 = arith.constant 0 : i32
    %c0_i32_0 = arith.constant 0 : i32
    return %c0_i32, %arg1 : i32, i32
  }
  func.func @transform_3(%arg0: i32, %arg1: i32) -> (i32, i32) {
    %c0_i32 = arith.constant 0 : i32
    %c0_i32_0 = arith.constant 0 : i32
    return %arg1, %c0_i32 : i32, i32
  }
  func.func @transform_4(%arg0: i32, %arg1: i32) -> (i32, i32) {
    %c0_i32 = arith.constant 0 : i32
    %c0_i32_0 = arith.constant 0 : i32
    %c0_i32_1 = arith.constant 0 : i32
    return %c0_i32, %c0_i32_0 : i32, i32
  }
  func.func @transform_5(%arg0: i32, %arg1: i32) -> (i32, i32) {
    %c0_i32 = arith.constant 0 : i32
    %c0_i32_0 = arith.constant 0 : i32
    return %arg0, %c0_i32 : i32, i32
  }
  func.func @transform_6(%arg0: i32, %arg1: i32) -> (i32, i32) {
    %c0_i32 = arith.constant 0 : i32
    %c0_i32_0 = arith.constant 0 : i32
    %c0_i32_1 = arith.constant 0 : i32
    return %c0_i32, %c0_i32_0 : i32, i32
  }
  func.func @transform_7(%arg0: i32, %arg1: i32) -> (i32, i32) {
    %c0_i32 = arith.constant 0 : i32
    %c0_i32_0 = arith.constant 0 : i32
    %c0_i32_1 = arith.constant 0 : i32
    return %c0_i32, %c0_i32_0 : i32, i32
  }
  func.func @transform_8(%arg0: i32, %arg1: i32) -> (i32, i32) {
    %c0_i32 = arith.constant 0 : i32
    %c0_i32_0 = arith.constant 0 : i32
    return %arg0, %c0_i32 : i32, i32
  }
}

module attributes {stable_mosaic.version = 11 : i64} {
  func.func @_linear_kernel(%arg0: i32, %arg1: i32, %arg2: memref<16x256xf32, #tpu.memory_space<vmem>>, %arg3: memref<256x768xbf16, #tpu.memory_space<vmem>>, %arg4: memref<1x768xf32, #tpu.memory_space<vmem>>, %arg5: memref<16x768xbf16, #tpu.memory_space<vmem>>) attributes {dimension_semantics = [#tpu.dimension_semantics<parallel>, #tpu.dimension_semantics<parallel>], iteration_bounds = array<i64: 1, 1>, scalar_prefetch = 0 : i64, scratch_operands = 0 : i64, tpu.core_type = #tpu.core_type<tc>, window_params = [{transform_indices = @transform_0, window_bounds = array<i64: 16, 256>}, {transform_indices = @transform_1, window_bounds = array<i64: 256, 768>}, {transform_indices = @transform_2, window_bounds = array<i64: 1, 768>}, {transform_indices = @transform_3, window_bounds = array<i64: 16, 768>}]} {
    %c0 = arith.constant 0 : index
    %c0_0 = arith.constant 0 : index
    %0 = vector.load %arg2[%c0, %c0_0] : memref<16x256xf32, #tpu.memory_space<vmem>>, vector<16x256xf32>
    %1 = arith.truncf %0 : vector<16x256xf32> to vector<16x256xbf16>
    %c0_1 = arith.constant 0 : index
    %c0_2 = arith.constant 0 : index
    %2 = vector.load %arg3[%c0_1, %c0_2] : memref<256x768xbf16, #tpu.memory_space<vmem>>, vector<256x768xbf16>
    %cst = arith.constant dense<0.000000e+00> : vector<16x768xf32>
    %3 = tpu.matmul %1, %2, %cst {dimension_numbers = #tpu.dot_dimension_numbers<[1], [0], [0], [1], [0, 0, 1, 1], [], []>} : vector<16x256xbf16>, vector<256x768xbf16>, vector<16x768xf32> -> vector<16x768xf32>
    %c0_3 = arith.constant 0 : index
    %c0_4 = arith.constant 0 : index
    %4 = vector.load %arg4[%c0_3, %c0_4] : memref<1x768xf32, #tpu.memory_space<vmem>>, vector<1x768xf32>
    %5 = vector.broadcast %4 : vector<1x768xf32> to vector<16x768xf32>
    %6 = arith.addf %3, %5 : vector<16x768xf32>
    %7 = arith.truncf %6 : vector<16x768xf32> to vector<16x768xbf16>
    %c0_5 = arith.constant 0 : index
    %c0_6 = arith.constant 0 : index
    %8 = vector.load %arg5[%c0_5, %c0_6] : memref<16x768xbf16, #tpu.memory_space<vmem>>, vector<16x768xbf16>
    tpu.vector_store %arg5[%c0_5, %c0_6], %7 {strides = array<i32>} : memref<16x768xbf16, #tpu.memory_space<vmem>>, vector<16x768xbf16>,
    return
  }
  func.func @transform_0(%arg0: i32, %arg1: i32) -> (i32, i32) {
    %c0_i32 = arith.constant 0 : i32
    %c0_i32_0 = arith.constant 0 : i32
    return %arg0, %c0_i32 : i32, i32
  }
  func.func @transform_1(%arg0: i32, %arg1: i32) -> (i32, i32) {
    %c0_i32 = arith.constant 0 : i32
    %c0_i32_0 = arith.constant 0 : i32
    return %c0_i32, %arg1 : i32, i32
  }
  func.func @transform_2(%arg0: i32, %arg1: i32) -> (i32, i32) {
    %c0_i32 = arith.constant 0 : i32
    %c0_i32_0 = arith.constant 0 : i32
    return %c0_i32, %arg1 : i32, i32
  }
  func.func @transform_3(%arg0: i32, %arg1: i32) -> (i32, i32) {
    %c0_i32 = arith.constant 0 : i32
    return %arg0, %arg1 : i32, i32
  }
}

module attributes {stable_mosaic.version = 11 : i64} {
  func.func @_linear_kernel(%arg0: i32, %arg1: i32, %arg2: memref<16x256xf32, #tpu.memory_space<vmem>>, %arg3: memref<256x512xbf16, #tpu.memory_space<vmem>>, %arg4: memref<1x512xf32, #tpu.memory_space<vmem>>, %arg5: memref<16x512xbf16, #tpu.memory_space<vmem>>) attributes {dimension_semantics = [#tpu.dimension_semantics<parallel>, #tpu.dimension_semantics<parallel>], iteration_bounds = array<i64: 1, 1>, scalar_prefetch = 0 : i64, scratch_operands = 0 : i64, tpu.core_type = #tpu.core_type<tc>, window_params = [{transform_indices = @transform_0, window_bounds = array<i64: 16, 256>}, {transform_indices = @transform_1, window_bounds = array<i64: 256, 512>}, {transform_indices = @transform_2, window_bounds = array<i64: 1, 512>}, {transform_indices = @transform_3, window_bounds = array<i64: 16, 512>}]} {
    %c0 = arith.constant 0 : index
    %c0_0 = arith.constant 0 : index
    %0 = vector.load %arg2[%c0, %c0_0] : memref<16x256xf32, #tpu.memory_space<vmem>>, vector<16x256xf32>
    %1 = arith.truncf %0 : vector<16x256xf32> to vector<16x256xbf16>
    %c0_1 = arith.constant 0 : index
    %c0_2 = arith.constant 0 : index
    %2 = vector.load %arg3[%c0_1, %c0_2] : memref<256x512xbf16, #tpu.memory_space<vmem>>, vector<256x512xbf16>
    %cst = arith.constant dense<0.000000e+00> : vector<16x512xf32>
    %3 = tpu.matmul %1, %2, %cst {dimension_numbers = #tpu.dot_dimension_numbers<[1], [0], [0], [1], [0, 0, 1, 1], [], []>} : vector<16x256xbf16>, vector<256x512xbf16>, vector<16x512xf32> -> vector<16x512xf32>
    %c0_3 = arith.constant 0 : index
    %c0_4 = arith.constant 0 : index
    %4 = vector.load %arg4[%c0_3, %c0_4] : memref<1x512xf32, #tpu.memory_space<vmem>>, vector<1x512xf32>
    %5 = vector.broadcast %4 : vector<1x512xf32> to vector<16x512xf32>
    %6 = arith.addf %3, %5 : vector<16x512xf32>
    %7 = arith.truncf %6 : vector<16x512xf32> to vector<16x512xbf16>
    %c0_5 = arith.constant 0 : index
    %c0_6 = arith.constant 0 : index
    %8 = vector.load %arg5[%c0_5, %c0_6] : memref<16x512xbf16, #tpu.memory_space<vmem>>, vector<16x512xbf16>
    tpu.vector_store %arg5[%c0_5, %c0_6], %7 {strides = array<i32>} : memref<16x512xbf16, #tpu.memory_space<vmem>>, vector<16x512xbf16>,
    return
  }
  func.func @transform_0(%arg0: i32, %arg1: i32) -> (i32, i32) {
    %c0_i32 = arith.constant 0 : i32
    %c0_i32_0 = arith.constant 0 : i32
    return %arg0, %c0_i32 : i32, i32
  }
  func.func @transform_1(%arg0: i32, %arg1: i32) -> (i32, i32) {
    %c0_i32 = arith.constant 0 : i32
    %c0_i32_0 = arith.constant 0 : i32
    return %c0_i32, %arg1 : i32, i32
  }
  func.func @transform_2(%arg0: i32, %arg1: i32) -> (i32, i32) {
    %c0_i32 = arith.constant 0 : i32
    %c0_i32_0 = arith.constant 0 : i32
    return %c0_i32, %arg1 : i32, i32
  }
  func.func @transform_3(%arg0: i32, %arg1: i32) -> (i32, i32) {
    %c0_i32 = arith.constant 0 : i32
    return %arg0, %arg1 : i32, i32
  }
}

module attributes {stable_mosaic.version = 11 : i64} {
  func.func @_attention_kernel(%arg0: i32, %arg1: i32, %arg2: memref<1x5x128xbf16, #tpu.memory_space<vmem>>, %arg3: memref<1x8x128xbf16, #tpu.memory_space<vmem>>, %arg4: memref<1x8x128xbf16, #tpu.memory_space<vmem>>, %arg5: memref<1x5x128xbf16, #tpu.memory_space<vmem>>) attributes {dimension_semantics = [#tpu.dimension_semantics<parallel>, #tpu.dimension_semantics<parallel>], iteration_bounds = array<i64: 2, 2>, scalar_prefetch = 0 : i64, scratch_operands = 0 : i64, tpu.core_type = #tpu.core_type<tc>, window_params = [{transform_indices = @transform_0, window_bounds = array<i64: 1, 5, 128>}, {transform_indices = @transform_1, window_bounds = array<i64: 1, 8, 128>}, {transform_indices = @transform_2, window_bounds = array<i64: 1, 8, 128>}, {transform_indices = @transform_3, window_bounds = array<i64: 1, 5, 128>}]} {
    %c0 = arith.constant 0 : index
    %c0_0 = arith.constant 0 : index
    %c0_1 = arith.constant 0 : index
    %0 = vector.load %arg2[%c0, %c0_0, %c0_1] : memref<1x5x128xbf16, #tpu.memory_space<vmem>>, vector<1x5x128xbf16>
    %1 = vector.shape_cast %0 : vector<1x5x128xbf16> to vector<5x128xbf16>
    %c0_2 = arith.constant 0 : index
    %c0_3 = arith.constant 0 : index
    %c0_4 = arith.constant 0 : index
    %2 = vector.load %arg3[%c0_2, %c0_3, %c0_4] : memref<1x8x128xbf16, #tpu.memory_space<vmem>>, vector<1x8x128xbf16>
    %3 = vector.shape_cast %2 : vector<1x8x128xbf16> to vector<8x128xbf16>
    %c0_5 = arith.constant 0 : index
    %c0_6 = arith.constant 0 : index
    %c0_7 = arith.constant 0 : index
    %4 = vector.load %arg4[%c0_5, %c0_6, %c0_7] : memref<1x8x128xbf16, #tpu.memory_space<vmem>>, vector<1x8x128xbf16>
    %5 = vector.shape_cast %4 : vector<1x8x128xbf16> to vector<8x128xbf16>
    %cst = arith.constant dense<0.000000e+00> : vector<5x8xf32>
    %6 = tpu.matmul %1, %3, %cst {dimension_numbers = #tpu.dot_dimension_numbers<[1], [1], [0], [0], [0, 0, 1, 0], [], []>} : vector<5x128xbf16>, vector<8x128xbf16>, vector<5x8xf32> -> vector<5x8xf32>
    %cst_8 = arith.constant dense<0xFF800000> : vector<5xf32>
    %7 = vector.multi_reduction <maximumf>, %6, %cst_8 [1] : vector<5x8xf32> to vector<5xf32>
    %8 = vector.shape_cast %7 : vector<5xf32> to vector<5x1xf32>
    %9 = vector.broadcast %8 : vector<5x1xf32> to vector<5x8xf32>
    %10 = arith.subf %6, %9 : vector<5x8xf32>
    %11 = math.exp %10 : vector<5x8xf32>
    %cst_9 = arith.constant dense<0.000000e+00> : vector<5xf32>
    %12 = vector.multi_reduction <add>, %11, %cst_9 [1] : vector<5x8xf32> to vector<5xf32>
    %13 = vector.shape_cast %12 : vector<5xf32> to vector<5x1xf32>
    %14 = arith.truncf %11 : vector<5x8xf32> to vector<5x8xbf16>
    %cst_10 = arith.constant dense<0.000000e+00> : vector<5x128xf32>
    %15 = tpu.matmul %14, %5, %cst_10 {dimension_numbers = #tpu.dot_dimension_numbers<[1], [0], [0], [1], [0, 0, 1, 1], [], []>} : vector<5x8xbf16>, vector<8x128xbf16>, vector<5x128xf32> -> vector<5x128xf32>
    %16 = tpu.reciprocal %13 {approx = true} : vector<5x1xf32> -> vector<5x1xf32>
    %17 = vector.broadcast %16 : vector<5x1xf32> to vector<5x128xf32>
    %18 = arith.mulf %15, %17 : vector<5x128xf32>
    %19 = arith.truncf %18 : vector<5x128xf32> to vector<5x128xbf16>
    %c0_11 = arith.constant 0 : index
    %c0_12 = arith.constant 0 : index
    %c0_13 = arith.constant 0 : index
    %20 = vector.load %arg5[%c0_11, %c0_12, %c0_13] : memref<1x5x128xbf16, #tpu.memory_space<vmem>>, vector<1x5x128xbf16>
    %21 = vector.shape_cast %20 : vector<1x5x128xbf16> to vector<5x128xbf16>
    %22 = vector.shape_cast %19 : vector<5x128xbf16> to vector<1x5x128xbf16>
    tpu.vector_store %arg5[%c0_11, %c0_12, %c0_13], %22 {strides = array<i32>} : memref<1x5x128xbf16, #tpu.memory_space<vmem>>, vector<1x5x128xbf16>,
    return
  }
  func.func @transform_0(%arg0: i32, %arg1: i32) -> (i32, i32, i32) {
    %c0_i32 = arith.constant 0 : i32
    %c0_i32_0 = arith.constant 0 : i32
    return %arg0, %c0_i32, %arg1 : i32, i32, i32
  }
  func.func @transform_1(%arg0: i32, %arg1: i32) -> (i32, i32, i32) {
    %c0_i32 = arith.constant 0 : i32
    %0 = arith.addi %c0_i32, %arg1 : i32
    %c0_i32_0 = arith.constant 0 : i32
    %c0_i32_1 = arith.constant 0 : i32
    return %arg0, %c0_i32_0, %0 : i32, i32, i32
  }
  func.func @transform_2(%arg0: i32, %arg1: i32) -> (i32, i32, i32) {
    %c2_i32 = arith.constant 2 : i32
    %0 = arith.addi %c2_i32, %arg1 : i32
    %c0_i32 = arith.constant 0 : i32
    %c0_i32_0 = arith.constant 0 : i32
    return %arg0, %c0_i32, %0 : i32, i32, i32
  }
  func.func @transform_3(%arg0: i32, %arg1: i32) -> (i32, i32, i32) {
    %c0_i32 = arith.constant 0 : i32
    %c0_i32_0 = arith.constant 0 : i32
    return %arg0, %c0_i32, %arg1 : i32, i32, i32
  }
}

module attributes {stable_mosaic.version = 11 : i64} {
  func.func @_linear_kernel(%arg0: i32, %arg1: i32, %arg2: memref<16x256xf32, #tpu.memory_space<vmem>>, %arg3: memref<256x128xbf16, #tpu.memory_space<vmem>>, %arg4: memref<1x128xf32, #tpu.memory_space<vmem>>, %arg5: memref<16x128xf32, #tpu.memory_space<vmem>>) attributes {dimension_semantics = [#tpu.dimension_semantics<parallel>, #tpu.dimension_semantics<parallel>], iteration_bounds = array<i64: 1, 1>, scalar_prefetch = 0 : i64, scratch_operands = 0 : i64, tpu.core_type = #tpu.core_type<tc>, window_params = [{transform_indices = @transform_0, window_bounds = array<i64: 16, 256>}, {transform_indices = @transform_1, window_bounds = array<i64: 256, 128>}, {transform_indices = @transform_2, window_bounds = array<i64: 1, 128>}, {transform_indices = @transform_3, window_bounds = array<i64: 16, 128>}]} {
    %c0 = arith.constant 0 : index
    %c0_0 = arith.constant 0 : index
    %0 = vector.load %arg2[%c0, %c0_0] : memref<16x256xf32, #tpu.memory_space<vmem>>, vector<16x256xf32>
    %cst = arith.constant 0.000000e+00 : f32
    %1 = vector.broadcast %cst : f32 to vector<16x256xf32>
    %2 = arith.maximumf %0, %1 : vector<16x256xf32>
    %3 = arith.truncf %2 : vector<16x256xf32> to vector<16x256xbf16>
    %c0_1 = arith.constant 0 : index
    %c0_2 = arith.constant 0 : index
    %4 = vector.load %arg3[%c0_1, %c0_2] : memref<256x128xbf16, #tpu.memory_space<vmem>>, vector<256x128xbf16>
    %cst_3 = arith.constant dense<0.000000e+00> : vector<16x128xf32>
    %5 = tpu.matmul %3, %4, %cst_3 {dimension_numbers = #tpu.dot_dimension_numbers<[1], [0], [0], [1], [0, 0, 1, 1], [], []>} : vector<16x256xbf16>, vector<256x128xbf16>, vector<16x128xf32> -> vector<16x128xf32>
    %c0_4 = arith.constant 0 : index
    %c0_5 = arith.constant 0 : index
    %6 = vector.load %arg4[%c0_4, %c0_5] : memref<1x128xf32, #tpu.memory_space<vmem>>, vector<1x128xf32>
    %7 = vector.broadcast %6 : vector<1x128xf32> to vector<16x128xf32>
    %8 = arith.addf %5, %7 : vector<16x128xf32>
    %c0_6 = arith.constant 0 : index
    %c0_7 = arith.constant 0 : index
    %9 = vector.load %arg5[%c0_6, %c0_7] : memref<16x128xf32, #tpu.memory_space<vmem>>, vector<16x128xf32>
    tpu.vector_store %arg5[%c0_6, %c0_7], %8 {strides = array<i32>} : memref<16x128xf32, #tpu.memory_space<vmem>>, vector<16x128xf32>,
    return
  }
  func.func @transform_0(%arg0: i32, %arg1: i32) -> (i32, i32) {
    %c0_i32 = arith.constant 0 : i32
    %c0_i32_0 = arith.constant 0 : i32
    return %arg0, %c0_i32 : i32, i32
  }
  func.func @transform_1(%arg0: i32, %arg1: i32) -> (i32, i32) {
    %c0_i32 = arith.constant 0 : i32
    %c0_i32_0 = arith.constant 0 : i32
    return %c0_i32, %arg1 : i32, i32
  }
  func.func @transform_2(%arg0: i32, %arg1: i32) -> (i32, i32) {
    %c0_i32 = arith.constant 0 : i32
    %c0_i32_0 = arith.constant 0 : i32
    return %c0_i32, %arg1 : i32, i32
  }
  func.func @transform_3(%arg0: i32, %arg1: i32) -> (i32, i32) {
    %c0_i32 = arith.constant 0 : i32
    return %arg0, %arg1 : i32, i32
  }
}

</mosaic_0001>

<llo_original>
// kernel: transformer_forward.26
$region0: #{transformer_forward.26}
  #allocation0 [shape = 'u32[]', space=smem, size = 0x4, offset = 0x4, fixed_abs, tag = 'smem constant byte address 0x4 - core index']
  #allocation1 [shape = 'u32[144,128]{1,0:T(1,128)}', space=vmem, size = 0x12000, scoped, tag = 'internal scratch']
  %s0 = inlined_call_operand.vmem [shape: f32[16,128], index: 0, kind: input, shape index: {}]
  %s1 = inlined_call_operand.vmem [shape: bf16[128,256], index: 1, kind: input, shape index: {}]
  %s2 = inlined_call_operand.vmem [shape: f32[1,256], index: 2, kind: input, shape index: {}]
  %s3 = inlined_call_operand.vmem [shape: f32[16,256], index: 3, kind: output, shape index: {}]
  %s4 = sld [smem:[#allocation0]]
  $region22: #{transformer_forward.26} parent=0
    _
  %s6 = ssub.s32 1, %s4
  %s7 = scalar_select 0, %s6, %s4
  // Predicated region
  $region2: #{transformer_forward.26} parent=0 // pred_check
    _
  $region3: #{transformer_forward.26} parent=0 // pred_check_branch
    %9 = sbr.rel (0) target = $region5
  $region4: #{transformer_forward.26} parent=0 // pred_region
    _
  $region5: #{transformer_forward.26} parent=0 // pred_fallthru
    _
  // Predicated region
  $region6: #{transformer_forward.26} parent=0 // pred_check
    _
  $region7: #{transformer_forward.26} parent=0 // pred_check_branch
    %11 = sbr.rel (0) target = $region9
  $region8: #{transformer_forward.26} parent=0 // pred_region
    _
  $region9: #{transformer_forward.26} parent=0 // pred_fallthru
    _
  // Predicated region
  $region10: #{transformer_forward.26} parent=0 // pred_check
    _
  $region11: #{transformer_forward.26} parent=0 // pred_check_branch
    %13 = sbr.rel (0) target = $region13
  $region12: #{transformer_forward.26} parent=0 // pred_region
    _
  $region13: #{transformer_forward.26} parent=0 // pred_fallthru
    _
  %v15 = vld [vmem:[%s0] sm:$0xff]
  %v16 = vld [vmem:[%s0 + $0x8] sm:$0xff]
  %v17 = vpack.c.bf16 %v16, %v15
  %v18 = vld [vmem:[%s1] sm:$0xff]
  %v19 = vld [vmem:[%s1 + $0x8] sm:$0xff]
  %v20 = vld [vmem:[%s1 + $0x10] sm:$0xff]
  %v21 = vld [vmem:[%s1 + $0x18] sm:$0xff]
  %v22 = vld [vmem:[%s1 + $0x20] sm:$0xff]
  %v23 = vld [vmem:[%s1 + $0x28] sm:$0xff]
  %v24 = vld [vmem:[%s1 + $0x30] sm:$0xff]
  %v25 = vld [vmem:[%s1 + $0x38] sm:$0xff]
  %v26 = vld [vmem:[%s1 + $0x40] sm:$0xff]
  %v27 = vld [vmem:[%s1 + $0x48] sm:$0xff]
  %v28 = vld [vmem:[%s1 + $0x50] sm:$0xff]
  %v29 = vld [vmem:[%s1 + $0x58] sm:$0xff]
  %v30 = vld [vmem:[%s1 + $0x60] sm:$0xff]
  %v31 = vld [vmem:[%s1 + $0x68] sm:$0xff]
  %v32 = vld [vmem:[%s1 + $0x70] sm:$0xff]
  %v33 = vld [vmem:[%s1 + $0x78] sm:$0xff]
  %v34 = vld [vmem:[%s2] sm:$0x3]
  %v36 = vlaneseq
  %v37 = vshrl.u32 %v36, 7
  %v38 = vsub.s32 0, %v37
  %v39 = vrot.slane %v34, %v38
  %v40 = vlaneseq
  %v41 = vshrl.u32 %v40, 7
  %v42 = vsub.s32 1, %v41
  %v43 = vrot.slane %v34, %v42
  %v62 = vunpack.c.l.b16 %v18
  %v63 = vunpack.c.h.b16 %v18
  %v64 = vunpack.c.l.b16 %v19
  %v65 = vunpack.c.h.b16 %v19
  %v66 = vunpack.c.l.b16 %v20
  %v67 = vunpack.c.h.b16 %v20
  %v68 = vunpack.c.l.b16 %v21
  %v69 = vunpack.c.h.b16 %v21
  %v70 = vunpack.c.l.b16 %v22
  %v71 = vunpack.c.h.b16 %v22
  %v72 = vunpack.c.l.b16 %v23
  %v73 = vunpack.c.h.b16 %v23
  %v74 = vunpack.c.l.b16 %v24
  %v75 = vunpack.c.h.b16 %v24
  %v76 = vunpack.c.l.b16 %v25
  %v77 = vunpack.c.h.b16 %v25
  %v78 = vunpack.c.l.b16 %v26
  %v79 = vunpack.c.h.b16 %v26
  %v80 = vunpack.c.l.b16 %v27
  %v81 = vunpack.c.h.b16 %v27
  %v82 = vunpack.c.l.b16 %v28
  %v83 = vunpack.c.h.b16 %v28
  %v84 = vunpack.c.l.b16 %v29
  %v85 = vunpack.c.h.b16 %v29
  %v86 = vunpack.c.l.b16 %v30
  %v87 = vunpack.c.h.b16 %v30
  %v88 = vunpack.c.l.b16 %v31
  %v89 = vunpack.c.h.b16 %v31
  %v90 = vunpack.c.l.b16 %v32
  %v91 = vunpack.c.h.b16 %v32
  %v92 = vunpack.c.l.b16 %v33
  %v93 = vunpack.c.h.b16 %v33
  %v94 = vpack.c.b16 %v64, %v62
  %v95 = vpack.c.b16 %v65, %v63
  %v96 = vpack.c.b16 %v68, %v66
  %v97 = vpack.c.b16 %v69, %v67
  %v98 = vpack.c.b16 %v72, %v70
  %v99 = vpack.c.b16 %v73, %v71
  %v100 = vpack.c.b16 %v76, %v74
  %v101 = vpack.c.b16 %v77, %v75
  %v102 = vpack.c.b16 %v80, %v78
  %v103 = vpack.c.b16 %v81, %v79
  %v104 = vpack.c.b16 %v84, %v82
  %v105 = vpack.c.b16 %v85, %v83
  %v106 = vpack.c.b16 %v88, %v86
  %v107 = vpack.c.b16 %v89, %v87
  %v108 = vpack.c.b16 %v92, %v90
  %v109 = vpack.c.b16 %v93, %v91
  %126 = vmatprep.subr.bf16.mxu0 %v95
  %127 = vmatpush1.bf16.msra.mxu0 %v94
  %128 = vmatprep.subr.bf16.mxu0 %v97
  %129 = vmatpush1.bf16.msra.mxu0 %v96
  %130 = vmatprep.subr.bf16.mxu0 %v99
  %131 = vmatpush1.bf16.msra.mxu0 %v98
  %132 = vmatprep.subr.bf16.mxu0 %v101
  %133 = vmatpush1.bf16.msra.mxu0 %v100
  %134 = vmatprep.subr.bf16.mxu0 %v103
  %135 = vmatpush1.bf16.msra.mxu0 %v102
  %136 = vmatprep.subr.bf16.mxu0 %v105
  %137 = vmatpush1.bf16.msra.mxu0 %v104
  %138 = vmatprep.subr.bf16.mxu0 %v107
  %139 = vmatpush1.bf16.msra.mxu0 %v106
  %140 = vmatprep.subr.bf16.mxu0 %v109
  %141 = vmatpush1.bf16.msra.mxu0 %v108
  %142 = vmatprep.subr.bf16.mxu0 0
  %143 = vmatpush1.bf16.msra.mxu0 0
  %144 = vmatprep.subr.bf16.mxu0 0
  %145 = vmatpush1.bf16.msra.mxu0 0
  %146 = vmatprep.subr.bf16.mxu0 0
  %147 = vmatpush1.bf16.msra.mxu0 0
  %148 = vmatprep.subr.bf16.mxu0 0
  %149 = vmatpush1.bf16.msra.mxu0 0
  %150 = vmatprep.subr.bf16.mxu0 0
  %151 = vmatpush1.bf16.msra.mxu0 0
  %152 = vmatprep.subr.bf16.mxu0 0
  %153 = vmatpush1.bf16.msra.mxu0 0
  %154 = vmatprep.subr.bf16.mxu0 0
  %155 = vmatpush1.bf16.msra.mxu0 0
  %156 = vmatprep.subr.bf16.mxu0 0
  %157 = vmatpush1.bf16.msra.mxu0 0
  %158 = vmatprep.mubr.bf16.mxu0 0
  %159 = vmatmul.mubr.bf16.gmra.mrb[0].mxu0 %v17
  %v160 = vpop.f32.mrb[0].mxu0
  %v161 = vadd.f32 %v39, %v160
  %v162 = vpop.f32.mrb[0].mxu0
  %v163 = vadd.f32 %v43, %v162
  %v164 = vpop.f32.mrb[0].mxu0
  %v165 = vadd.f32 %v39, %v164
  %v166 = vpop.f32.mrb[0].mxu0
  %v167 = vadd.f32 %v43, %v166
  %168 = vdwg.mxu0
  %v169 = vmul.f32 %v161, 16.0
  %v170 = vmul.f32 %v163, 16.0
  %v171 = vmul.f32 %v165, 16.0
  %v172 = vmul.f32 %v167, 16.0
  %173 = vst [vmem:[%s3] sm:$0xff] %v169
  %174 = vst [vmem:[%s3 + $0x8] sm:$0xff] %v170
  %175 = vst [vmem:[%s3 + $0x10] sm:$0xff] %v171
  %176 = vst [vmem:[%s3 + $0x18] sm:$0xff] %v172
  // Predicated region
  $region14: #{transformer_forward.26} parent=0 // pred_check
    _
  $region15: #{transformer_forward.26} parent=0 // pred_check_branch
    %178 = sbr.rel (0) target = $region17
  $region16: #{transformer_forward.26} parent=0 // pred_region
    _
  $region17: #{transformer_forward.26} parent=0 // pred_fallthru
    _
  // Predicated region
  $region18: #{transformer_forward.26} parent=0 // pred_check
    _
  $region19: #{transformer_forward.26} parent=0 // pred_check_branch
    %180 = sbr.rel (0) target = $region21
  $region20: #{transformer_forward.26} parent=0 // pred_region
    _
  $region21: #{transformer_forward.26} parent=0 // pred_fallthru
    _

// kernel: transformer_forward.36
$region0: #{transformer_forward.36}
  #allocation0 [shape = 'u32[]', space=smem, size = 0x4, offset = 0x4, fixed_abs, tag = 'smem constant byte address 0x4 - core index']
  #allocation1 [shape = 'u32[144,128]{1,0:T(1,128)}', space=vmem, size = 0x12000, scoped, tag = 'internal scratch']
  %s0 = inlined_call_operand.vmem [shape: bf16[2,5,768], index: 0, kind: input, shape index: {}, may-alias: {0,1,2}]
  %s1 = inlined_call_operand.vmem [shape: bf16[2,5,768], index: 1, kind: input, shape index: {}, may-alias: {0,1,2}]
  %s2 = inlined_call_operand.vmem [shape: bf16[2,5,768], index: 2, kind: input, shape index: {}, may-alias: {0,1,2}]
  %s3 = inlined_call_operand.vmem [shape: bf16[2,5,256], index: 3, kind: output, shape index: {}]
  %s4 = sld [smem:[#allocation0]]
  $region45: #{transformer_forward.36} parent=0
    _
  %s6 = ssub.s32 1, %s4
  %s7 = scalar_select 0, %s6, %s4
  loop: start=0, step=1, limit=6
  $region2: #{transformer_forward.36} parent=0 // loop_pre_header
    _
  $region3: #{transformer_forward.36} parent=0 // loop_header
    %s9 = sphi 0, %s13
    %p10 = scmp.ge.s32.totalorder %s9, 6
    %s16 = sphi 0, %s28
    %s17 = sphi 0, %s24
    %s18 = sphi 0, %s16
    %s19 = sphi 0, %s17
    %s20 = sphi 0, %s18
    %s21 = sphi 0, %s19
    %s33 = sphi 0, %s35
    %s36 = sphi 0, %s33
    %s37 = sphi 0, %s36
    %s53 = sphi 0, %s37
    %s63 = sphi 0, %s65
    %s66 = sphi 0, %s63
    %s67 = sphi 0, %s66
    %s83 = sphi 0, %s67
    %s93 = sphi 0, %s95
    %s96 = sphi 0, %s93
    %s97 = sphi 0, %s96
    %s113 = sphi 0, %s97
    %s121 = sphi 0, %s123
    %s124 = sphi 0, %s121
    %s125 = sphi 0, %s124
    %s141 = sphi 0, %s125
  $region4: #{transformer_forward.36} parent=0 // loop_header_branch
    %12 = sbr.rel (%p10) target = $region8
  $region5: #{transformer_forward.36} parent=0 // loop_body
    %s14 = ssub.s32 %s9, 1
    %s15 = ssub.s32 %s9, 2
    %s22 = sadd.s32 1, %s17
    %p23 = scmp.ge.s32.totalorder %s22, 2
    %s24 = scalar_select %p23, 0, %s22
    %s25 = sadd.s32 1, %s16
    %s26 = scalar_select %p23, %s25, %s16
    %p27 = scmp.ge.s32.totalorder %s26, 2
    %s28 = scalar_select %p27, 0, %s26
    %s29 = ssub.s32 %s16, %s28
    %s30 = ssub.s32 %s17, %s24
    %s31 = sor.u32 %s29, %s30
    %p32 = scmp.eq.s32.totalorder %s31, 0
    %s34 = sadd.s32 %s33, 1
    %s35 = scalar_select %p32, %s33, %s34
    %p38 = pneg %p32
    %p39 = scmp.eq.s32.totalorder %s9, 3
    %p40 = por %p38, %p39
    %p41 = scmp.ne.s32.totalorder %s33, %s36
    %p42 = scmp.eq.s32.totalorder %s9, 0
    %p43 = por %p41, %p42
    %p44 = scmp.ne.s32.totalorder %s33, %s36
    %p45 = scmp.eq.s32.totalorder %s14, 3
    %p46 = por %p44, %p45
    %p47 = scmp.ne.s32.totalorder %s36, %s37
    %p48 = scmp.eq.s32.totalorder %s14, 0
    %p49 = por %p47, %p48
    %p50 = scmp.ne.s32.totalorder %s36, %s37
    %p51 = scmp.eq.s32.totalorder %s15, 3
    %p52 = por %p50, %p51
    %p54 = scmp.ne.s32.totalorder %s37, %s53
    %p55 = scmp.eq.s32.totalorder %s15, 0
    %p56 = por %p54, %p55
    %s57 = sadd.s32 %s17, 2
    %s58 = sadd.s32 %s24, 2
    %s59 = ssub.s32 %s16, %s28
    %s60 = ssub.s32 %s57, %s58
    %s61 = sor.u32 %s59, %s60
    %p62 = scmp.eq.s32.totalorder %s61, 0
    %s64 = sadd.s32 %s63, 1
    %s65 = scalar_select %p62, %s63, %s64
    %p68 = pneg %p62
    %p69 = scmp.eq.s32.totalorder %s9, 3
    %p70 = por %p68, %p69
    %p71 = scmp.ne.s32.totalorder %s63, %s66
    %p72 = scmp.eq.s32.totalorder %s9, 0
    %p73 = por %p71, %p72
    %p74 = scmp.ne.s32.totalorder %s63, %s66
    %p75 = scmp.eq.s32.totalorder %s14, 3
    %p76 = por %p74, %p75
    %p77 = scmp.ne.s32.totalorder %s66, %s67
    %p78 = scmp.eq.s32.totalorder %s14, 0
    %p79 = por %p77, %p78
    %p80 = scmp.ne.s32.totalorder %s66, %s67
    %p81 = scmp.eq.s32.totalorder %s15, 3
    %p82 = por %p80, %p81
    %p84 = scmp.ne.s32.totalorder %s67, %s83
    %p85 = scmp.eq.s32.totalorder %s15, 0
    %p86 = por %p84, %p85
    %s87 = sadd.s32 %s17, 4
    %s88 = sadd.s32 %s24, 4
    %s89 = ssub.s32 %s16, %s28
    %s90 = ssub.s32 %s87, %s88
    %s91 = sor.u32 %s89, %s90
    %p92 = scmp.eq.s32.totalorder %s91, 0
    %s94 = sadd.s32 %s93, 1
    %s95 = scalar_select %p92, %s93, %s94
    %p98 = pneg %p92
    %p99 = scmp.eq.s32.totalorder %s9, 3
    %p100 = por %p98, %p99
    %p101 = scmp.ne.s32.totalorder %s93, %s96
    %p102 = scmp.eq.s32.totalorder %s9, 0
    %p103 = por %p101, %p102
    %p104 = scmp.ne.s32.totalorder %s93, %s96
    %p105 = scmp.eq.s32.totalorder %s14, 3
    %p106 = por %p104, %p105
    %p107 = scmp.ne.s32.totalorder %s96, %s97
    %p108 = scmp.eq.s32.totalorder %s14, 0
    %p109 = por %p107, %p108
    %p110 = scmp.ne.s32.totalorder %s96, %s97
    %p111 = scmp.eq.s32.totalorder %s15, 3
    %p112 = por %p110, %p111
    %p114 = scmp.ne.s32.totalorder %s97, %s113
    %p115 = scmp.eq.s32.totalorder %s15, 0
    %p116 = por %p114, %p115
    %s117 = ssub.s32 %s16, %s28
    %s118 = ssub.s32 %s17, %s24
    %s119 = sor.u32 %s117, %s118
    %p120 = scmp.eq.s32.totalorder %s119, 0
    %s122 = sadd.s32 %s121, 1
    %s123 = scalar_select %p120, %s121, %s122
    %p126 = pneg %p120
    %p127 = scmp.eq.s32.totalorder %s9, 3
    %p128 = por %p126, %p127
    %p129 = scmp.ne.s32.totalorder %s121, %s124
    %p130 = scmp.eq.s32.totalorder %s9, 0
    %p131 = por %p129, %p130
    %p132 = scmp.ne.s32.totalorder %s121, %s124
    %p133 = scmp.eq.s32.totalorder %s14, 3
    %p134 = por %p132, %p133
    %p135 = scmp.ne.s32.totalorder %s124, %s125
    %p136 = scmp.eq.s32.totalorder %s14, 0
    %p137 = por %p135, %p136
    %p138 = scmp.ne.s32.totalorder %s124, %s125
    %p139 = scmp.eq.s32.totalorder %s15, 3
    %p140 = por %p138, %p139
    %p142 = scmp.ne.s32.totalorder %s125, %s141
    %p143 = scmp.eq.s32.totalorder %s15, 0
    %p144 = por %p142, %p143
    %p145 = scmp.le.s32.totalorder 1, %s9
    %p146 = scmp.lt.s32.totalorder %s9, 5
    %p147 = pnand %p145, %p146
    %p148 = pneg %p147
    // Predicated region
    $region9: #{transformer_forward.36} parent=5 // pred_check
      _
    $region10: #{transformer_forward.36} parent=5 // pred_check_branch
      %150 = sbr.rel (%p147) target = $region12
    $region11: #{transformer_forward.36} parent=5 // pred_region
      %s151 = ssub.s32 %s9, 1
    $region12: #{transformer_forward.36} parent=5 // pred_fallthru
      _
    %p152 = scmp.lt.s32.totalorder %s9, 4
    // Predicated region
    $region13: #{transformer_forward.36} parent=5 // pred_check
      %p153 = pneg %p152
    $region14: #{transformer_forward.36} parent=5 // pred_check_branch
      %155 = sbr.rel (%p153) target = $region16
    $region15: #{transformer_forward.36} parent=5 // pred_region
      // Predicated region
      $region17: #{transformer_forward.36} parent=15 // pred_check
        %p156 = pneg %p43
      $region18: #{transformer_forward.36} parent=15 // pred_check_branch
        %158 = sbr.rel (%p156) target = $region20
      $region19: #{transformer_forward.36} parent=15 // pred_region
        %p159 = scmp.lt.s32.totalorder %s16, 1
        %s160 = scalar_select %p159, %s16, 1
        %p161 = scmp.lt.s32.totalorder %s17, 5
        %s162 = scalar_select %p161, %s17, 5
        %s163 = smul.addr %s160, 6
        %s164 = sadd.s32 %s162, %s163
        %s165 = smul.addr %s164, 4
        %s166 = scalar_lea.vmem %s0, %s165
      $region20: #{transformer_forward.36} parent=15 // pred_fallthru
        _
      // Predicated region
      $region21: #{transformer_forward.36} parent=15 // pred_check
        %p167 = pneg %p73
      $region22: #{transformer_forward.36} parent=15 // pred_check_branch
        %169 = sbr.rel (%p167) target = $region24
      $region23: #{transformer_forward.36} parent=15 // pred_region
        %s170 = sadd.s32 %s17, 2
        %p171 = scmp.lt.s32.totalorder %s16, 1
        %s172 = scalar_select %p171, %s16, 1
        %p173 = scmp.lt.s32.totalorder %s170, 5
        %s174 = scalar_select %p173, %s170, 5
        %s175 = smul.addr %s172, 6
        %s176 = sadd.s32 %s174, %s175
        %s177 = smul.addr %s176, 4
        %s178 = scalar_lea.vmem %s1, %s177
        %s179 = sadd.s32 %s17, 2
      $region24: #{transformer_forward.36} parent=15 // pred_fallthru
        _
      // Predicated region
      $region25: #{transformer_forward.36} parent=15 // pred_check
        %p180 = pneg %p103
      $region26: #{transformer_forward.36} parent=15 // pred_check_branch
        %182 = sbr.rel (%p180) target = $region28
      $region27: #{transformer_forward.36} parent=15 // pred_region
        %s183 = sadd.s32 %s17, 4
        %p184 = scmp.lt.s32.totalorder %s16, 1
        %s185 = scalar_select %p184, %s16, 1
        %p186 = scmp.lt.s32.totalorder %s183, 5
        %s187 = scalar_select %p186, %s183, 5
        %s188 = smul.addr %s185, 6
        %s189 = sadd.s32 %s187, %s188
        %s190 = smul.addr %s189, 4
        %s191 = scalar_lea.vmem %s2, %s190
        %s192 = sadd.s32 %s17, 4
      $region28: #{transformer_forward.36} parent=15 // pred_fallthru
        _
    $region16: #{transformer_forward.36} parent=5 // pred_fallthru
      _
    %p193 = scmp.le.s32.totalorder 1, %s9
    %p194 = scmp.lt.s32.totalorder %s9, 5
    %p195 = pnand %p193, %p194
    %p196 = pneg %p195
    // Predicated region
    $region29: #{transformer_forward.36} parent=5 // pred_check
      _
    $region30: #{transformer_forward.36} parent=5 // pred_check_branch
      %198 = sbr.rel (%p195) target = $region32
    $region31: #{transformer_forward.36} parent=5 // pred_region
      %s199 = ssub.s32 %s9, 1
      %p200 = scmp.lt.s32.totalorder %s18, 1
      %s201 = scalar_select %p200, %s18, 1
      %p202 = scmp.lt.s32.totalorder %s19, 5
      %s203 = scalar_select %p202, %s19, 5
      %s204 = smul.addr %s201, 6
      %s205 = sadd.s32 %s203, %s204
      %s206 = smul.addr %s205, 4
      %s207 = scalar_lea.vmem %s0, %s206
      %p208 = pneg %p49
      %p209 = pneg %p46
      %s210 = sadd.s32 %s19, 2
      %p211 = scmp.lt.s32.totalorder %s18, 1
      %s212 = scalar_select %p211, %s18, 1
      %p213 = scmp.lt.s32.totalorder %s210, 5
      %s214 = scalar_select %p213, %s210, 5
      %s215 = smul.addr %s212, 6
      %s216 = sadd.s32 %s214, %s215
      %s217 = smul.addr %s216, 4
      %s218 = scalar_lea.vmem %s1, %s217
      %p219 = pneg %p79
      %p220 = pneg %p76
      %s221 = sadd.s32 %s19, 4
      %p222 = scmp.lt.s32.totalorder %s18, 1
      %s223 = scalar_select %p222, %s18, 1
      %p224 = scmp.lt.s32.totalorder %s221, 5
      %s225 = scalar_select %p224, %s221, 5
      %s226 = smul.addr %s223, 6
      %s227 = sadd.s32 %s225, %s226
      %s228 = smul.addr %s227, 4
      %s229 = scalar_lea.vmem %s2, %s228
      %p230 = pneg %p109
      %p231 = pneg %p106
      %p232 = pneg %p137
      %p233 = pneg %p134
      %p234 = scmp.lt.s32.totalorder %s18, 1
      %s235 = scalar_select %p234, %s18, 1
      %p236 = scmp.lt.s32.totalorder %s19, 1
      %s237 = scalar_select %p236, %s19, 1
      %s238 = smul.addr %s235, 2
      %s239 = sadd.s32 %s237, %s238
      %s240 = smul.addr %s239, 4
      %s241 = scalar_lea.vmem %s3, %s240
      %p242 = scmp.lt.s32.totalorder %s18, 1
      %s243 = scalar_select %p242, %s18, 1
      %p244 = scmp.lt.s32.totalorder %s19, 5
      %s245 = scalar_select %p244, %s19, 5
      %s246 = smul.addr %s243, 6
      %s247 = sadd.s32 %s245, %s246
      %s248 = smul.addr %s247, 4
      %s249 = scalar_lea.vmem %s0, %s248
      %s250 = sadd.s32 %s19, 2
      %p251 = scmp.lt.s32.totalorder %s18, 1
      %s252 = scalar_select %p251, %s18, 1
      %p253 = scmp.lt.s32.totalorder %s250, 5
      %s254 = scalar_select %p253, %s250, 5
      %s255 = smul.addr %s252, 6
      %s256 = sadd.s32 %s254, %s255
      %s257 = smul.addr %s256, 4
      %s258 = scalar_lea.vmem %s1, %s257
      %s259 = sadd.s32 %s19, 2
      %s260 = sadd.s32 %s19, 4
      %p261 = scmp.lt.s32.totalorder %s18, 1
      %s262 = scalar_select %p261, %s18, 1
      %p263 = scmp.lt.s32.totalorder %s260, 5
      %s264 = scalar_select %p263, %s260, 5
      %s265 = smul.addr %s262, 6
      %s266 = sadd.s32 %s264, %s265
      %s267 = smul.addr %s266, 4
      %s268 = scalar_lea.vmem %s2, %s267
      %s269 = sadd.s32 %s19, 4
      %p270 = scmp.lt.s32.totalorder %s18, 1
      %s271 = scalar_select %p270, %s18, 1
      %p272 = scmp.lt.s32.totalorder %s19, 1
      %s273 = scalar_select %p272, %s19, 1
      %s274 = smul.addr %s271, 2
      %s275 = sadd.s32 %s273, %s274
      %s276 = smul.addr %s275, 4
      %s277 = scalar_lea.vmem %s3, %s276
      %v279 = vld [vmem:[%s249] sm:$0x7]
      %v280 = vld [vmem:[%s258] sm:$0x7]
      %v281 = vld [vmem:[%s268] sm:$0x7]
      %282 = vmatprep.subr.bf16.mxu0 0
      %283 = vmatpush1.bf16.xpose.msra.mxu0 %v280
      %284 = vmatprep.subr.bf16.mxu0 0
      %285 = vmatpush1.bf16.xpose.msra.mxu0 0
      %286 = vmatprep.subr.bf16.mxu0 0
      %287 = vmatpush1.bf16.xpose.msra.mxu0 0
      %288 = vmatprep.subr.bf16.mxu0 0
      %289 = vmatpush1.bf16.xpose.msra.mxu0 0
      %290 = vmatprep.subr.bf16.mxu0 0
      %291 = vmatpush1.bf16.xpose.msra.mxu0 0
      %292 = vmatprep.subr.bf16.mxu0 0
      %293 = vmatpush1.bf16.xpose.msra.mxu0 0
      %294 = vmatprep.subr.bf16.mxu0 0
      %295 = vmatpush1.bf16.xpose.msra.mxu0 0
      %296 = vmatprep.subr.bf16.mxu0 0
      %297 = vmatpush1.bf16.xpose.msra.mxu0 0
      %298 = vmatprep.subr.bf16.mxu0 0
      %299 = vmatpush1.bf16.xpose.msra.mxu0 0
      %300 = vmatprep.subr.bf16.mxu0 0
      %301 = vmatpush1.bf16.xpose.msra.mxu0 0
      %302 = vmatprep.subr.bf16.mxu0 0
      %303 = vmatpush1.bf16.xpose.msra.mxu0 0
      %304 = vmatprep.subr.bf16.mxu0 0
      %305 = vmatpush1.bf16.xpose.msra.mxu0 0
      %306 = vmatprep.subr.bf16.mxu0 0
      %307 = vmatpush1.bf16.xpose.msra.mxu0 0
      %308 = vmatprep.subr.bf16.mxu0 0
      %309 = vmatpush1.bf16.xpose.msra.mxu0 0
      %310 = vmatprep.subr.bf16.mxu0 0
      %311 = vmatpush1.bf16.xpose.msra.mxu0 0
      %312 = vmatprep.subr.bf16.mxu0 0
      %313 = vmatpush1.bf16.xpose.msra.mxu0 0
      %314 = vmatprep.mubr.bf16.mxu0 0
      %315 = vmatmul.mubr.bf16.gmra.mrb[0].mxu0 %v279
      %v316 = vpop.f32.mrb[0].mxu0
      %v317 = vadd.f32 0.0, %v316
      %v318 = vpop.f32.mrb[0].mxu0
      %v319 = vpop.f32.mrb[0].mxu0
      %v320 = vpop.f32.mrb[0].mxu0
      %321 = vdwg.mxu0
      %vm322 = vcmask 36864
      %v323 = vsel %vm322, %v317, -inf
      %324 = vmax.xlane.f32.xlu0 %v323
      %v325 = vpop.xlane.xlu0 %324
      %v326 = vsub.f32 %v317, %v325
      %v327 = vmul.f32 %v326, 1.442695
      %v328 = vpow.pop %v327
      %v329 = vsel %vm322, %v328, 0.0
      %330 = vadd.xlane.f32.xlu0 %v329
      %v331 = vpop.xlane.xlu0 %330
      %v332 = vpack.c.bf16 %v328, %v328
      %vm333 = vcmask 39936
      %v335 = vsel %vm333, %v332, 0
      %vm337 = vcmask 1041408
      %vm338 = vcmask 1042432
      %v339 = vsel %vm337, 4294967295, 65535
      %v340 = vsel %vm338, %v339, 0
      %v342 = vand.u32 %v281, %v340
      %344 = vmatprep.subr.bf16.mxu0 0
      %345 = vmatpush1.bf16.msra.mxu0 %v342
      %346 = vmatprep.subr.bf16.mxu0 0
      %347 = vmatpush1.bf16.msra.mxu0 0
      %348 = vmatprep.subr.bf16.mxu0 0
      %349 = vmatpush1.bf16.msra.mxu0 0
      %350 = vmatprep.subr.bf16.mxu0 0
      %351 = vmatpush1.bf16.msra.mxu0 0
      %352 = vmatprep.subr.bf16.mxu0 0
      %353 = vmatpush1.bf16.msra.mxu0 0
      %354 = vmatprep.subr.bf16.mxu0 0
      %355 = vmatpush1.bf16.msra.mxu0 0
      %356 = vmatprep.subr.bf16.mxu0 0
      %357 = vmatpush1.bf16.msra.mxu0 0
      %358 = vmatprep.subr.bf16.mxu0 0
      %359 = vmatpush1.bf16.msra.mxu0 0
      %360 = vmatprep.subr.bf16.mxu0 0
      %361 = vmatpush1.bf16.msra.mxu0 0
      %362 = vmatprep.subr.bf16.mxu0 0
      %363 = vmatpush1.bf16.msra.mxu0 0
      %364 = vmatprep.subr.bf16.mxu0 0
      %365 = vmatpush1.bf16.msra.mxu0 0
      %366 = vmatprep.subr.bf16.mxu0 0
      %367 = vmatpush1.bf16.msra.mxu0 0
      %368 = vmatprep.subr.bf16.mxu0 0
      %369 = vmatpush1.bf16.msra.mxu0 0
      %370 = vmatprep.subr.bf16.mxu0 0
      %371 = vmatpush1.bf16.msra.mxu0 0
      %372 = vmatprep.subr.bf16.mxu0 0
      %373 = vmatpush1.bf16.msra.mxu0 0
      %374 = vmatprep.subr.bf16.mxu0 0
      %375 = vmatpush1.bf16.msra.mxu0 0
      %376 = vmatprep.mubr.bf16.mxu0 0
      %377 = vmatmul.mubr.bf16.gmra.mrb[0].mxu0 %v335
      %v378 = vpop.f32.mrb[0].mxu0
      %v379 = vadd.f32 0.0, %v378
      %v380 = vpop.f32.mrb[0].mxu0
      %v381 = vpop.f32.mrb[0].mxu0
      %v382 = vpop.f32.mrb[0].mxu0
      %383 = vdwg.mxu0
      %v384 = vrcp.pop %v331
      %v385 = vmul.f32 %v379, %v384
      %v386 = vpack.c.bf16 %v385, %v385
      %vm387 = vcmask 1042432
      %vm388 = vsmask.f32 2304
      %vm389 = vmand %vm387, %vm388
      %v390 = vld [vmem:[%s277] sm:$0x7]
      %v391 = vsel %vm389, %v386, %v390
      %392 = vst [vmem:[%s277] sm:$0x7] %v391
      %p393 = scmp.lt.s32.totalorder %s18, 1
      %s394 = scalar_select %p393, %s18, 1
      %p395 = scmp.lt.s32.totalorder %s19, 1
      %s396 = scalar_select %p395, %s19, 1
      %s397 = smul.addr %s394, 2
      %s398 = sadd.s32 %s396, %s397
      %s399 = smul.addr %s398, 4
      %s400 = scalar_lea.vmem %s3, %s399
      // Predicated region
      $region33: #{transformer_forward.36} parent=31 // pred_check
        %p401 = pneg %p134
      $region34: #{transformer_forward.36} parent=31 // pred_check_branch
        %403 = sbr.rel (%p401) target = $region36
      $region35: #{transformer_forward.36} parent=31 // pred_region
        _
      $region36: #{transformer_forward.36} parent=31 // pred_fallthru
        _
    $region32: #{transformer_forward.36} parent=5 // pred_fallthru
      _
    %p404 = scmp.le.s32.totalorder 2, %s9
    // Predicated region
    $region37: #{transformer_forward.36} parent=5 // pred_check
      %p405 = pneg %p404
    $region38: #{transformer_forward.36} parent=5 // pred_check_branch
      %407 = sbr.rel (%p405) target = $region40
    $region39: #{transformer_forward.36} parent=5 // pred_region
      %s408 = ssub.s32 %s9, 2
      // Predicated region
      $region41: #{transformer_forward.36} parent=39 // pred_check
        %p409 = pneg %p140
      $region42: #{transformer_forward.36} parent=39 // pred_check_branch
        %411 = sbr.rel (%p409) target = $region44
      $region43: #{transformer_forward.36} parent=39 // pred_region
        %p412 = scmp.lt.s32.totalorder %s20, 1
        %s413 = scalar_select %p412, %s20, 1
        %p414 = scmp.lt.s32.totalorder %s21, 1
        %s415 = scalar_select %p414, %s21, 1
        %s416 = smul.addr %s413, 2
        %s417 = sadd.s32 %s415, %s416
        %s418 = smul.addr %s417, 4
        %s419 = scalar_lea.vmem %s3, %s418
      $region44: #{transformer_forward.36} parent=39 // pred_fallthru
        _
    $region40: #{transformer_forward.36} parent=5 // pred_fallthru
      _
  $region6: #{transformer_forward.36} parent=0 // loop_footer
    %s13 = sadd.s32 1, %s9
  $region7: #{transformer_forward.36} parent=0 // loop_footer_branch
    %8 = sbr.rel target = $region3
  $region8: #{transformer_forward.36} parent=0 // loop_exit
    _

// kernel: transformer_forward.35
$region0: #{transformer_forward.35}
  #allocation0 [shape = 'u32[]', space=smem, size = 0x4, offset = 0x4, fixed_abs, tag = 'smem constant byte address 0x4 - core index']
  #allocation1 [shape = 'u32[144,128]{1,0:T(1,128)}', space=vmem, size = 0x12000, scoped, tag = 'internal scratch']
  %s0 = inlined_call_operand.vmem [shape: f32[16,256], index: 0, kind: input, shape index: {}]
  %s1 = inlined_call_operand.hbm [shape: bf16[256,768], index: 1, kind: input, shape index: {}]
  %s2 = inlined_call_operand.vmem [shape: f32[1,768], index: 2, kind: input, shape index: {}]
  %s3 = inlined_call_operand.vmem [shape: bf16[16,768], index: 3, kind: output, shape index: {}]
  %s4 = sld [smem:[#allocation0]]
  $region26: #{transformer_forward.35} parent=0
    _
  %s6 = ssub.s32 1, %s4
  %s7 = scalar_select 0, %s6, %s4
  $region1: #{transformer_forward.35} parent=0
    #allocation2 [shape = 'u8[393216]{0}', space=vmem, size = 0x60000, scoped, tag = 'input window, operand 1, single buffered']
    #allocation3 [shape = 's32[1]{0}', space=sflag, size = 0x4, scoped, tag = 'scoped memory for transformer_forward.35']
    %8 = vsyncpa [#allocation3], 0
    // Predicated region
    $region2: #{transformer_forward.35} parent=1 // pred_check
      _
    $region3: #{transformer_forward.35} parent=1 // pred_check_branch
      %10 = sbr.rel (0) target = $region5
    $region4: #{transformer_forward.35} parent=1 // pred_region
      _
    $region5: #{transformer_forward.35} parent=1 // pred_fallthru
      _
    // Predicated region
    $region6: #{transformer_forward.35} parent=1 // pred_check
      _
    $region7: #{transformer_forward.35} parent=1 // pred_check_branch
      %12 = sbr.rel (0) target = $region9
    $region8: #{transformer_forward.35} parent=1 // pred_region
      %s14 = ssub.s32 12288, 12288
      %15 = vsyncadd [#allocation3], %s14
      %s16 = sshll.u32 [#allocation2], 4
      %s17 = int_to_ptr.vmem [resolvable:$true] %s16
      %22 = dma.hbm_to_vmem [thread:$0]  %s1, 12288, %s17, [#allocation3], 384, 384, 24
    $region9: #{transformer_forward.35} parent=1 // pred_fallthru
      _
    // Predicated region
    $region10: #{transformer_forward.35} parent=1 // pred_check
      _
    $region11: #{transformer_forward.35} parent=1 // pred_check_branch
      %24 = sbr.rel (0) target = $region13
    $region12: #{transformer_forward.35} parent=1 // pred_region
      _
    $region13: #{transformer_forward.35} parent=1 // pred_fallthru
      _
    // Predicated region
    $region14: #{transformer_forward.35} parent=1 // pred_check
      _
    $region15: #{transformer_forward.35} parent=1 // pred_check_branch
      %26 = sbr.rel (0) target = $region17
    $region16: #{transformer_forward.35} parent=1 // pred_region
      %27 = dma.done [#allocation3], 12288
    $region17: #{transformer_forward.35} parent=1 // pred_fallthru
      _
    %v28 = vld [vmem:[%s0] sm:$0xff]
    %v29 = vld [vmem:[%s0 + $0x8] sm:$0xff]
    %v30 = vld [vmem:[%s0 + $0x10] sm:$0xff]
    %v31 = vld [vmem:[%s0 + $0x18] sm:$0xff]
    %v32 = vpack.c.bf16 %v30, %v28
    %v33 = vpack.c.bf16 %v31, %v29
    %v34 = vld [vmem:[#allocation2] sm:$0xff]
    %v35 = vld [vmem:[#allocation2 + $0x8] sm:$0xff]
    %v36 = vld [vmem:[#allocation2 + $0x10] sm:$0xff]
    %v37 = vld [vmem:[#allocation2 + $0x18] sm:$0xff]
    %v38 = vld [vmem:[#allocation2 + $0x20] sm:$0xff]
    %v39 = vld [vmem:[#allocation2 + $0x28] sm:$0xff]
    %v40 = vld [vmem:[#allocation2 + $0x30] sm:$0xff]
    %v41 = vld [vmem:[#allocation2 + $0x38] sm:$0xff]
    %v42 = vld [vmem:[#allocation2 + $0x40] sm:$0xff]
    %v43 = vld [vmem:[#allocation2 + $0x48] sm:$0xff]
    %v44 = vld [vmem:[#allocation2 + $0x50] sm:$0xff]
    %v45 = vld [vmem:[#allocation2 + $0x58] sm:$0xff]
    %v46 = vld [vmem:[#allocation2 + $0x60] sm:$0xff]
    %v47 = vld [vmem:[#allocation2 + $0x68] sm:$0xff]
    %v48 = vld [vmem:[#allocation2 + $0x70] sm:$0xff]
    %v49 = vld [vmem:[#allocation2 + $0x78] sm:$0xff]
    %v50 = vld [vmem:[#allocation2 + $0x80] sm:$0xff]
    %v51 = vld [vmem:[#allocation2 + $0x88] sm:$0xff]
    %v52 = vld [vmem:[#allocation2 + $0x90] sm:$0xff]
    %v53 = vld [vmem:[#allocation2 + $0x98] sm:$0xff]
    %v54 = vld [vmem:[#allocation2 + $0xa0] sm:$0xff]
    %v55 = vld [vmem:[#allocation2 + $0xa8] sm:$0xff]
    %v56 = vld [vmem:[#allocation2 + $0xb0] sm:$0xff]
    %v57 = vld [vmem:[#allocation2 + $0xb8] sm:$0xff]
    %v58 = vld [vmem:[#allocation2 + $0xc0] sm:$0xff]
    %v59 = vld [vmem:[#allocation2 + $0xc8] sm:$0xff]
    %v60 = vld [vmem:[#allocation2 + $0xd0] sm:$0xff]
    %v61 = vld [vmem:[#allocation2 + $0xd8] sm:$0xff]
    %v62 = vld [vmem:[#allocation2 + $0xe0] sm:$0xff]
    %v63 = vld [vmem:[#allocation2 + $0xe8] sm:$0xff]
    %v64 = vld [vmem:[#allocation2 + $0xf0] sm:$0xff]
    %v65 = vld [vmem:[#allocation2 + $0xf8] sm:$0xff]
    %v66 = vld [vmem:[#allocation2 + $0x100] sm:$0xff]
    %v67 = vld [vmem:[#allocation2 + $0x108] sm:$0xff]
    %v68 = vld [vmem:[#allocation2 + $0x110] sm:$0xff]
    %v69 = vld [vmem:[#allocation2 + $0x118] sm:$0xff]
    %v70 = vld [vmem:[#allocation2 + $0x120] sm:$0xff]
    %v71 = vld [vmem:[#allocation2 + $0x128] sm:$0xff]
    %v72 = vld [vmem:[#allocation2 + $0x130] sm:$0xff]
    %v73 = vld [vmem:[#allocation2 + $0x138] sm:$0xff]
    %v74 = vld [vmem:[#allocation2 + $0x140] sm:$0xff]
    %v75 = vld [vmem:[#allocation2 + $0x148] sm:$0xff]
    %v76 = vld [vmem:[#allocation2 + $0x150] sm:$0xff]
    %v77 = vld [vmem:[#allocation2 + $0x158] sm:$0xff]
    %v78 = vld [vmem:[#allocation2 + $0x160] sm:$0xff]
    %v79 = vld [vmem:[#allocation2 + $0x168] sm:$0xff]
    %v80 = vld [vmem:[#allocation2 + $0x170] sm:$0xff]
    %v81 = vld [vmem:[#allocation2 + $0x178] sm:$0xff]
    %v82 = vld [vmem:[#allocation2 + $0x180] sm:$0xff]
    %v83 = vld [vmem:[#allocation2 + $0x188] sm:$0xff]
    %v84 = vld [vmem:[#allocation2 + $0x190] sm:$0xff]
    %v85 = vld [vmem:[#allocation2 + $0x198] sm:$0xff]
    %v86 = vld [vmem:[#allocation2 + $0x1a0] sm:$0xff]
    %v87 = vld [vmem:[#allocation2 + $0x1a8] sm:$0xff]
    %v88 = vld [vmem:[#allocation2 + $0x1b0] sm:$0xff]
    %v89 = vld [vmem:[#allocation2 + $0x1b8] sm:$0xff]
    %v90 = vld [vmem:[#allocation2 + $0x1c0] sm:$0xff]
    %v91 = vld [vmem:[#allocation2 + $0x1c8] sm:$0xff]
    %v92 = vld [vmem:[#allocation2 + $0x1d0] sm:$0xff]
    %v93 = vld [vmem:[#allocation2 + $0x1d8] sm:$0xff]
    %v94 = vld [vmem:[#allocation2 + $0x1e0] sm:$0xff]
    %v95 = vld [vmem:[#allocation2 + $0x1e8] sm:$0xff]
    %v96 = vld [vmem:[#allocation2 + $0x1f0] sm:$0xff]
    %v97 = vld [vmem:[#allocation2 + $0x1f8] sm:$0xff]
    %v98 = vld [vmem:[#allocation2 + $0x200] sm:$0xff]
    %v99 = vld [vmem:[#allocation2 + $0x208] sm:$0xff]
    %v100 = vld [vmem:[#allocation2 + $0x210] sm:$0xff]
    %v101 = vld [vmem:[#allocation2 + $0x218] sm:$0xff]
    %v102 = vld [vmem:[#allocation2 + $0x220] sm:$0xff]
    %v103 = vld [vmem:[#allocation2 + $0x228] sm:$0xff]
    %v104 = vld [vmem:[#allocation2 + $0x230] sm:$0xff]
    %v105 = vld [vmem:[#allocation2 + $0x238] sm:$0xff]
    %v106 = vld [vmem:[#allocation2 + $0x240] sm:$0xff]
    %v107 = vld [vmem:[#allocation2 + $0x248] sm:$0xff]
    %v108 = vld [vmem:[#allocation2 + $0x250] sm:$0xff]
    %v109 = vld [vmem:[#allocation2 + $0x258] sm:$0xff]
    %v110 = vld [vmem:[#allocation2 + $0x260] sm:$0xff]
    %v111 = vld [vmem:[#allocation2 + $0x268] sm:$0xff]
    %v112 = vld [vmem:[#allocation2 + $0x270] sm:$0xff]
    %v113 = vld [vmem:[#allocation2 + $0x278] sm:$0xff]
    %v114 = vld [vmem:[#allocation2 + $0x280] sm:$0xff]
    %v115 = vld [vmem:[#allocation2 + $0x288] sm:$0xff]
    %v116 = vld [vmem:[#allocation2 + $0x290] sm:$0xff]
    %v117 = vld [vmem:[#allocation2 + $0x298] sm:$0xff]
    %v118 = vld [vmem:[#allocation2 + $0x2a0] sm:$0xff]
    %v119 = vld [vmem:[#allocation2 + $0x2a8] sm:$0xff]
    %v120 = vld [vmem:[#allocation2 + $0x2b0] sm:$0xff]
    %v121 = vld [vmem:[#allocation2 + $0x2b8] sm:$0xff]
    %v122 = vld [vmem:[#allocation2 + $0x2c0] sm:$0xff]
    %v123 = vld [vmem:[#allocation2 + $0x2c8] sm:$0xff]
    %v124 = vld [vmem:[#allocation2 + $0x2d0] sm:$0xff]
    %v125 = vld [vmem:[#allocation2 + $0x2d8] sm:$0xff]
    %v126 = vld [vmem:[#allocation2 + $0x2e0] sm:$0xff]
    %v127 = vld [vmem:[#allocation2 + $0x2e8] sm:$0xff]
    %v128 = vld [vmem:[#allocation2 + $0x2f0] sm:$0xff]
    %v129 = vld [vmem:[#allocation2 + $0x2f8] sm:$0xff]
    %v130 = vld [vmem:[%s2] sm:$0x3f]
    %v132 = vlaneseq
    %v133 = vshrl.u32 %v132, 7
    %v134 = vsub.s32 0, %v133
    %v135 = vrot.slane %v130, %v134
    %v136 = vlaneseq
    %v137 = vshrl.u32 %v136, 7
    %v138 = vsub.s32 1, %v137
    %v139 = vrot.slane %v130, %v138
    %v140 = vlaneseq
    %v141 = vshrl.u32 %v140, 7
    %v142 = vsub.s32 2, %v141
    %v143 = vrot.slane %v130, %v142
    %v144 = vlaneseq
    %v145 = vshrl.u32 %v144, 7
    %v146 = vsub.s32 3, %v145
    %v147 = vrot.slane %v130, %v146
    %v148 = vlaneseq
    %v149 = vshrl.u32 %v148, 7
    %v150 = vsub.s32 4, %v149
    %v151 = vrot.slane %v130, %v150
    %v152 = vlaneseq
    %v153 = vshrl.u32 %v152, 7
    %v154 = vsub.s32 5, %v153
    %v155 = vrot.slane %v130, %v154
    %v258 = vunpack.c.l.b16 %v34
    %v259 = vunpack.c.h.b16 %v34
    %v260 = vunpack.c.l.b16 %v35
    %v261 = vunpack.c.h.b16 %v35
    %v262 = vunpack.c.l.b16 %v36
    %v263 = vunpack.c.h.b16 %v36
    %v264 = vunpack.c.l.b16 %v37
    %v265 = vunpack.c.h.b16 %v37
    %v266 = vunpack.c.l.b16 %v38
    %v267 = vunpack.c.h.b16 %v38
    %v268 = vunpack.c.l.b16 %v39
    %v269 = vunpack.c.h.b16 %v39
    %v270 = vunpack.c.l.b16 %v40
    %v271 = vunpack.c.h.b16 %v40
    %v272 = vunpack.c.l.b16 %v41
    %v273 = vunpack.c.h.b16 %v41
    %v274 = vunpack.c.l.b16 %v42
    %v275 = vunpack.c.h.b16 %v42
    %v276 = vunpack.c.l.b16 %v43
    %v277 = vunpack.c.h.b16 %v43
    %v278 = vunpack.c.l.b16 %v44
    %v279 = vunpack.c.h.b16 %v44
    %v280 = vunpack.c.l.b16 %v45
    %v281 = vunpack.c.h.b16 %v45
    %v282 = vunpack.c.l.b16 %v46
    %v283 = vunpack.c.h.b16 %v46
    %v284 = vunpack.c.l.b16 %v47
    %v285 = vunpack.c.h.b16 %v47
    %v286 = vunpack.c.l.b16 %v48
    %v287 = vunpack.c.h.b16 %v48
    %v288 = vunpack.c.l.b16 %v49
    %v289 = vunpack.c.h.b16 %v49
    %v290 = vunpack.c.l.b16 %v50
    %v291 = vunpack.c.h.b16 %v50
    %v292 = vunpack.c.l.b16 %v51
    %v293 = vunpack.c.h.b16 %v51
    %v294 = vunpack.c.l.b16 %v52
    %v295 = vunpack.c.h.b16 %v52
    %v296 = vunpack.c.l.b16 %v53
    %v297 = vunpack.c.h.b16 %v53
    %v298 = vunpack.c.l.b16 %v54
    %v299 = vunpack.c.h.b16 %v54
    %v300 = vunpack.c.l.b16 %v55
    %v301 = vunpack.c.h.b16 %v55
    %v302 = vunpack.c.l.b16 %v56
    %v303 = vunpack.c.h.b16 %v56
    %v304 = vunpack.c.l.b16 %v57
    %v305 = vunpack.c.h.b16 %v57
    %v306 = vunpack.c.l.b16 %v58
    %v307 = vunpack.c.h.b16 %v58
    %v308 = vunpack.c.l.b16 %v59
    %v309 = vunpack.c.h.b16 %v59
    %v310 = vunpack.c.l.b16 %v60
    %v311 = vunpack.c.h.b16 %v60
    %v312 = vunpack.c.l.b16 %v61
    %v313 = vunpack.c.h.b16 %v61
    %v314 = vunpack.c.l.b16 %v62
    %v315 = vunpack.c.h.b16 %v62
    %v316 = vunpack.c.l.b16 %v63
    %v317 = vunpack.c.h.b16 %v63
    %v318 = vunpack.c.l.b16 %v64
    %v319 = vunpack.c.h.b16 %v64
    %v320 = vunpack.c.l.b16 %v65
    %v321 = vunpack.c.h.b16 %v65
    %v322 = vunpack.c.l.b16 %v66
    %v323 = vunpack.c.h.b16 %v66
    %v324 = vunpack.c.l.b16 %v67
    %v325 = vunpack.c.h.b16 %v67
    %v326 = vunpack.c.l.b16 %v68
    %v327 = vunpack.c.h.b16 %v68
    %v328 = vunpack.c.l.b16 %v69
    %v329 = vunpack.c.h.b16 %v69
    %v330 = vunpack.c.l.b16 %v70
    %v331 = vunpack.c.h.b16 %v70
    %v332 = vunpack.c.l.b16 %v71
    %v333 = vunpack.c.h.b16 %v71
    %v334 = vunpack.c.l.b16 %v72
    %v335 = vunpack.c.h.b16 %v72
    %v336 = vunpack.c.l.b16 %v73
    %v337 = vunpack.c.h.b16 %v73
    %v338 = vunpack.c.l.b16 %v74
    %v339 = vunpack.c.h.b16 %v74
    %v340 = vunpack.c.l.b16 %v75
    %v341 = vunpack.c.h.b16 %v75
    %v342 = vunpack.c.l.b16 %v76
    %v343 = vunpack.c.h.b16 %v76
    %v344 = vunpack.c.l.b16 %v77
    %v345 = vunpack.c.h.b16 %v77
    %v346 = vunpack.c.l.b16 %v78
    %v347 = vunpack.c.h.b16 %v78
    %v348 = vunpack.c.l.b16 %v79
    %v349 = vunpack.c.h.b16 %v79
    %v350 = vunpack.c.l.b16 %v80
    %v351 = vunpack.c.h.b16 %v80
    %v352 = vunpack.c.l.b16 %v81
    %v353 = vunpack.c.h.b16 %v81
    %v354 = vunpack.c.l.b16 %v82
    %v355 = vunpack.c.h.b16 %v82
    %v356 = vunpack.c.l.b16 %v83
    %v357 = vunpack.c.h.b16 %v83
    %v358 = vunpack.c.l.b16 %v84
    %v359 = vunpack.c.h.b16 %v84
    %v360 = vunpack.c.l.b16 %v85
    %v361 = vunpack.c.h.b16 %v85
    %v362 = vunpack.c.l.b16 %v86
    %v363 = vunpack.c.h.b16 %v86
    %v364 = vunpack.c.l.b16 %v87
    %v365 = vunpack.c.h.b16 %v87
    %v366 = vunpack.c.l.b16 %v88
    %v367 = vunpack.c.h.b16 %v88
    %v368 = vunpack.c.l.b16 %v89
    %v369 = vunpack.c.h.b16 %v89
    %v370 = vunpack.c.l.b16 %v90
    %v371 = vunpack.c.h.b16 %v90
    %v372 = vunpack.c.l.b16 %v91
    %v373 = vunpack.c.h.b16 %v91
    %v374 = vunpack.c.l.b16 %v92
    %v375 = vunpack.c.h.b16 %v92
    %v376 = vunpack.c.l.b16 %v93
    %v377 = vunpack.c.h.b16 %v93
    %v378 = vunpack.c.l.b16 %v94
    %v379 = vunpack.c.h.b16 %v94
    %v380 = vunpack.c.l.b16 %v95
    %v381 = vunpack.c.h.b16 %v95
    %v382 = vunpack.c.l.b16 %v96
    %v383 = vunpack.c.h.b16 %v96
    %v384 = vunpack.c.l.b16 %v97
    %v385 = vunpack.c.h.b16 %v97
    %v386 = vunpack.c.l.b16 %v98
    %v387 = vunpack.c.h.b16 %v98
    %v388 = vunpack.c.l.b16 %v99
    %v389 = vunpack.c.h.b16 %v99
    %v390 = vunpack.c.l.b16 %v100
    %v391 = vunpack.c.h.b16 %v100
    %v392 = vunpack.c.l.b16 %v101
    %v393 = vunpack.c.h.b16 %v101
    %v394 = vunpack.c.l.b16 %v102
    %v395 = vunpack.c.h.b16 %v102
    %v396 = vunpack.c.l.b16 %v103
    %v397 = vunpack.c.h.b16 %v103
    %v398 = vunpack.c.l.b16 %v104
    %v399 = vunpack.c.h.b16 %v104
    %v400 = vunpack.c.l.b16 %v105
    %v401 = vunpack.c.h.b16 %v105
    %v402 = vunpack.c.l.b16 %v106
    %v403 = vunpack.c.h.b16 %v106
    %v404 = vunpack.c.l.b16 %v107
    %v405 = vunpack.c.h.b16 %v107
    %v406 = vunpack.c.l.b16 %v108
    %v407 = vunpack.c.h.b16 %v108
    %v408 = vunpack.c.l.b16 %v109
    %v409 = vunpack.c.h.b16 %v109
    %v410 = vunpack.c.l.b16 %v110
    %v411 = vunpack.c.h.b16 %v110
    %v412 = vunpack.c.l.b16 %v111
    %v413 = vunpack.c.h.b16 %v111
    %v414 = vunpack.c.l.b16 %v112
    %v415 = vunpack.c.h.b16 %v112
    %v416 = vunpack.c.l.b16 %v113
    %v417 = vunpack.c.h.b16 %v113
    %v418 = vunpack.c.l.b16 %v114
    %v419 = vunpack.c.h.b16 %v114
    %v420 = vunpack.c.l.b16 %v115
    %v421 = vunpack.c.h.b16 %v115
    %v422 = vunpack.c.l.b16 %v116
    %v423 = vunpack.c.h.b16 %v116
    %v424 = vunpack.c.l.b16 %v117
    %v425 = vunpack.c.h.b16 %v117
    %v426 = vunpack.c.l.b16 %v118
    %v427 = vunpack.c.h.b16 %v118
    %v428 = vunpack.c.l.b16 %v119
    %v429 = vunpack.c.h.b16 %v119
    %v430 = vunpack.c.l.b16 %v120
    %v431 = vunpack.c.h.b16 %v120
    %v432 = vunpack.c.l.b16 %v121
    %v433 = vunpack.c.h.b16 %v121
    %v434 = vunpack.c.l.b16 %v122
    %v435 = vunpack.c.h.b16 %v122
    %v436 = vunpack.c.l.b16 %v123
    %v437 = vunpack.c.h.b16 %v123
    %v438 = vunpack.c.l.b16 %v124
    %v439 = vunpack.c.h.b16 %v124
    %v440 = vunpack.c.l.b16 %v125
    %v441 = vunpack.c.h.b16 %v125
    %v442 = vunpack.c.l.b16 %v126
    %v443 = vunpack.c.h.b16 %v126
    %v444 = vunpack.c.l.b16 %v127
    %v445 = vunpack.c.h.b16 %v127
    %v446 = vunpack.c.l.b16 %v128
    %v447 = vunpack.c.h.b16 %v128
    %v448 = vunpack.c.l.b16 %v129
    %v449 = vunpack.c.h.b16 %v129
    %v450 = vpack.c.b16 %v264, %v258
    %v451 = vpack.c.b16 %v265, %v259
    %v452 = vpack.c.b16 %v266, %v260
    %v453 = vpack.c.b16 %v267, %v261
    %v454 = vpack.c.b16 %v268, %v262
    %v455 = vpack.c.b16 %v269, %v263
    %v456 = vpack.c.b16 %v276, %v270
    %v457 = vpack.c.b16 %v277, %v271
    %v458 = vpack.c.b16 %v278, %v272
    %v459 = vpack.c.b16 %v279, %v273
    %v460 = vpack.c.b16 %v280, %v274
    %v461 = vpack.c.b16 %v281, %v275
    %v462 = vpack.c.b16 %v288, %v282
    %v463 = vpack.c.b16 %v289, %v283
    %v464 = vpack.c.b16 %v290, %v284
    %v465 = vpack.c.b16 %v291, %v285
    %v466 = vpack.c.b16 %v292, %v286
    %v467 = vpack.c.b16 %v293, %v287
    %v468 = vpack.c.b16 %v300, %v294
    %v469 = vpack.c.b16 %v301, %v295
    %v470 = vpack.c.b16 %v302, %v296
    %v471 = vpack.c.b16 %v303, %v297
    %v472 = vpack.c.b16 %v304, %v298
    %v473 = vpack.c.b16 %v305, %v299
    %v474 = vpack.c.b16 %v312, %v306
    %v475 = vpack.c.b16 %v313, %v307
    %v476 = vpack.c.b16 %v314, %v308
    %v477 = vpack.c.b16 %v315, %v309
    %v478 = vpack.c.b16 %v316, %v310
    %v479 = vpack.c.b16 %v317, %v311
    %v480 = vpack.c.b16 %v324, %v318
    %v481 = vpack.c.b16 %v325, %v319
    %v482 = vpack.c.b16 %v326, %v320
    %v483 = vpack.c.b16 %v327, %v321
    %v484 = vpack.c.b16 %v328, %v322
    %v485 = vpack.c.b16 %v329, %v323
    %v486 = vpack.c.b16 %v336, %v330
    %v487 = vpack.c.b16 %v337, %v331
    %v488 = vpack.c.b16 %v338, %v332
    %v489 = vpack.c.b16 %v339, %v333
    %v490 = vpack.c.b16 %v340, %v334
    %v491 = vpack.c.b16 %v341, %v335
    %v492 = vpack.c.b16 %v348, %v342
    %v493 = vpack.c.b16 %v349, %v343
    %v494 = vpack.c.b16 %v350, %v344
    %v495 = vpack.c.b16 %v351, %v345
    %v496 = vpack.c.b16 %v352, %v346
    %v497 = vpack.c.b16 %v353, %v347
    %v498 = vpack.c.b16 %v360, %v354
    %v499 = vpack.c.b16 %v361, %v355
    %v500 = vpack.c.b16 %v362, %v356
    %v501 = vpack.c.b16 %v363, %v357
    %v502 = vpack.c.b16 %v364, %v358
    %v503 = vpack.c.b16 %v365, %v359
    %v504 = vpack.c.b16 %v372, %v366
    %v505 = vpack.c.b16 %v373, %v367
    %v506 = vpack.c.b16 %v374, %v368
    %v507 = vpack.c.b16 %v375, %v369
    %v508 = vpack.c.b16 %v376, %v370
    %v509 = vpack.c.b16 %v377, %v371
    %v510 = vpack.c.b16 %v384, %v378
    %v511 = vpack.c.b16 %v385, %v379
    %v512 = vpack.c.b16 %v386, %v380
    %v513 = vpack.c.b16 %v387, %v381
    %v514 = vpack.c.b16 %v388, %v382
    %v515 = vpack.c.b16 %v389, %v383
    %v516 = vpack.c.b16 %v396, %v390
    %v517 = vpack.c.b16 %v397, %v391
    %v518 = vpack.c.b16 %v398, %v392
    %v519 = vpack.c.b16 %v399, %v393
    %v520 = vpack.c.b16 %v400, %v394
    %v521 = vpack.c.b16 %v401, %v395
    %v522 = vpack.c.b16 %v408, %v402
    %v523 = vpack.c.b16 %v409, %v403
    %v524 = vpack.c.b16 %v410, %v404
    %v525 = vpack.c.b16 %v411, %v405
    %v526 = vpack.c.b16 %v412, %v406
    %v527 = vpack.c.b16 %v413, %v407
    %v528 = vpack.c.b16 %v420, %v414
    %v529 = vpack.c.b16 %v421, %v415
    %v530 = vpack.c.b16 %v422, %v416
    %v531 = vpack.c.b16 %v423, %v417
    %v532 = vpack.c.b16 %v424, %v418
    %v533 = vpack.c.b16 %v425, %v419
    %v534 = vpack.c.b16 %v432, %v426
    %v535 = vpack.c.b16 %v433, %v427
    %v536 = vpack.c.b16 %v434, %v428
    %v537 = vpack.c.b16 %v435, %v429
    %v538 = vpack.c.b16 %v436, %v430
    %v539 = vpack.c.b16 %v437, %v431
    %v540 = vpack.c.b16 %v444, %v438
    %v541 = vpack.c.b16 %v445, %v439
    %v542 = vpack.c.b16 %v446, %v440
    %v543 = vpack.c.b16 %v447, %v441
    %v544 = vpack.c.b16 %v448, %v442
    %v545 = vpack.c.b16 %v449, %v443
    %642 = vmatprep.subr.bf16.mxu0 %v451
    %643 = vmatpush1.bf16.msra.mxu0 %v450
    %644 = vmatprep.subr.bf16.mxu0 %v457
    %645 = vmatpush1.bf16.msra.mxu0 %v456
    %646 = vmatprep.subr.bf16.mxu0 %v463
    %647 = vmatpush1.bf16.msra.mxu0 %v462
    %648 = vmatprep.subr.bf16.mxu0 %v469
    %649 = vmatpush1.bf16.msra.mxu0 %v468
    %650 = vmatprep.subr.bf16.mxu0 %v475
    %651 = vmatpush1.bf16.msra.mxu0 %v474
    %652 = vmatprep.subr.bf16.mxu0 %v481
    %653 = vmatpush1.bf16.msra.mxu0 %v480
    %654 = vmatprep.subr.bf16.mxu0 %v487
    %655 = vmatpush1.bf16.msra.mxu0 %v486
    %656 = vmatprep.subr.bf16.mxu0 %v493
    %657 = vmatpush1.bf16.msra.mxu0 %v492
    %658 = vmatprep.subr.bf16.mxu0 %v499
    %659 = vmatpush1.bf16.msra.mxu0 %v498
    %660 = vmatprep.subr.bf16.mxu0 %v505
    %661 = vmatpush1.bf16.msra.mxu0 %v504
    %662 = vmatprep.subr.bf16.mxu0 %v511
    %663 = vmatpush1.bf16.msra.mxu0 %v510
    %664 = vmatprep.subr.bf16.mxu0 %v517
    %665 = vmatpush1.bf16.msra.mxu0 %v516
    %666 = vmatprep.subr.bf16.mxu0 %v523
    %667 = vmatpush1.bf16.msra.mxu0 %v522
    %668 = vmatprep.subr.bf16.mxu0 %v529
    %669 = vmatpush1.bf16.msra.mxu0 %v528
    %670 = vmatprep.subr.bf16.mxu0 %v535
    %671 = vmatpush1.bf16.msra.mxu0 %v534
    %672 = vmatprep.subr.bf16.mxu0 %v541
    %673 = vmatpush1.bf16.msra.mxu0 %v540
    %674 = vmatprep.mubr.bf16.mxu0 %v33
    %675 = vmatmul.mubr.bf16.gmra.mrb[0].mxu0 %v32
    %v676 = vpop.f32.mrb[0].mxu0
    %v677 = vadd.f32 %v135, %v676
    %v678 = vpop.f32.mrb[0].mxu0
    %v679 = vadd.f32 %v139, %v678
    %v680 = vpop.f32.mrb[0].mxu0
    %v681 = vadd.f32 %v135, %v680
    %v682 = vpop.f32.mrb[0].mxu0
    %v683 = vadd.f32 %v139, %v682
    %684 = vdwg.mxu0
    %685 = vmatprep.subr.bf16.mxu0 %v453
    %686 = vmatpush1.bf16.msra.mxu0 %v452
    %687 = vmatprep.subr.bf16.mxu0 %v459
    %688 = vmatpush1.bf16.msra.mxu0 %v458
    %689 = vmatprep.subr.bf16.mxu0 %v465
    %690 = vmatpush1.bf16.msra.mxu0 %v464
    %691 = vmatprep.subr.bf16.mxu0 %v471
    %692 = vmatpush1.bf16.msra.mxu0 %v470
    %693 = vmatprep.subr.bf16.mxu0 %v477
    %694 = vmatpush1.bf16.msra.mxu0 %v476
    %695 = vmatprep.subr.bf16.mxu0 %v483
    %696 = vmatpush1.bf16.msra.mxu0 %v482
    %697 = vmatprep.subr.bf16.mxu0 %v489
    %698 = vmatpush1.bf16.msra.mxu0 %v488
    %699 = vmatprep.subr.bf16.mxu0 %v495
    %700 = vmatpush1.bf16.msra.mxu0 %v494
    %701 = vmatprep.subr.bf16.mxu0 %v501
    %702 = vmatpush1.bf16.msra.mxu0 %v500
    %703 = vmatprep.subr.bf16.mxu0 %v507
    %704 = vmatpush1.bf16.msra.mxu0 %v506
    %705 = vmatprep.subr.bf16.mxu0 %v513
    %706 = vmatpush1.bf16.msra.mxu0 %v512
    %707 = vmatprep.subr.bf16.mxu0 %v519
    %708 = vmatpush1.bf16.msra.mxu0 %v518
    %709 = vmatprep.subr.bf16.mxu0 %v525
    %710 = vmatpush1.bf16.msra.mxu0 %v524
    %711 = vmatprep.subr.bf16.mxu0 %v531
    %712 = vmatpush1.bf16.msra.mxu0 %v530
    %713 = vmatprep.subr.bf16.mxu0 %v537
    %714 = vmatpush1.bf16.msra.mxu0 %v536
    %715 = vmatprep.subr.bf16.mxu0 %v543
    %716 = vmatpush1.bf16.msra.mxu0 %v542
    %717 = vmatprep.mubr.bf16.mxu0 %v33
    %718 = vmatmul.mubr.bf16.gmra.mrb[0].mxu0 %v32
    %v719 = vpop.f32.mrb[0].mxu0
    %v720 = vadd.f32 %v143, %v719
    %v721 = vpop.f32.mrb[0].mxu0
    %v722 = vadd.f32 %v147, %v721
    %v723 = vpop.f32.mrb[0].mxu0
    %v724 = vadd.f32 %v143, %v723
    %v725 = vpop.f32.mrb[0].mxu0
    %v726 = vadd.f32 %v147, %v725
    %727 = vdwg.mxu0
    %728 = vmatprep.subr.bf16.mxu0 %v455
    %729 = vmatpush1.bf16.msra.mxu0 %v454
    %730 = vmatprep.subr.bf16.mxu0 %v461
    %731 = vmatpush1.bf16.msra.mxu0 %v460
    %732 = vmatprep.subr.bf16.mxu0 %v467
    %733 = vmatpush1.bf16.msra.mxu0 %v466
    %734 = vmatprep.subr.bf16.mxu0 %v473
    %735 = vmatpush1.bf16.msra.mxu0 %v472
    %736 = vmatprep.subr.bf16.mxu0 %v479
    %737 = vmatpush1.bf16.msra.mxu0 %v478
    %738 = vmatprep.subr.bf16.mxu0 %v485
    %739 = vmatpush1.bf16.msra.mxu0 %v484
    %740 = vmatprep.subr.bf16.mxu0 %v491
    %741 = vmatpush1.bf16.msra.mxu0 %v490
    %742 = vmatprep.subr.bf16.mxu0 %v497
    %743 = vmatpush1.bf16.msra.mxu0 %v496
    %744 = vmatprep.subr.bf16.mxu0 %v503
    %745 = vmatpush1.bf16.msra.mxu0 %v502
    %746 = vmatprep.subr.bf16.mxu0 %v509
    %747 = vmatpush1.bf16.msra.mxu0 %v508
    %748 = vmatprep.subr.bf16.mxu0 %v515
    %749 = vmatpush1.bf16.msra.mxu0 %v514
    %750 = vmatprep.subr.bf16.mxu0 %v521
    %751 = vmatpush1.bf16.msra.mxu0 %v520
    %752 = vmatprep.subr.bf16.mxu0 %v527
    %753 = vmatpush1.bf16.msra.mxu0 %v526
    %754 = vmatprep.subr.bf16.mxu0 %v533
    %755 = vmatpush1.bf16.msra.mxu0 %v532
    %756 = vmatprep.subr.bf16.mxu0 %v539
    %757 = vmatpush1.bf16.msra.mxu0 %v538
    %758 = vmatprep.subr.bf16.mxu0 %v545
    %759 = vmatpush1.bf16.msra.mxu0 %v544
    %760 = vmatprep.mubr.bf16.mxu0 %v33
    %761 = vmatmul.mubr.bf16.gmra.mrb[0].mxu0 %v32
    %v762 = vpop.f32.mrb[0].mxu0
    %v763 = vadd.f32 %v151, %v762
    %v764 = vpop.f32.mrb[0].mxu0
    %v765 = vadd.f32 %v155, %v764
    %v766 = vpop.f32.mrb[0].mxu0
    %v767 = vadd.f32 %v151, %v766
    %v768 = vpop.f32.mrb[0].mxu0
    %v769 = vadd.f32 %v155, %v768
    %770 = vdwg.mxu0
    %v771 = vpack.c.bf16 %v681, %v677
    %v772 = vpack.c.bf16 %v683, %v679
    %v773 = vpack.c.bf16 %v724, %v720
    %v774 = vpack.c.bf16 %v726, %v722
    %v775 = vpack.c.bf16 %v767, %v763
    %v776 = vpack.c.bf16 %v769, %v765
    %v783 = vunpack.c.l.b16 %v771
    %v784 = vunpack.c.l.b16 %v772
    %v785 = vunpack.c.l.b16 %v773
    %v786 = vunpack.c.l.b16 %v774
    %v787 = vunpack.c.l.b16 %v775
    %v788 = vunpack.c.l.b16 %v776
    %v789 = vunpack.c.h.b16 %v771
    %v790 = vunpack.c.h.b16 %v772
    %v791 = vunpack.c.h.b16 %v773
    %v792 = vunpack.c.h.b16 %v774
    %v793 = vunpack.c.h.b16 %v775
    %v794 = vunpack.c.h.b16 %v776
    %v795 = vpack.c.b16 %v784, %v783
    %v796 = vpack.c.b16 %v786, %v785
    %v797 = vpack.c.b16 %v788, %v787
    %v798 = vpack.c.b16 %v790, %v789
    %v799 = vpack.c.b16 %v792, %v791
    %v800 = vpack.c.b16 %v794, %v793
    %807 = vst [vmem:[%s3] sm:$0xff] %v795
    %808 = vst [vmem:[%s3 + $0x8] sm:$0xff] %v796
    %809 = vst [vmem:[%s3 + $0x10] sm:$0xff] %v797
    %810 = vst [vmem:[%s3 + $0x18] sm:$0xff] %v798
    %811 = vst [vmem:[%s3 + $0x20] sm:$0xff] %v799
    %812 = vst [vmem:[%s3 + $0x28] sm:$0xff] %v800
    // Predicated region
    $region18: #{transformer_forward.35} parent=1 // pred_check
      _
    $region19: #{transformer_forward.35} parent=1 // pred_check_branch
      %814 = sbr.rel (0) target = $region21
    $region20: #{transformer_forward.35} parent=1 // pred_region
      _
    $region21: #{transformer_forward.35} parent=1 // pred_fallthru
      _
    // Predicated region
    $region22: #{transformer_forward.35} parent=1 // pred_check
      _
    $region23: #{transformer_forward.35} parent=1 // pred_check_branch
      %816 = sbr.rel (0) target = $region25
    $region24: #{transformer_forward.35} parent=1 // pred_region
      _
    $region25: #{transformer_forward.35} parent=1 // pred_fallthru
      _
    %817 = vsyncpa [#allocation3], 1

// kernel: transformer_forward.37
$region0: #{transformer_forward.37}
  #allocation0 [shape = 'u32[]', space=smem, size = 0x4, offset = 0x4, fixed_abs, tag = 'smem constant byte address 0x4 - core index']
  #allocation1 [shape = 'u32[144,128]{1,0:T(1,128)}', space=vmem, size = 0x12000, scoped, tag = 'internal scratch']
  %s0 = inlined_call_operand.vmem [shape: bf16[16,256], index: 0, kind: input, shape index: {}]
  %s1 = inlined_call_operand.vmem [shape: bf16[256,256], index: 1, kind: input, shape index: {}]
  %s2 = inlined_call_operand.vmem [shape: f32[1,256], index: 2, kind: input, shape index: {}]
  %s3 = inlined_call_operand.vmem [shape: f32[16,256], index: 3, kind: input, shape index: {}]
  %s4 = inlined_call_operand.vmem [shape: f32[1,256], index: 4, kind: input, shape index: {}]
  %s5 = inlined_call_operand.vmem [shape: f32[1,256], index: 5, kind: input, shape index: {}]
  %s6 = inlined_call_operand.vmem [shape: f32[16,256], index: 6, kind: output, shape index: {}]
  %s7 = sld [smem:[#allocation0]]
  $region34: #{transformer_forward.37} parent=0
    _
  %s9 = ssub.s32 1, %s7
  %s10 = scalar_select 0, %s9, %s7
  // Predicated region
  $region2: #{transformer_forward.37} parent=0 // pred_check
    _
  $region3: #{transformer_forward.37} parent=0 // pred_check_branch
    %12 = sbr.rel (0) target = $region5
  $region4: #{transformer_forward.37} parent=0 // pred_region
    _
  $region5: #{transformer_forward.37} parent=0 // pred_fallthru
    _
  // Predicated region
  $region6: #{transformer_forward.37} parent=0 // pred_check
    _
  $region7: #{transformer_forward.37} parent=0 // pred_check_branch
    %14 = sbr.rel (0) target = $region9
  $region8: #{transformer_forward.37} parent=0 // pred_region
    _
  $region9: #{transformer_forward.37} parent=0 // pred_fallthru
    _
  // Predicated region
  $region10: #{transformer_forward.37} parent=0 // pred_check
    _
  $region11: #{transformer_forward.37} parent=0 // pred_check_branch
    %16 = sbr.rel (0) target = $region13
  $region12: #{transformer_forward.37} parent=0 // pred_region
    _
  $region13: #{transformer_forward.37} parent=0 // pred_fallthru
    _
  // Predicated region
  $region14: #{transformer_forward.37} parent=0 // pred_check
    _
  $region15: #{transformer_forward.37} parent=0 // pred_check_branch
    %18 = sbr.rel (0) target = $region17
  $region16: #{transformer_forward.37} parent=0 // pred_region
    _
  $region17: #{transformer_forward.37} parent=0 // pred_fallthru
    _
  // Predicated region
  $region18: #{transformer_forward.37} parent=0 // pred_check
    _
  $region19: #{transformer_forward.37} parent=0 // pred_check_branch
    %20 = sbr.rel (0) target = $region21
  $region20: #{transformer_forward.37} parent=0 // pred_region
    _
  $region21: #{transformer_forward.37} parent=0 // pred_fallthru
    _
  // Predicated region
  $region22: #{transformer_forward.37} parent=0 // pred_check
    _
  $region23: #{transformer_forward.37} parent=0 // pred_check_branch
    %22 = sbr.rel (0) target = $region25
  $region24: #{transformer_forward.37} parent=0 // pred_region
    _
  $region25: #{transformer_forward.37} parent=0 // pred_fallthru
    _
  %v23 = vld [vmem:[%s0] sm:$0xff]
  %v24 = vld [vmem:[%s0 + $0x8] sm:$0xff]
  %v25 = vld [vmem:[%s1] sm:$0xff]
  %v26 = vld [vmem:[%s1 + $0x8] sm:$0xff]
  %v27 = vld [vmem:[%s1 + $0x10] sm:$0xff]
  %v28 = vld [vmem:[%s1 + $0x18] sm:$0xff]
  %v29 = vld [vmem:[%s1 + $0x20] sm:$0xff]
  %v30 = vld [vmem:[%s1 + $0x28] sm:$0xff]
  %v31 = vld [vmem:[%s1 + $0x30] sm:$0xff]
  %v32 = vld [vmem:[%s1 + $0x38] sm:$0xff]
  %v33 = vld [vmem:[%s1 + $0x40] sm:$0xff]
  %v34 = vld [vmem:[%s1 + $0x48] sm:$0xff]
  %v35 = vld [vmem:[%s1 + $0x50] sm:$0xff]
  %v36 = vld [vmem:[%s1 + $0x58] sm:$0xff]
  %v37 = vld [vmem:[%s1 + $0x60] sm:$0xff]
  %v38 = vld [vmem:[%s1 + $0x68] sm:$0xff]
  %v39 = vld [vmem:[%s1 + $0x70] sm:$0xff]
  %v40 = vld [vmem:[%s1 + $0x78] sm:$0xff]
  %v41 = vld [vmem:[%s1 + $0x80] sm:$0xff]
  %v42 = vld [vmem:[%s1 + $0x88] sm:$0xff]
  %v43 = vld [vmem:[%s1 + $0x90] sm:$0xff]
  %v44 = vld [vmem:[%s1 + $0x98] sm:$0xff]
  %v45 = vld [vmem:[%s1 + $0xa0] sm:$0xff]
  %v46 = vld [vmem:[%s1 + $0xa8] sm:$0xff]
  %v47 = vld [vmem:[%s1 + $0xb0] sm:$0xff]
  %v48 = vld [vmem:[%s1 + $0xb8] sm:$0xff]
  %v49 = vld [vmem:[%s1 + $0xc0] sm:$0xff]
  %v50 = vld [vmem:[%s1 + $0xc8] sm:$0xff]
  %v51 = vld [vmem:[%s1 + $0xd0] sm:$0xff]
  %v52 = vld [vmem:[%s1 + $0xd8] sm:$0xff]
  %v53 = vld [vmem:[%s1 + $0xe0] sm:$0xff]
  %v54 = vld [vmem:[%s1 + $0xe8] sm:$0xff]
  %v55 = vld [vmem:[%s1 + $0xf0] sm:$0xff]
  %v56 = vld [vmem:[%s1 + $0xf8] sm:$0xff]
  %v57 = vld [vmem:[%s2] sm:$0x3]
  %v59 = vlaneseq
  %v60 = vshrl.u32 %v59, 7
  %v61 = vsub.s32 0, %v60
  %v62 = vrot.slane %v57, %v61
  %v63 = vlaneseq
  %v64 = vshrl.u32 %v63, 7
  %v65 = vsub.s32 1, %v64
  %v66 = vrot.slane %v57, %v65
  %v71 = vunpack.c.l.b16 %v23
  %v72 = vunpack.c.h.b16 %v23
  %v73 = vunpack.c.l.b16 %v24
  %v74 = vunpack.c.h.b16 %v24
  %v75 = vpack.c.b16 %v73, %v71
  %v76 = vpack.c.b16 %v74, %v72
  %v111 = vunpack.c.l.b16 %v25
  %v112 = vunpack.c.h.b16 %v25
  %v113 = vunpack.c.l.b16 %v26
  %v114 = vunpack.c.h.b16 %v26
  %v115 = vunpack.c.l.b16 %v27
  %v116 = vunpack.c.h.b16 %v27
  %v117 = vunpack.c.l.b16 %v28
  %v118 = vunpack.c.h.b16 %v28
  %v119 = vunpack.c.l.b16 %v29
  %v120 = vunpack.c.h.b16 %v29
  %v121 = vunpack.c.l.b16 %v30
  %v122 = vunpack.c.h.b16 %v30
  %v123 = vunpack.c.l.b16 %v31
  %v124 = vunpack.c.h.b16 %v31
  %v125 = vunpack.c.l.b16 %v32
  %v126 = vunpack.c.h.b16 %v32
  %v127 = vunpack.c.l.b16 %v33
  %v128 = vunpack.c.h.b16 %v33
  %v129 = vunpack.c.l.b16 %v34
  %v130 = vunpack.c.h.b16 %v34
  %v131 = vunpack.c.l.b16 %v35
  %v132 = vunpack.c.h.b16 %v35
  %v133 = vunpack.c.l.b16 %v36
  %v134 = vunpack.c.h.b16 %v36
  %v135 = vunpack.c.l.b16 %v37
  %v136 = vunpack.c.h.b16 %v37
  %v137 = vunpack.c.l.b16 %v38
  %v138 = vunpack.c.h.b16 %v38
  %v139 = vunpack.c.l.b16 %v39
  %v140 = vunpack.c.h.b16 %v39
  %v141 = vunpack.c.l.b16 %v40
  %v142 = vunpack.c.h.b16 %v40
  %v143 = vunpack.c.l.b16 %v41
  %v144 = vunpack.c.h.b16 %v41
  %v145 = vunpack.c.l.b16 %v42
  %v146 = vunpack.c.h.b16 %v42
  %v147 = vunpack.c.l.b16 %v43
  %v148 = vunpack.c.h.b16 %v43
  %v149 = vunpack.c.l.b16 %v44
  %v150 = vunpack.c.h.b16 %v44
  %v151 = vunpack.c.l.b16 %v45
  %v152 = vunpack.c.h.b16 %v45
  %v153 = vunpack.c.l.b16 %v46
  %v154 = vunpack.c.h.b16 %v46
  %v155 = vunpack.c.l.b16 %v47
  %v156 = vunpack.c.h.b16 %v47
  %v157 = vunpack.c.l.b16 %v48
  %v158 = vunpack.c.h.b16 %v48
  %v159 = vunpack.c.l.b16 %v49
  %v160 = vunpack.c.h.b16 %v49
  %v161 = vunpack.c.l.b16 %v50
  %v162 = vunpack.c.h.b16 %v50
  %v163 = vunpack.c.l.b16 %v51
  %v164 = vunpack.c.h.b16 %v51
  %v165 = vunpack.c.l.b16 %v52
  %v166 = vunpack.c.h.b16 %v52
  %v167 = vunpack.c.l.b16 %v53
  %v168 = vunpack.c.h.b16 %v53
  %v169 = vunpack.c.l.b16 %v54
  %v170 = vunpack.c.h.b16 %v54
  %v171 = vunpack.c.l.b16 %v55
  %v172 = vunpack.c.h.b16 %v55
  %v173 = vunpack.c.l.b16 %v56
  %v174 = vunpack.c.h.b16 %v56
  %v175 = vpack.c.b16 %v113, %v111
  %v176 = vpack.c.b16 %v114, %v112
  %v177 = vpack.c.b16 %v117, %v115
  %v178 = vpack.c.b16 %v118, %v116
  %v179 = vpack.c.b16 %v121, %v119
  %v180 = vpack.c.b16 %v122, %v120
  %v181 = vpack.c.b16 %v125, %v123
  %v182 = vpack.c.b16 %v126, %v124
  %v183 = vpack.c.b16 %v129, %v127
  %v184 = vpack.c.b16 %v130, %v128
  %v185 = vpack.c.b16 %v133, %v131
  %v186 = vpack.c.b16 %v134, %v132
  %v187 = vpack.c.b16 %v137, %v135
  %v188 = vpack.c.b16 %v138, %v136
  %v189 = vpack.c.b16 %v141, %v139
  %v190 = vpack.c.b16 %v142, %v140
  %v191 = vpack.c.b16 %v145, %v143
  %v192 = vpack.c.b16 %v146, %v144
  %v193 = vpack.c.b16 %v149, %v147
  %v194 = vpack.c.b16 %v150, %v148
  %v195 = vpack.c.b16 %v153, %v151
  %v196 = vpack.c.b16 %v154, %v152
  %v197 = vpack.c.b16 %v157, %v155
  %v198 = vpack.c.b16 %v158, %v156
  %v199 = vpack.c.b16 %v161, %v159
  %v200 = vpack.c.b16 %v162, %v160
  %v201 = vpack.c.b16 %v165, %v163
  %v202 = vpack.c.b16 %v166, %v164
  %v203 = vpack.c.b16 %v169, %v167
  %v204 = vpack.c.b16 %v170, %v168
  %v205 = vpack.c.b16 %v173, %v171
  %v206 = vpack.c.b16 %v174, %v172
  %239 = vmatprep.subr.bf16.mxu0 %v176
  %240 = vmatpush1.bf16.msra.mxu0 %v175
  %241 = vmatprep.subr.bf16.mxu0 %v178
  %242 = vmatpush1.bf16.msra.mxu0 %v177
  %243 = vmatprep.subr.bf16.mxu0 %v180
  %244 = vmatpush1.bf16.msra.mxu0 %v179
  %245 = vmatprep.subr.bf16.mxu0 %v182
  %246 = vmatpush1.bf16.msra.mxu0 %v181
  %247 = vmatprep.subr.bf16.mxu0 %v184
  %248 = vmatpush1.bf16.msra.mxu0 %v183
  %249 = vmatprep.subr.bf16.mxu0 %v186
  %250 = vmatpush1.bf16.msra.mxu0 %v185
  %251 = vmatprep.subr.bf16.mxu0 %v188
  %252 = vmatpush1.bf16.msra.mxu0 %v187
  %253 = vmatprep.subr.bf16.mxu0 %v190
  %254 = vmatpush1.bf16.msra.mxu0 %v189
  %255 = vmatprep.subr.bf16.mxu0 %v192
  %256 = vmatpush1.bf16.msra.mxu0 %v191
  %257 = vmatprep.subr.bf16.mxu0 %v194
  %258 = vmatpush1.bf16.msra.mxu0 %v193
  %259 = vmatprep.subr.bf16.mxu0 %v196
  %260 = vmatpush1.bf16.msra.mxu0 %v195
  %261 = vmatprep.subr.bf16.mxu0 %v198
  %262 = vmatpush1.bf16.msra.mxu0 %v197
  %263 = vmatprep.subr.bf16.mxu0 %v200
  %264 = vmatpush1.bf16.msra.mxu0 %v199
  %265 = vmatprep.subr.bf16.mxu0 %v202
  %266 = vmatpush1.bf16.msra.mxu0 %v201
  %267 = vmatprep.subr.bf16.mxu0 %v204
  %268 = vmatpush1.bf16.msra.mxu0 %v203
  %269 = vmatprep.subr.bf16.mxu0 %v206
  %270 = vmatpush1.bf16.msra.mxu0 %v205
  %271 = vmatprep.mubr.bf16.mxu0 %v76
  %272 = vmatmul.mubr.bf16.gmra.mrb[0].mxu0 %v75
  %v273 = vpop.f32.mrb[0].mxu0
  %v274 = vadd.f32 %v62, %v273
  %v275 = vpop.f32.mrb[0].mxu0
  %v276 = vadd.f32 %v66, %v275
  %v277 = vpop.f32.mrb[0].mxu0
  %v278 = vadd.f32 %v62, %v277
  %v279 = vpop.f32.mrb[0].mxu0
  %v280 = vadd.f32 %v66, %v279
  %281 = vdwg.mxu0
  %v282 = vld [vmem:[%s3] sm:$0xff]
  %v283 = vld [vmem:[%s3 + $0x8] sm:$0xff]
  %v284 = vld [vmem:[%s3 + $0x10] sm:$0xff]
  %v285 = vld [vmem:[%s3 + $0x18] sm:$0xff]
  %v286 = vadd.f32 %v274, %v282
  %v287 = vadd.f32 %v276, %v283
  %v288 = vadd.f32 %v278, %v284
  %v289 = vadd.f32 %v280, %v285
  %v290 = vadd.f32 %v286, %v287
  %291 = vadd.xlane.f32.xlu0 %v290
  %v292 = vpop.xlane.xlu0 %291
  %v293 = vadd.f32 %v288, %v289
  %294 = vadd.xlane.f32.xlu0 %v293
  %v295 = vpop.xlane.xlu0 %294
  %v296 = vrcp.pop 256.0
  %v297 = vmul.f32 %v292, %v296
  %v298 = vmul.f32 %v295, %v296
  %v299 = vsub.f32 %v286, %v297
  %v300 = vsub.f32 %v287, %v297
  %v301 = vsub.f32 %v288, %v298
  %v302 = vsub.f32 %v289, %v298
  %v303 = vmul.f32 %v299, %v299
  %v304 = vmul.f32 %v300, %v300
  %v305 = vmul.f32 %v301, %v301
  %v306 = vmul.f32 %v302, %v302
  %v307 = vadd.f32 %v303, %v304
  %308 = vadd.xlane.f32.xlu0 %v307
  %v309 = vpop.xlane.xlu0 %308
  %v310 = vadd.f32 %v305, %v306
  %311 = vadd.xlane.f32.xlu0 %v310
  %v312 = vpop.xlane.xlu0 %311
  %v313 = vmul.f32 %v309, %v296
  %v314 = vmul.f32 %v312, %v296
  %v315 = vadd.f32 %v313, 1e-05
  %v316 = vadd.f32 %v314, 1e-05
  %v317 = vrsqrt.pop %v315
  %v318 = vrsqrt.pop %v316
  %v319 = vmul.f32 %v299, %v317
  %v320 = vmul.f32 %v300, %v317
  %v321 = vmul.f32 %v301, %v318
  %v322 = vmul.f32 %v302, %v318
  %v323 = vld [vmem:[%s4] sm:$0x3]
  %v325 = vlaneseq
  %v326 = vshrl.u32 %v325, 7
  %v327 = vsub.s32 0, %v326
  %v328 = vrot.slane %v323, %v327
  %v329 = vlaneseq
  %v330 = vshrl.u32 %v329, 7
  %v331 = vsub.s32 1, %v330
  %v332 = vrot.slane %v323, %v331
  %v335 = vmul.f32 %v319, %v328
  %v336 = vmul.f32 %v320, %v332
  %v337 = vmul.f32 %v321, %v328
  %v338 = vmul.f32 %v322, %v332
  %v339 = vld [vmem:[%s5] sm:$0x3]
  %v341 = vlaneseq
  %v342 = vshrl.u32 %v341, 7
  %v343 = vsub.s32 0, %v342
  %v344 = vrot.slane %v339, %v343
  %v345 = vlaneseq
  %v346 = vshrl.u32 %v345, 7
  %v347 = vsub.s32 1, %v346
  %v348 = vrot.slane %v339, %v347
  %v351 = vadd.f32 %v335, %v344
  %v352 = vadd.f32 %v336, %v348
  %v353 = vadd.f32 %v337, %v344
  %v354 = vadd.f32 %v338, %v348
  %355 = vst [vmem:[%s6] sm:$0xff] %v351
  %356 = vst [vmem:[%s6 + $0x8] sm:$0xff] %v352
  %357 = vst [vmem:[%s6 + $0x10] sm:$0xff] %v353
  %358 = vst [vmem:[%s6 + $0x18] sm:$0xff] %v354
  // Predicated region
  $region26: #{transformer_forward.37} parent=0 // pred_check
    _
  $region27: #{transformer_forward.37} parent=0 // pred_check_branch
    %360 = sbr.rel (0) target = $region29
  $region28: #{transformer_forward.37} parent=0 // pred_region
    _
  $region29: #{transformer_forward.37} parent=0 // pred_fallthru
    _
  // Predicated region
  $region30: #{transformer_forward.37} parent=0 // pred_check
    _
  $region31: #{transformer_forward.37} parent=0 // pred_check_branch
    %362 = sbr.rel (0) target = $region33
  $region32: #{transformer_forward.37} parent=0 // pred_region
    _
  $region33: #{transformer_forward.37} parent=0 // pred_fallthru
    _

// kernel: transformer_forward.38
$region0: #{transformer_forward.38}
  #allocation0 [shape = 'u32[]', space=smem, size = 0x4, offset = 0x4, fixed_abs, tag = 'smem constant byte address 0x4 - core index']
  #allocation1 [shape = 'u32[144,128]{1,0:T(1,128)}', space=vmem, size = 0x12000, scoped, tag = 'internal scratch']
  %s0 = inlined_call_operand.vmem [shape: f32[16,256], index: 0, kind: input, shape index: {}]
  %s1 = inlined_call_operand.vmem [shape: bf16[256,256], index: 1, kind: input, shape index: {}]
  %s2 = inlined_call_operand.vmem [shape: f32[1,256], index: 2, kind: input, shape index: {}]
  %s3 = inlined_call_operand.vmem [shape: bf16[16,256], index: 3, kind: output, shape index: {}]
  %s4 = sld [smem:[#allocation0]]
  $region22: #{transformer_forward.38} parent=0
    _
  %s6 = ssub.s32 1, %s4
  %s7 = scalar_select 0, %s6, %s4
  // Predicated region
  $region2: #{transformer_forward.38} parent=0 // pred_check
    _
  $region3: #{transformer_forward.38} parent=0 // pred_check_branch
    %9 = sbr.rel (0) target = $region5
  $region4: #{transformer_forward.38} parent=0 // pred_region
    _
  $region5: #{transformer_forward.38} parent=0 // pred_fallthru
    _
  // Predicated region
  $region6: #{transformer_forward.38} parent=0 // pred_check
    _
  $region7: #{transformer_forward.38} parent=0 // pred_check_branch
    %11 = sbr.rel (0) target = $region9
  $region8: #{transformer_forward.38} parent=0 // pred_region
    _
  $region9: #{transformer_forward.38} parent=0 // pred_fallthru
    _
  // Predicated region
  $region10: #{transformer_forward.38} parent=0 // pred_check
    _
  $region11: #{transformer_forward.38} parent=0 // pred_check_branch
    %13 = sbr.rel (0) target = $region13
  $region12: #{transformer_forward.38} parent=0 // pred_region
    _
  $region13: #{transformer_forward.38} parent=0 // pred_fallthru
    _
  %v14 = vld [vmem:[%s0] sm:$0xff]
  %v15 = vld [vmem:[%s0 + $0x8] sm:$0xff]
  %v16 = vld [vmem:[%s0 + $0x10] sm:$0xff]
  %v17 = vld [vmem:[%s0 + $0x18] sm:$0xff]
  %v18 = vpack.c.bf16 %v16, %v14
  %v19 = vpack.c.bf16 %v17, %v15
  %v20 = vld [vmem:[%s1] sm:$0xff]
  %v21 = vld [vmem:[%s1 + $0x8] sm:$0xff]
  %v22 = vld [vmem:[%s1 + $0x10] sm:$0xff]
  %v23 = vld [vmem:[%s1 + $0x18] sm:$0xff]
  %v24 = vld [vmem:[%s1 + $0x20] sm:$0xff]
  %v25 = vld [vmem:[%s1 + $0x28] sm:$0xff]
  %v26 = vld [vmem:[%s1 + $0x30] sm:$0xff]
  %v27 = vld [vmem:[%s1 + $0x38] sm:$0xff]
  %v28 = vld [vmem:[%s1 + $0x40] sm:$0xff]
  %v29 = vld [vmem:[%s1 + $0x48] sm:$0xff]
  %v30 = vld [vmem:[%s1 + $0x50] sm:$0xff]
  %v31 = vld [vmem:[%s1 + $0x58] sm:$0xff]
  %v32 = vld [vmem:[%s1 + $0x60] sm:$0xff]
  %v33 = vld [vmem:[%s1 + $0x68] sm:$0xff]
  %v34 = vld [vmem:[%s1 + $0x70] sm:$0xff]
  %v35 = vld [vmem:[%s1 + $0x78] sm:$0xff]
  %v36 = vld [vmem:[%s1 + $0x80] sm:$0xff]
  %v37 = vld [vmem:[%s1 + $0x88] sm:$0xff]
  %v38 = vld [vmem:[%s1 + $0x90] sm:$0xff]
  %v39 = vld [vmem:[%s1 + $0x98] sm:$0xff]
  %v40 = vld [vmem:[%s1 + $0xa0] sm:$0xff]
  %v41 = vld [vmem:[%s1 + $0xa8] sm:$0xff]
  %v42 = vld [vmem:[%s1 + $0xb0] sm:$0xff]
  %v43 = vld [vmem:[%s1 + $0xb8] sm:$0xff]
  %v44 = vld [vmem:[%s1 + $0xc0] sm:$0xff]
  %v45 = vld [vmem:[%s1 + $0xc8] sm:$0xff]
  %v46 = vld [vmem:[%s1 + $0xd0] sm:$0xff]
  %v47 = vld [vmem:[%s1 + $0xd8] sm:$0xff]
  %v48 = vld [vmem:[%s1 + $0xe0] sm:$0xff]
  %v49 = vld [vmem:[%s1 + $0xe8] sm:$0xff]
  %v50 = vld [vmem:[%s1 + $0xf0] sm:$0xff]
  %v51 = vld [vmem:[%s1 + $0xf8] sm:$0xff]
  %v52 = vld [vmem:[%s2] sm:$0x3]
  %v54 = vlaneseq
  %v55 = vshrl.u32 %v54, 7
  %v56 = vsub.s32 0, %v55
  %v57 = vrot.slane %v52, %v56
  %v58 = vlaneseq
  %v59 = vshrl.u32 %v58, 7
  %v60 = vsub.s32 1, %v59
  %v61 = vrot.slane %v52, %v60
  %v96 = vunpack.c.l.b16 %v20
  %v97 = vunpack.c.h.b16 %v20
  %v98 = vunpack.c.l.b16 %v21
  %v99 = vunpack.c.h.b16 %v21
  %v100 = vunpack.c.l.b16 %v22
  %v101 = vunpack.c.h.b16 %v22
  %v102 = vunpack.c.l.b16 %v23
  %v103 = vunpack.c.h.b16 %v23
  %v104 = vunpack.c.l.b16 %v24
  %v105 = vunpack.c.h.b16 %v24
  %v106 = vunpack.c.l.b16 %v25
  %v107 = vunpack.c.h.b16 %v25
  %v108 = vunpack.c.l.b16 %v26
  %v109 = vunpack.c.h.b16 %v26
  %v110 = vunpack.c.l.b16 %v27
  %v111 = vunpack.c.h.b16 %v27
  %v112 = vunpack.c.l.b16 %v28
  %v113 = vunpack.c.h.b16 %v28
  %v114 = vunpack.c.l.b16 %v29
  %v115 = vunpack.c.h.b16 %v29
  %v116 = vunpack.c.l.b16 %v30
  %v117 = vunpack.c.h.b16 %v30
  %v118 = vunpack.c.l.b16 %v31
  %v119 = vunpack.c.h.b16 %v31
  %v120 = vunpack.c.l.b16 %v32
  %v121 = vunpack.c.h.b16 %v32
  %v122 = vunpack.c.l.b16 %v33
  %v123 = vunpack.c.h.b16 %v33
  %v124 = vunpack.c.l.b16 %v34
  %v125 = vunpack.c.h.b16 %v34
  %v126 = vunpack.c.l.b16 %v35
  %v127 = vunpack.c.h.b16 %v35
  %v128 = vunpack.c.l.b16 %v36
  %v129 = vunpack.c.h.b16 %v36
  %v130 = vunpack.c.l.b16 %v37
  %v131 = vunpack.c.h.b16 %v37
  %v132 = vunpack.c.l.b16 %v38
  %v133 = vunpack.c.h.b16 %v38
  %v134 = vunpack.c.l.b16 %v39
  %v135 = vunpack.c.h.b16 %v39
  %v136 = vunpack.c.l.b16 %v40
  %v137 = vunpack.c.h.b16 %v40
  %v138 = vunpack.c.l.b16 %v41
  %v139 = vunpack.c.h.b16 %v41
  %v140 = vunpack.c.l.b16 %v42
  %v141 = vunpack.c.h.b16 %v42
  %v142 = vunpack.c.l.b16 %v43
  %v143 = vunpack.c.h.b16 %v43
  %v144 = vunpack.c.l.b16 %v44
  %v145 = vunpack.c.h.b16 %v44
  %v146 = vunpack.c.l.b16 %v45
  %v147 = vunpack.c.h.b16 %v45
  %v148 = vunpack.c.l.b16 %v46
  %v149 = vunpack.c.h.b16 %v46
  %v150 = vunpack.c.l.b16 %v47
  %v151 = vunpack.c.h.b16 %v47
  %v152 = vunpack.c.l.b16 %v48
  %v153 = vunpack.c.h.b16 %v48
  %v154 = vunpack.c.l.b16 %v49
  %v155 = vunpack.c.h.b16 %v49
  %v156 = vunpack.c.l.b16 %v50
  %v157 = vunpack.c.h.b16 %v50
  %v158 = vunpack.c.l.b16 %v51
  %v159 = vunpack.c.h.b16 %v51
  %v160 = vpack.c.b16 %v98, %v96
  %v161 = vpack.c.b16 %v99, %v97
  %v162 = vpack.c.b16 %v102, %v100
  %v163 = vpack.c.b16 %v103, %v101
  %v164 = vpack.c.b16 %v106, %v104
  %v165 = vpack.c.b16 %v107, %v105
  %v166 = vpack.c.b16 %v110, %v108
  %v167 = vpack.c.b16 %v111, %v109
  %v168 = vpack.c.b16 %v114, %v112
  %v169 = vpack.c.b16 %v115, %v113
  %v170 = vpack.c.b16 %v118, %v116
  %v171 = vpack.c.b16 %v119, %v117
  %v172 = vpack.c.b16 %v122, %v120
  %v173 = vpack.c.b16 %v123, %v121
  %v174 = vpack.c.b16 %v126, %v124
  %v175 = vpack.c.b16 %v127, %v125
  %v176 = vpack.c.b16 %v130, %v128
  %v177 = vpack.c.b16 %v131, %v129
  %v178 = vpack.c.b16 %v134, %v132
  %v179 = vpack.c.b16 %v135, %v133
  %v180 = vpack.c.b16 %v138, %v136
  %v181 = vpack.c.b16 %v139, %v137
  %v182 = vpack.c.b16 %v142, %v140
  %v183 = vpack.c.b16 %v143, %v141
  %v184 = vpack.c.b16 %v146, %v144
  %v185 = vpack.c.b16 %v147, %v145
  %v186 = vpack.c.b16 %v150, %v148
  %v187 = vpack.c.b16 %v151, %v149
  %v188 = vpack.c.b16 %v154, %v152
  %v189 = vpack.c.b16 %v155, %v153
  %v190 = vpack.c.b16 %v158, %v156
  %v191 = vpack.c.b16 %v159, %v157
  %224 = vmatprep.subr.bf16.mxu0 %v161
  %225 = vmatpush1.bf16.msra.mxu0 %v160
  %226 = vmatprep.subr.bf16.mxu0 %v163
  %227 = vmatpush1.bf16.msra.mxu0 %v162
  %228 = vmatprep.subr.bf16.mxu0 %v165
  %229 = vmatpush1.bf16.msra.mxu0 %v164
  %230 = vmatprep.subr.bf16.mxu0 %v167
  %231 = vmatpush1.bf16.msra.mxu0 %v166
  %232 = vmatprep.subr.bf16.mxu0 %v169
  %233 = vmatpush1.bf16.msra.mxu0 %v168
  %234 = vmatprep.subr.bf16.mxu0 %v171
  %235 = vmatpush1.bf16.msra.mxu0 %v170
  %236 = vmatprep.subr.bf16.mxu0 %v173
  %237 = vmatpush1.bf16.msra.mxu0 %v172
  %238 = vmatprep.subr.bf16.mxu0 %v175
  %239 = vmatpush1.bf16.msra.mxu0 %v174
  %240 = vmatprep.subr.bf16.mxu0 %v177
  %241 = vmatpush1.bf16.msra.mxu0 %v176
  %242 = vmatprep.subr.bf16.mxu0 %v179
  %243 = vmatpush1.bf16.msra.mxu0 %v178
  %244 = vmatprep.subr.bf16.mxu0 %v181
  %245 = vmatpush1.bf16.msra.mxu0 %v180
  %246 = vmatprep.subr.bf16.mxu0 %v183
  %247 = vmatpush1.bf16.msra.mxu0 %v182
  %248 = vmatprep.subr.bf16.mxu0 %v185
  %249 = vmatpush1.bf16.msra.mxu0 %v184
  %250 = vmatprep.subr.bf16.mxu0 %v187
  %251 = vmatpush1.bf16.msra.mxu0 %v186
  %252 = vmatprep.subr.bf16.mxu0 %v189
  %253 = vmatpush1.bf16.msra.mxu0 %v188
  %254 = vmatprep.subr.bf16.mxu0 %v191
  %255 = vmatpush1.bf16.msra.mxu0 %v190
  %256 = vmatprep.mubr.bf16.mxu0 %v19
  %257 = vmatmul.mubr.bf16.gmra.mrb[0].mxu0 %v18
  %v258 = vpop.f32.mrb[0].mxu0
  %v259 = vadd.f32 %v57, %v258
  %v260 = vpop.f32.mrb[0].mxu0
  %v261 = vadd.f32 %v61, %v260
  %v262 = vpop.f32.mrb[0].mxu0
  %v263 = vadd.f32 %v57, %v262
  %v264 = vpop.f32.mrb[0].mxu0
  %v265 = vadd.f32 %v61, %v264
  %266 = vdwg.mxu0
  %v267 = vpack.c.bf16 %v263, %v259
  %v268 = vpack.c.bf16 %v265, %v261
  %v271 = vunpack.c.l.b16 %v267
  %v272 = vunpack.c.l.b16 %v268
  %v273 = vunpack.c.h.b16 %v267
  %v274 = vunpack.c.h.b16 %v268
  %v275 = vpack.c.b16 %v272, %v271
  %v276 = vpack.c.b16 %v274, %v273
  %279 = vst [vmem:[%s3] sm:$0xff] %v275
  %280 = vst [vmem:[%s3 + $0x8] sm:$0xff] %v276
  // Predicated region
  $region14: #{transformer_forward.38} parent=0 // pred_check
    _
  $region15: #{transformer_forward.38} parent=0 // pred_check_branch
    %282 = sbr.rel (0) target = $region17
  $region16: #{transformer_forward.38} parent=0 // pred_region
    _
  $region17: #{transformer_forward.38} parent=0 // pred_fallthru
    _
  // Predicated region
  $region18: #{transformer_forward.38} parent=0 // pred_check
    _
  $region19: #{transformer_forward.38} parent=0 // pred_check_branch
    %284 = sbr.rel (0) target = $region21
  $region20: #{transformer_forward.38} parent=0 // pred_region
    _
  $region21: #{transformer_forward.38} parent=0 // pred_fallthru
    _

// kernel: transformer_forward.28
$region0: #{transformer_forward.28}
  #allocation0 [shape = 'u32[]', space=smem, size = 0x4, offset = 0x4, fixed_abs, tag = 'smem constant byte address 0x4 - core index']
  #allocation1 [shape = 'u32[144,128]{1,0:T(1,128)}', space=vmem, size = 0x12000, scoped, tag = 'internal scratch']
  %s0 = inlined_call_operand.vmem [shape: bf16[2,8,768], index: 0, kind: input, shape index: {}, may-alias: {0,1,2}]
  %s1 = inlined_call_operand.vmem [shape: bf16[2,8,768], index: 1, kind: input, shape index: {}, may-alias: {0,1,2}]
  %s2 = inlined_call_operand.vmem [shape: bf16[2,8,768], index: 2, kind: input, shape index: {}, may-alias: {0,1,2}]
  %s3 = inlined_call_operand.vmem [shape: bf16[2,8,256], index: 3, kind: output, shape index: {}]
  %s4 = sld [smem:[#allocation0]]
  $region45: #{transformer_forward.28} parent=0
    _
  %s6 = ssub.s32 1, %s4
  %s7 = scalar_select 0, %s6, %s4
  loop: start=0, step=1, limit=6
  $region2: #{transformer_forward.28} parent=0 // loop_pre_header
    _
  $region3: #{transformer_forward.28} parent=0 // loop_header
    %s9 = sphi 0, %s13
    %p10 = scmp.ge.s32.totalorder %s9, 6
    %s16 = sphi 0, %s28
    %s17 = sphi 0, %s24
    %s18 = sphi 0, %s16
    %s19 = sphi 0, %s17
    %s20 = sphi 0, %s18
    %s21 = sphi 0, %s19
    %s33 = sphi 0, %s35
    %s36 = sphi 0, %s33
    %s37 = sphi 0, %s36
    %s53 = sphi 0, %s37
    %s63 = sphi 0, %s65
    %s66 = sphi 0, %s63
    %s67 = sphi 0, %s66
    %s83 = sphi 0, %s67
    %s93 = sphi 0, %s95
    %s96 = sphi 0, %s93
    %s97 = sphi 0, %s96
    %s113 = sphi 0, %s97
    %s121 = sphi 0, %s123
    %s124 = sphi 0, %s121
    %s125 = sphi 0, %s124
    %s141 = sphi 0, %s125
  $region4: #{transformer_forward.28} parent=0 // loop_header_branch
    %12 = sbr.rel (%p10) target = $region8
  $region5: #{transformer_forward.28} parent=0 // loop_body
    %s14 = ssub.s32 %s9, 1
    %s15 = ssub.s32 %s9, 2
    %s22 = sadd.s32 1, %s17
    %p23 = scmp.ge.s32.totalorder %s22, 2
    %s24 = scalar_select %p23, 0, %s22
    %s25 = sadd.s32 1, %s16
    %s26 = scalar_select %p23, %s25, %s16
    %p27 = scmp.ge.s32.totalorder %s26, 2
    %s28 = scalar_select %p27, 0, %s26
    %s29 = ssub.s32 %s16, %s28
    %s30 = ssub.s32 %s17, %s24
    %s31 = sor.u32 %s29, %s30
    %p32 = scmp.eq.s32.totalorder %s31, 0
    %s34 = sadd.s32 %s33, 1
    %s35 = scalar_select %p32, %s33, %s34
    %p38 = pneg %p32
    %p39 = scmp.eq.s32.totalorder %s9, 3
    %p40 = por %p38, %p39
    %p41 = scmp.ne.s32.totalorder %s33, %s36
    %p42 = scmp.eq.s32.totalorder %s9, 0
    %p43 = por %p41, %p42
    %p44 = scmp.ne.s32.totalorder %s33, %s36
    %p45 = scmp.eq.s32.totalorder %s14, 3
    %p46 = por %p44, %p45
    %p47 = scmp.ne.s32.totalorder %s36, %s37
    %p48 = scmp.eq.s32.totalorder %s14, 0
    %p49 = por %p47, %p48
    %p50 = scmp.ne.s32.totalorder %s36, %s37
    %p51 = scmp.eq.s32.totalorder %s15, 3
    %p52 = por %p50, %p51
    %p54 = scmp.ne.s32.totalorder %s37, %s53
    %p55 = scmp.eq.s32.totalorder %s15, 0
    %p56 = por %p54, %p55
    %s57 = sadd.s32 %s17, 2
    %s58 = sadd.s32 %s24, 2
    %s59 = ssub.s32 %s16, %s28
    %s60 = ssub.s32 %s57, %s58
    %s61 = sor.u32 %s59, %s60
    %p62 = scmp.eq.s32.totalorder %s61, 0
    %s64 = sadd.s32 %s63, 1
    %s65 = scalar_select %p62, %s63, %s64
    %p68 = pneg %p62
    %p69 = scmp.eq.s32.totalorder %s9, 3
    %p70 = por %p68, %p69
    %p71 = scmp.ne.s32.totalorder %s63, %s66
    %p72 = scmp.eq.s32.totalorder %s9, 0
    %p73 = por %p71, %p72
    %p74 = scmp.ne.s32.totalorder %s63, %s66
    %p75 = scmp.eq.s32.totalorder %s14, 3
    %p76 = por %p74, %p75
    %p77 = scmp.ne.s32.totalorder %s66, %s67
    %p78 = scmp.eq.s32.totalorder %s14, 0
    %p79 = por %p77, %p78
    %p80 = scmp.ne.s32.totalorder %s66, %s67
    %p81 = scmp.eq.s32.totalorder %s15, 3
    %p82 = por %p80, %p81
    %p84 = scmp.ne.s32.totalorder %s67, %s83
    %p85 = scmp.eq.s32.totalorder %s15, 0
    %p86 = por %p84, %p85
    %s87 = sadd.s32 %s17, 4
    %s88 = sadd.s32 %s24, 4
    %s89 = ssub.s32 %s16, %s28
    %s90 = ssub.s32 %s87, %s88
    %s91 = sor.u32 %s89, %s90
    %p92 = scmp.eq.s32.totalorder %s91, 0
    %s94 = sadd.s32 %s93, 1
    %s95 = scalar_select %p92, %s93, %s94
    %p98 = pneg %p92
    %p99 = scmp.eq.s32.totalorder %s9, 3
    %p100 = por %p98, %p99
    %p101 = scmp.ne.s32.totalorder %s93, %s96
    %p102 = scmp.eq.s32.totalorder %s9, 0
    %p103 = por %p101, %p102
    %p104 = scmp.ne.s32.totalorder %s93, %s96
    %p105 = scmp.eq.s32.totalorder %s14, 3
    %p106 = por %p104, %p105
    %p107 = scmp.ne.s32.totalorder %s96, %s97
    %p108 = scmp.eq.s32.totalorder %s14, 0
    %p109 = por %p107, %p108
    %p110 = scmp.ne.s32.totalorder %s96, %s97
    %p111 = scmp.eq.s32.totalorder %s15, 3
    %p112 = por %p110, %p111
    %p114 = scmp.ne.s32.totalorder %s97, %s113
    %p115 = scmp.eq.s32.totalorder %s15, 0
    %p116 = por %p114, %p115
    %s117 = ssub.s32 %s16, %s28
    %s118 = ssub.s32 %s17, %s24
    %s119 = sor.u32 %s117, %s118
    %p120 = scmp.eq.s32.totalorder %s119, 0
    %s122 = sadd.s32 %s121, 1
    %s123 = scalar_select %p120, %s121, %s122
    %p126 = pneg %p120
    %p127 = scmp.eq.s32.totalorder %s9, 3
    %p128 = por %p126, %p127
    %p129 = scmp.ne.s32.totalorder %s121, %s124
    %p130 = scmp.eq.s32.totalorder %s9, 0
    %p131 = por %p129, %p130
    %p132 = scmp.ne.s32.totalorder %s121, %s124
    %p133 = scmp.eq.s32.totalorder %s14, 3
    %p134 = por %p132, %p133
    %p135 = scmp.ne.s32.totalorder %s124, %s125
    %p136 = scmp.eq.s32.totalorder %s14, 0
    %p137 = por %p135, %p136
    %p138 = scmp.ne.s32.totalorder %s124, %s125
    %p139 = scmp.eq.s32.totalorder %s15, 3
    %p140 = por %p138, %p139
    %p142 = scmp.ne.s32.totalorder %s125, %s141
    %p143 = scmp.eq.s32.totalorder %s15, 0
    %p144 = por %p142, %p143
    %p145 = scmp.le.s32.totalorder 1, %s9
    %p146 = scmp.lt.s32.totalorder %s9, 5
    %p147 = pnand %p145, %p146
    %p148 = pneg %p147
    // Predicated region
    $region9: #{transformer_forward.28} parent=5 // pred_check
      _
    $region10: #{transformer_forward.28} parent=5 // pred_check_branch
      %150 = sbr.rel (%p147) target = $region12
    $region11: #{transformer_forward.28} parent=5 // pred_region
      %s151 = ssub.s32 %s9, 1
    $region12: #{transformer_forward.28} parent=5 // pred_fallthru
      _
    %p152 = scmp.lt.s32.totalorder %s9, 4
    // Predicated region
    $region13: #{transformer_forward.28} parent=5 // pred_check
      %p153 = pneg %p152
    $region14: #{transformer_forward.28} parent=5 // pred_check_branch
      %155 = sbr.rel (%p153) target = $region16
    $region15: #{transformer_forward.28} parent=5 // pred_region
      // Predicated region
      $region17: #{transformer_forward.28} parent=15 // pred_check
        %p156 = pneg %p43
      $region18: #{transformer_forward.28} parent=15 // pred_check_branch
        %158 = sbr.rel (%p156) target = $region20
      $region19: #{transformer_forward.28} parent=15 // pred_region
        %p159 = scmp.lt.s32.totalorder %s16, 1
        %s160 = scalar_select %p159, %s16, 1
        %p161 = scmp.lt.s32.totalorder %s17, 5
        %s162 = scalar_select %p161, %s17, 5
        %s163 = smul.addr %s160, 6
        %s164 = sadd.s32 %s162, %s163
        %s165 = smul.addr %s164, 4
        %s166 = scalar_lea.vmem %s0, %s165
      $region20: #{transformer_forward.28} parent=15 // pred_fallthru
        _
      // Predicated region
      $region21: #{transformer_forward.28} parent=15 // pred_check
        %p167 = pneg %p73
      $region22: #{transformer_forward.28} parent=15 // pred_check_branch
        %169 = sbr.rel (%p167) target = $region24
      $region23: #{transformer_forward.28} parent=15 // pred_region
        %s170 = sadd.s32 %s17, 2
        %p171 = scmp.lt.s32.totalorder %s16, 1
        %s172 = scalar_select %p171, %s16, 1
        %p173 = scmp.lt.s32.totalorder %s170, 5
        %s174 = scalar_select %p173, %s170, 5
        %s175 = smul.addr %s172, 6
        %s176 = sadd.s32 %s174, %s175
        %s177 = smul.addr %s176, 4
        %s178 = scalar_lea.vmem %s1, %s177
        %s179 = sadd.s32 %s17, 2
      $region24: #{transformer_forward.28} parent=15 // pred_fallthru
        _
      // Predicated region
      $region25: #{transformer_forward.28} parent=15 // pred_check
        %p180 = pneg %p103
      $region26: #{transformer_forward.28} parent=15 // pred_check_branch
        %182 = sbr.rel (%p180) target = $region28
      $region27: #{transformer_forward.28} parent=15 // pred_region
        %s183 = sadd.s32 %s17, 4
        %p184 = scmp.lt.s32.totalorder %s16, 1
        %s185 = scalar_select %p184, %s16, 1
        %p186 = scmp.lt.s32.totalorder %s183, 5
        %s187 = scalar_select %p186, %s183, 5
        %s188 = smul.addr %s185, 6
        %s189 = sadd.s32 %s187, %s188
        %s190 = smul.addr %s189, 4
        %s191 = scalar_lea.vmem %s2, %s190
        %s192 = sadd.s32 %s17, 4
      $region28: #{transformer_forward.28} parent=15 // pred_fallthru
        _
    $region16: #{transformer_forward.28} parent=5 // pred_fallthru
      _
    %p193 = scmp.le.s32.totalorder 1, %s9
    %p194 = scmp.lt.s32.totalorder %s9, 5
    %p195 = pnand %p193, %p194
    %p196 = pneg %p195
    // Predicated region
    $region29: #{transformer_forward.28} parent=5 // pred_check
      _
    $region30: #{transformer_forward.28} parent=5 // pred_check_branch
      %198 = sbr.rel (%p195) target = $region32
    $region31: #{transformer_forward.28} parent=5 // pred_region
      %s199 = ssub.s32 %s9, 1
      %p200 = scmp.lt.s32.totalorder %s18, 1
      %s201 = scalar_select %p200, %s18, 1
      %p202 = scmp.lt.s32.totalorder %s19, 5
      %s203 = scalar_select %p202, %s19, 5
      %s204 = smul.addr %s201, 6
      %s205 = sadd.s32 %s203, %s204
      %s206 = smul.addr %s205, 4
      %s207 = scalar_lea.vmem %s0, %s206
      %p208 = pneg %p49
      %p209 = pneg %p46
      %s210 = sadd.s32 %s19, 2
      %p211 = scmp.lt.s32.totalorder %s18, 1
      %s212 = scalar_select %p211, %s18, 1
      %p213 = scmp.lt.s32.totalorder %s210, 5
      %s214 = scalar_select %p213, %s210, 5
      %s215 = smul.addr %s212, 6
      %s216 = sadd.s32 %s214, %s215
      %s217 = smul.addr %s216, 4
      %s218 = scalar_lea.vmem %s1, %s217
      %p219 = pneg %p79
      %p220 = pneg %p76
      %s221 = sadd.s32 %s19, 4
      %p222 = scmp.lt.s32.totalorder %s18, 1
      %s223 = scalar_select %p222, %s18, 1
      %p224 = scmp.lt.s32.totalorder %s221, 5
      %s225 = scalar_select %p224, %s221, 5
      %s226 = smul.addr %s223, 6
      %s227 = sadd.s32 %s225, %s226
      %s228 = smul.addr %s227, 4
      %s229 = scalar_lea.vmem %s2, %s228
      %p230 = pneg %p109
      %p231 = pneg %p106
      %p232 = pneg %p137
      %p233 = pneg %p134
      %p234 = scmp.lt.s32.totalorder %s18, 1
      %s235 = scalar_select %p234, %s18, 1
      %p236 = scmp.lt.s32.totalorder %s19, 1
      %s237 = scalar_select %p236, %s19, 1
      %s238 = smul.addr %s235, 2
      %s239 = sadd.s32 %s237, %s238
      %s240 = smul.addr %s239, 4
      %s241 = scalar_lea.vmem %s3, %s240
      %p242 = scmp.lt.s32.totalorder %s18, 1
      %s243 = scalar_select %p242, %s18, 1
      %p244 = scmp.lt.s32.totalorder %s19, 5
      %s245 = scalar_select %p244, %s19, 5
      %s246 = smul.addr %s243, 6
      %s247 = sadd.s32 %s245, %s246
      %s248 = smul.addr %s247, 4
      %s249 = scalar_lea.vmem %s0, %s248
      %s250 = sadd.s32 %s19, 2
      %p251 = scmp.lt.s32.totalorder %s18, 1
      %s252 = scalar_select %p251, %s18, 1
      %p253 = scmp.lt.s32.totalorder %s250, 5
      %s254 = scalar_select %p253, %s250, 5
      %s255 = smul.addr %s252, 6
      %s256 = sadd.s32 %s254, %s255
      %s257 = smul.addr %s256, 4
      %s258 = scalar_lea.vmem %s1, %s257
      %s259 = sadd.s32 %s19, 2
      %s260 = sadd.s32 %s19, 4
      %p261 = scmp.lt.s32.totalorder %s18, 1
      %s262 = scalar_select %p261, %s18, 1
      %p263 = scmp.lt.s32.totalorder %s260, 5
      %s264 = scalar_select %p263, %s260, 5
      %s265 = smul.addr %s262, 6
      %s266 = sadd.s32 %s264, %s265
      %s267 = smul.addr %s266, 4
      %s268 = scalar_lea.vmem %s2, %s267
      %s269 = sadd.s32 %s19, 4
      %p270 = scmp.lt.s32.totalorder %s18, 1
      %s271 = scalar_select %p270, %s18, 1
      %p272 = scmp.lt.s32.totalorder %s19, 1
      %s273 = scalar_select %p272, %s19, 1
      %s274 = smul.addr %s271, 2
      %s275 = sadd.s32 %s273, %s274
      %s276 = smul.addr %s275, 4
      %s277 = scalar_lea.vmem %s3, %s276
      %v279 = vld [vmem:[%s249] sm:$0xf]
      %v280 = vld [vmem:[%s258] sm:$0xf]
      %v281 = vld [vmem:[%s268] sm:$0xf]
      %282 = vmatprep.subr.bf16.mxu0 0
      %283 = vmatpush1.bf16.xpose.msra.mxu0 %v280
      %284 = vmatprep.subr.bf16.mxu0 0
      %285 = vmatpush1.bf16.xpose.msra.mxu0 0
      %286 = vmatprep.subr.bf16.mxu0 0
      %287 = vmatpush1.bf16.xpose.msra.mxu0 0
      %288 = vmatprep.subr.bf16.mxu0 0
      %289 = vmatpush1.bf16.xpose.msra.mxu0 0
      %290 = vmatprep.subr.bf16.mxu0 0
      %291 = vmatpush1.bf16.xpose.msra.mxu0 0
      %292 = vmatprep.subr.bf16.mxu0 0
      %293 = vmatpush1.bf16.xpose.msra.mxu0 0
      %294 = vmatprep.subr.bf16.mxu0 0
      %295 = vmatpush1.bf16.xpose.msra.mxu0 0
      %296 = vmatprep.subr.bf16.mxu0 0
      %297 = vmatpush1.bf16.xpose.msra.mxu0 0
      %298 = vmatprep.subr.bf16.mxu0 0
      %299 = vmatpush1.bf16.xpose.msra.mxu0 0
      %300 = vmatprep.subr.bf16.mxu0 0
      %301 = vmatpush1.bf16.xpose.msra.mxu0 0
      %302 = vmatprep.subr.bf16.mxu0 0
      %303 = vmatpush1.bf16.xpose.msra.mxu0 0
      %304 = vmatprep.subr.bf16.mxu0 0
      %305 = vmatpush1.bf16.xpose.msra.mxu0 0
      %306 = vmatprep.subr.bf16.mxu0 0
      %307 = vmatpush1.bf16.xpose.msra.mxu0 0
      %308 = vmatprep.subr.bf16.mxu0 0
      %309 = vmatpush1.bf16.xpose.msra.mxu0 0
      %310 = vmatprep.subr.bf16.mxu0 0
      %311 = vmatpush1.bf16.xpose.msra.mxu0 0
      %312 = vmatprep.subr.bf16.mxu0 0
      %313 = vmatpush1.bf16.xpose.msra.mxu0 0
      %314 = vmatprep.mubr.bf16.mxu0 0
      %315 = vmatmul.mubr.bf16.gmra.mrb[0].mxu0 %v279
      %v316 = vpop.f32.mrb[0].mxu0
      %v317 = vadd.f32 0.0, %v316
      %v318 = vpop.f32.mrb[0].mxu0
      %v319 = vpop.f32.mrb[0].mxu0
      %v320 = vpop.f32.mrb[0].mxu0
      %321 = vdwg.mxu0
      %vm322 = vcmask 64512
      %v323 = vsel %vm322, %v317, -inf
      %324 = vmax.xlane.f32.xlu0 %v323
      %v325 = vpop.xlane.xlu0 %324
      %v326 = vsub.f32 %v317, %v325
      %v327 = vmul.f32 %v326, 1.442695
      %v328 = vpow.pop %v327
      %v329 = vsel %vm322, %v328, 0.0
      %330 = vadd.xlane.f32.xlu0 %v329
      %v331 = vpop.xlane.xlu0 %330
      %v332 = vpack.c.bf16 %v328, %v328
      %v334 = vsel %vm322, %v332, 0
      %vm336 = vcmask 1043456
      %v338 = vsel %vm336, %v281, 0
      %340 = vmatprep.subr.bf16.mxu0 0
      %341 = vmatpush1.bf16.msra.mxu0 %v338
      %342 = vmatprep.subr.bf16.mxu0 0
      %343 = vmatpush1.bf16.msra.mxu0 0
      %344 = vmatprep.subr.bf16.mxu0 0
      %345 = vmatpush1.bf16.msra.mxu0 0
      %346 = vmatprep.subr.bf16.mxu0 0
      %347 = vmatpush1.bf16.msra.mxu0 0
      %348 = vmatprep.subr.bf16.mxu0 0
      %349 = vmatpush1.bf16.msra.mxu0 0
      %350 = vmatprep.subr.bf16.mxu0 0
      %351 = vmatpush1.bf16.msra.mxu0 0
      %352 = vmatprep.subr.bf16.mxu0 0
      %353 = vmatpush1.bf16.msra.mxu0 0
      %354 = vmatprep.subr.bf16.mxu0 0
      %355 = vmatpush1.bf16.msra.mxu0 0
      %356 = vmatprep.subr.bf16.mxu0 0
      %357 = vmatpush1.bf16.msra.mxu0 0
      %358 = vmatprep.subr.bf16.mxu0 0
      %359 = vmatpush1.bf16.msra.mxu0 0
      %360 = vmatprep.subr.bf16.mxu0 0
      %361 = vmatpush1.bf16.msra.mxu0 0
      %362 = vmatprep.subr.bf16.mxu0 0
      %363 = vmatpush1.bf16.msra.mxu0 0
      %364 = vmatprep.subr.bf16.mxu0 0
      %365 = vmatpush1.bf16.msra.mxu0 0
      %366 = vmatprep.subr.bf16.mxu0 0
      %367 = vmatpush1.bf16.msra.mxu0 0
      %368 = vmatprep.subr.bf16.mxu0 0
      %369 = vmatpush1.bf16.msra.mxu0 0
      %370 = vmatprep.subr.bf16.mxu0 0
      %371 = vmatpush1.bf16.msra.mxu0 0
      %372 = vmatprep.mubr.bf16.mxu0 0
      %373 = vmatmul.mubr.bf16.gmra.mrb[0].mxu0 %v334
      %v374 = vpop.f32.mrb[0].mxu0
      %v375 = vadd.f32 0.0, %v374
      %v376 = vpop.f32.mrb[0].mxu0
      %v377 = vpop.f32.mrb[0].mxu0
      %v378 = vpop.f32.mrb[0].mxu0
      %379 = vdwg.mxu0
      %v380 = vrcp.pop %v331
      %v381 = vmul.f32 %v375, %v380
      %v382 = vpack.c.bf16 %v381, %v381
      %383 = vst [vmem:[%s277] sm:$0xf] %v382
      %p384 = scmp.lt.s32.totalorder %s18, 1
      %s385 = scalar_select %p384, %s18, 1
      %p386 = scmp.lt.s32.totalorder %s19, 1
      %s387 = scalar_select %p386, %s19, 1
      %s388 = smul.addr %s385, 2
      %s389 = sadd.s32 %s387, %s388
      %s390 = smul.addr %s389, 4
      %s391 = scalar_lea.vmem %s3, %s390
      // Predicated region
      $region33: #{transformer_forward.28} parent=31 // pred_check
        %p392 = pneg %p134
      $region34: #{transformer_forward.28} parent=31 // pred_check_branch
        %394 = sbr.rel (%p392) target = $region36
      $region35: #{transformer_forward.28} parent=31 // pred_region
        _
      $region36: #{transformer_forward.28} parent=31 // pred_fallthru
        _
    $region32: #{transformer_forward.28} parent=5 // pred_fallthru
      _
    %p395 = scmp.le.s32.totalorder 2, %s9
    // Predicated region
    $region37: #{transformer_forward.28} parent=5 // pred_check
      %p396 = pneg %p395
    $region38: #{transformer_forward.28} parent=5 // pred_check_branch
      %398 = sbr.rel (%p396) target = $region40
    $region39: #{transformer_forward.28} parent=5 // pred_region
      %s399 = ssub.s32 %s9, 2
      // Predicated region
      $region41: #{transformer_forward.28} parent=39 // pred_check
        %p400 = pneg %p140
      $region42: #{transformer_forward.28} parent=39 // pred_check_branch
        %402 = sbr.rel (%p400) target = $region44
      $region43: #{transformer_forward.28} parent=39 // pred_region
        %p403 = scmp.lt.s32.totalorder %s20, 1
        %s404 = scalar_select %p403, %s20, 1
        %p405 = scmp.lt.s32.totalorder %s21, 1
        %s406 = scalar_select %p405, %s21, 1
        %s407 = smul.addr %s404, 2
        %s408 = sadd.s32 %s406, %s407
        %s409 = smul.addr %s408, 4
        %s410 = scalar_lea.vmem %s3, %s409
      $region44: #{transformer_forward.28} parent=39 // pred_fallthru
        _
    $region40: #{transformer_forward.28} parent=5 // pred_fallthru
      _
  $region6: #{transformer_forward.28} parent=0 // loop_footer
    %s13 = sadd.s32 1, %s9
  $region7: #{transformer_forward.28} parent=0 // loop_footer_branch
    %8 = sbr.rel target = $region3
  $region8: #{transformer_forward.28} parent=0 // loop_exit
    _

// kernel: transformer_forward.27
$region0: #{transformer_forward.27}
  #allocation0 [shape = 'u32[]', space=smem, size = 0x4, offset = 0x4, fixed_abs, tag = 'smem constant byte address 0x4 - core index']
  #allocation1 [shape = 'u32[144,128]{1,0:T(1,128)}', space=vmem, size = 0x12000, scoped, tag = 'internal scratch']
  %s0 = inlined_call_operand.vmem [shape: f32[16,256], index: 0, kind: input, shape index: {}]
  %s1 = inlined_call_operand.vmem [shape: bf16[256,768], index: 1, kind: input, shape index: {}]
  %s2 = inlined_call_operand.vmem [shape: f32[1,768], index: 2, kind: input, shape index: {}]
  %s3 = inlined_call_operand.vmem [shape: bf16[16,768], index: 3, kind: output, shape index: {}]
  %s4 = sld [smem:[#allocation0]]
  $region22: #{transformer_forward.27} parent=0
    _
  %s6 = ssub.s32 1, %s4
  %s7 = scalar_select 0, %s6, %s4
  // Predicated region
  $region2: #{transformer_forward.27} parent=0 // pred_check
    _
  $region3: #{transformer_forward.27} parent=0 // pred_check_branch
    %9 = sbr.rel (0) target = $region5
  $region4: #{transformer_forward.27} parent=0 // pred_region
    _
  $region5: #{transformer_forward.27} parent=0 // pred_fallthru
    _
  // Predicated region
  $region6: #{transformer_forward.27} parent=0 // pred_check
    _
  $region7: #{transformer_forward.27} parent=0 // pred_check_branch
    %11 = sbr.rel (0) target = $region9
  $region8: #{transformer_forward.27} parent=0 // pred_region
    _
  $region9: #{transformer_forward.27} parent=0 // pred_fallthru
    _
  // Predicated region
  $region10: #{transformer_forward.27} parent=0 // pred_check
    _
  $region11: #{transformer_forward.27} parent=0 // pred_check_branch
    %13 = sbr.rel (0) target = $region13
  $region12: #{transformer_forward.27} parent=0 // pred_region
    _
  $region13: #{transformer_forward.27} parent=0 // pred_fallthru
    _
  %v14 = vld [vmem:[%s0] sm:$0xff]
  %v15 = vld [vmem:[%s0 + $0x8] sm:$0xff]
  %v16 = vld [vmem:[%s0 + $0x10] sm:$0xff]
  %v17 = vld [vmem:[%s0 + $0x18] sm:$0xff]
  %v18 = vpack.c.bf16 %v16, %v14
  %v19 = vpack.c.bf16 %v17, %v15
  %v20 = vld [vmem:[%s1] sm:$0xff]
  %v21 = vld [vmem:[%s1 + $0x8] sm:$0xff]
  %v22 = vld [vmem:[%s1 + $0x10] sm:$0xff]
  %v23 = vld [vmem:[%s1 + $0x18] sm:$0xff]
  %v24 = vld [vmem:[%s1 + $0x20] sm:$0xff]
  %v25 = vld [vmem:[%s1 + $0x28] sm:$0xff]
  %v26 = vld [vmem:[%s1 + $0x30] sm:$0xff]
  %v27 = vld [vmem:[%s1 + $0x38] sm:$0xff]
  %v28 = vld [vmem:[%s1 + $0x40] sm:$0xff]
  %v29 = vld [vmem:[%s1 + $0x48] sm:$0xff]
  %v30 = vld [vmem:[%s1 + $0x50] sm:$0xff]
  %v31 = vld [vmem:[%s1 + $0x58] sm:$0xff]
  %v32 = vld [vmem:[%s1 + $0x60] sm:$0xff]
  %v33 = vld [vmem:[%s1 + $0x68] sm:$0xff]
  %v34 = vld [vmem:[%s1 + $0x70] sm:$0xff]
  %v35 = vld [vmem:[%s1 + $0x78] sm:$0xff]
  %v36 = vld [vmem:[%s1 + $0x80] sm:$0xff]
  %v37 = vld [vmem:[%s1 + $0x88] sm:$0xff]
  %v38 = vld [vmem:[%s1 + $0x90] sm:$0xff]
  %v39 = vld [vmem:[%s1 + $0x98] sm:$0xff]
  %v40 = vld [vmem:[%s1 + $0xa0] sm:$0xff]
  %v41 = vld [vmem:[%s1 + $0xa8] sm:$0xff]
  %v42 = vld [vmem:[%s1 + $0xb0] sm:$0xff]
  %v43 = vld [vmem:[%s1 + $0xb8] sm:$0xff]
  %v44 = vld [vmem:[%s1 + $0xc0] sm:$0xff]
  %v45 = vld [vmem:[%s1 + $0xc8] sm:$0xff]
  %v46 = vld [vmem:[%s1 + $0xd0] sm:$0xff]
  %v47 = vld [vmem:[%s1 + $0xd8] sm:$0xff]
  %v48 = vld [vmem:[%s1 + $0xe0] sm:$0xff]
  %v49 = vld [vmem:[%s1 + $0xe8] sm:$0xff]
  %v50 = vld [vmem:[%s1 + $0xf0] sm:$0xff]
  %v51 = vld [vmem:[%s1 + $0xf8] sm:$0xff]
  %v52 = vld [vmem:[%s1 + $0x100] sm:$0xff]
  %v53 = vld [vmem:[%s1 + $0x108] sm:$0xff]
  %v54 = vld [vmem:[%s1 + $0x110] sm:$0xff]
  %v55 = vld [vmem:[%s1 + $0x118] sm:$0xff]
  %v56 = vld [vmem:[%s1 + $0x120] sm:$0xff]
  %v57 = vld [vmem:[%s1 + $0x128] sm:$0xff]
  %v58 = vld [vmem:[%s1 + $0x130] sm:$0xff]
  %v59 = vld [vmem:[%s1 + $0x138] sm:$0xff]
  %v60 = vld [vmem:[%s1 + $0x140] sm:$0xff]
  %v61 = vld [vmem:[%s1 + $0x148] sm:$0xff]
  %v62 = vld [vmem:[%s1 + $0x150] sm:$0xff]
  %v63 = vld [vmem:[%s1 + $0x158] sm:$0xff]
  %v64 = vld [vmem:[%s1 + $0x160] sm:$0xff]
  %v65 = vld [vmem:[%s1 + $0x168] sm:$0xff]
  %v66 = vld [vmem:[%s1 + $0x170] sm:$0xff]
  %v67 = vld [vmem:[%s1 + $0x178] sm:$0xff]
  %v68 = vld [vmem:[%s1 + $0x180] sm:$0xff]
  %v69 = vld [vmem:[%s1 + $0x188] sm:$0xff]
  %v70 = vld [vmem:[%s1 + $0x190] sm:$0xff]
  %v71 = vld [vmem:[%s1 + $0x198] sm:$0xff]
  %v72 = vld [vmem:[%s1 + $0x1a0] sm:$0xff]
  %v73 = vld [vmem:[%s1 + $0x1a8] sm:$0xff]
  %v74 = vld [vmem:[%s1 + $0x1b0] sm:$0xff]
  %v75 = vld [vmem:[%s1 + $0x1b8] sm:$0xff]
  %v76 = vld [vmem:[%s1 + $0x1c0] sm:$0xff]
  %v77 = vld [vmem:[%s1 + $0x1c8] sm:$0xff]
  %v78 = vld [vmem:[%s1 + $0x1d0] sm:$0xff]
  %v79 = vld [vmem:[%s1 + $0x1d8] sm:$0xff]
  %v80 = vld [vmem:[%s1 + $0x1e0] sm:$0xff]
  %v81 = vld [vmem:[%s1 + $0x1e8] sm:$0xff]
  %v82 = vld [vmem:[%s1 + $0x1f0] sm:$0xff]
  %v83 = vld [vmem:[%s1 + $0x1f8] sm:$0xff]
  %v84 = vld [vmem:[%s1 + $0x200] sm:$0xff]
  %v85 = vld [vmem:[%s1 + $0x208] sm:$0xff]
  %v86 = vld [vmem:[%s1 + $0x210] sm:$0xff]
  %v87 = vld [vmem:[%s1 + $0x218] sm:$0xff]
  %v88 = vld [vmem:[%s1 + $0x220] sm:$0xff]
  %v89 = vld [vmem:[%s1 + $0x228] sm:$0xff]
  %v90 = vld [vmem:[%s1 + $0x230] sm:$0xff]
  %v91 = vld [vmem:[%s1 + $0x238] sm:$0xff]
  %v92 = vld [vmem:[%s1 + $0x240] sm:$0xff]
  %v93 = vld [vmem:[%s1 + $0x248] sm:$0xff]
  %v94 = vld [vmem:[%s1 + $0x250] sm:$0xff]
  %v95 = vld [vmem:[%s1 + $0x258] sm:$0xff]
  %v96 = vld [vmem:[%s1 + $0x260] sm:$0xff]
  %v97 = vld [vmem:[%s1 + $0x268] sm:$0xff]
  %v98 = vld [vmem:[%s1 + $0x270] sm:$0xff]
  %v99 = vld [vmem:[%s1 + $0x278] sm:$0xff]
  %v100 = vld [vmem:[%s1 + $0x280] sm:$0xff]
  %v101 = vld [vmem:[%s1 + $0x288] sm:$0xff]
  %v102 = vld [vmem:[%s1 + $0x290] sm:$0xff]
  %v103 = vld [vmem:[%s1 + $0x298] sm:$0xff]
  %v104 = vld [vmem:[%s1 + $0x2a0] sm:$0xff]
  %v105 = vld [vmem:[%s1 + $0x2a8] sm:$0xff]
  %v106 = vld [vmem:[%s1 + $0x2b0] sm:$0xff]
  %v107 = vld [vmem:[%s1 + $0x2b8] sm:$0xff]
  %v108 = vld [vmem:[%s1 + $0x2c0] sm:$0xff]
  %v109 = vld [vmem:[%s1 + $0x2c8] sm:$0xff]
  %v110 = vld [vmem:[%s1 + $0x2d0] sm:$0xff]
  %v111 = vld [vmem:[%s1 + $0x2d8] sm:$0xff]
  %v112 = vld [vmem:[%s1 + $0x2e0] sm:$0xff]
  %v113 = vld [vmem:[%s1 + $0x2e8] sm:$0xff]
  %v114 = vld [vmem:[%s1 + $0x2f0] sm:$0xff]
  %v115 = vld [vmem:[%s1 + $0x2f8] sm:$0xff]
  %v116 = vld [vmem:[%s2] sm:$0x3f]
  %v118 = vlaneseq
  %v119 = vshrl.u32 %v118, 7
  %v120 = vsub.s32 0, %v119
  %v121 = vrot.slane %v116, %v120
  %v122 = vlaneseq
  %v123 = vshrl.u32 %v122, 7
  %v124 = vsub.s32 1, %v123
  %v125 = vrot.slane %v116, %v124
  %v126 = vlaneseq
  %v127 = vshrl.u32 %v126, 7
  %v128 = vsub.s32 2, %v127
  %v129 = vrot.slane %v116, %v128
  %v130 = vlaneseq
  %v131 = vshrl.u32 %v130, 7
  %v132 = vsub.s32 3, %v131
  %v133 = vrot.slane %v116, %v132
  %v134 = vlaneseq
  %v135 = vshrl.u32 %v134, 7
  %v136 = vsub.s32 4, %v135
  %v137 = vrot.slane %v116, %v136
  %v138 = vlaneseq
  %v139 = vshrl.u32 %v138, 7
  %v140 = vsub.s32 5, %v139
  %v141 = vrot.slane %v116, %v140
  %v244 = vunpack.c.l.b16 %v20
  %v245 = vunpack.c.h.b16 %v20
  %v246 = vunpack.c.l.b16 %v21
  %v247 = vunpack.c.h.b16 %v21
  %v248 = vunpack.c.l.b16 %v22
  %v249 = vunpack.c.h.b16 %v22
  %v250 = vunpack.c.l.b16 %v23
  %v251 = vunpack.c.h.b16 %v23
  %v252 = vunpack.c.l.b16 %v24
  %v253 = vunpack.c.h.b16 %v24
  %v254 = vunpack.c.l.b16 %v25
  %v255 = vunpack.c.h.b16 %v25
  %v256 = vunpack.c.l.b16 %v26
  %v257 = vunpack.c.h.b16 %v26
  %v258 = vunpack.c.l.b16 %v27
  %v259 = vunpack.c.h.b16 %v27
  %v260 = vunpack.c.l.b16 %v28
  %v261 = vunpack.c.h.b16 %v28
  %v262 = vunpack.c.l.b16 %v29
  %v263 = vunpack.c.h.b16 %v29
  %v264 = vunpack.c.l.b16 %v30
  %v265 = vunpack.c.h.b16 %v30
  %v266 = vunpack.c.l.b16 %v31
  %v267 = vunpack.c.h.b16 %v31
  %v268 = vunpack.c.l.b16 %v32
  %v269 = vunpack.c.h.b16 %v32
  %v270 = vunpack.c.l.b16 %v33
  %v271 = vunpack.c.h.b16 %v33
  %v272 = vunpack.c.l.b16 %v34
  %v273 = vunpack.c.h.b16 %v34
  %v274 = vunpack.c.l.b16 %v35
  %v275 = vunpack.c.h.b16 %v35
  %v276 = vunpack.c.l.b16 %v36
  %v277 = vunpack.c.h.b16 %v36
  %v278 = vunpack.c.l.b16 %v37
  %v279 = vunpack.c.h.b16 %v37
  %v280 = vunpack.c.l.b16 %v38
  %v281 = vunpack.c.h.b16 %v38
  %v282 = vunpack.c.l.b16 %v39
  %v283 = vunpack.c.h.b16 %v39
  %v284 = vunpack.c.l.b16 %v40
  %v285 = vunpack.c.h.b16 %v40
  %v286 = vunpack.c.l.b16 %v41
  %v287 = vunpack.c.h.b16 %v41
  %v288 = vunpack.c.l.b16 %v42
  %v289 = vunpack.c.h.b16 %v42
  %v290 = vunpack.c.l.b16 %v43
  %v291 = vunpack.c.h.b16 %v43
  %v292 = vunpack.c.l.b16 %v44
  %v293 = vunpack.c.h.b16 %v44
  %v294 = vunpack.c.l.b16 %v45
  %v295 = vunpack.c.h.b16 %v45
  %v296 = vunpack.c.l.b16 %v46
  %v297 = vunpack.c.h.b16 %v46
  %v298 = vunpack.c.l.b16 %v47
  %v299 = vunpack.c.h.b16 %v47
  %v300 = vunpack.c.l.b16 %v48
  %v301 = vunpack.c.h.b16 %v48
  %v302 = vunpack.c.l.b16 %v49
  %v303 = vunpack.c.h.b16 %v49
  %v304 = vunpack.c.l.b16 %v50
  %v305 = vunpack.c.h.b16 %v50
  %v306 = vunpack.c.l.b16 %v51
  %v307 = vunpack.c.h.b16 %v51
  %v308 = vunpack.c.l.b16 %v52
  %v309 = vunpack.c.h.b16 %v52
  %v310 = vunpack.c.l.b16 %v53
  %v311 = vunpack.c.h.b16 %v53
  %v312 = vunpack.c.l.b16 %v54
  %v313 = vunpack.c.h.b16 %v54
  %v314 = vunpack.c.l.b16 %v55
  %v315 = vunpack.c.h.b16 %v55
  %v316 = vunpack.c.l.b16 %v56
  %v317 = vunpack.c.h.b16 %v56
  %v318 = vunpack.c.l.b16 %v57
  %v319 = vunpack.c.h.b16 %v57
  %v320 = vunpack.c.l.b16 %v58
  %v321 = vunpack.c.h.b16 %v58
  %v322 = vunpack.c.l.b16 %v59
  %v323 = vunpack.c.h.b16 %v59
  %v324 = vunpack.c.l.b16 %v60
  %v325 = vunpack.c.h.b16 %v60
  %v326 = vunpack.c.l.b16 %v61
  %v327 = vunpack.c.h.b16 %v61
  %v328 = vunpack.c.l.b16 %v62
  %v329 = vunpack.c.h.b16 %v62
  %v330 = vunpack.c.l.b16 %v63
  %v331 = vunpack.c.h.b16 %v63
  %v332 = vunpack.c.l.b16 %v64
  %v333 = vunpack.c.h.b16 %v64
  %v334 = vunpack.c.l.b16 %v65
  %v335 = vunpack.c.h.b16 %v65
  %v336 = vunpack.c.l.b16 %v66
  %v337 = vunpack.c.h.b16 %v66
  %v338 = vunpack.c.l.b16 %v67
  %v339 = vunpack.c.h.b16 %v67
  %v340 = vunpack.c.l.b16 %v68
  %v341 = vunpack.c.h.b16 %v68
  %v342 = vunpack.c.l.b16 %v69
  %v343 = vunpack.c.h.b16 %v69
  %v344 = vunpack.c.l.b16 %v70
  %v345 = vunpack.c.h.b16 %v70
  %v346 = vunpack.c.l.b16 %v71
  %v347 = vunpack.c.h.b16 %v71
  %v348 = vunpack.c.l.b16 %v72
  %v349 = vunpack.c.h.b16 %v72
  %v350 = vunpack.c.l.b16 %v73
  %v351 = vunpack.c.h.b16 %v73
  %v352 = vunpack.c.l.b16 %v74
  %v353 = vunpack.c.h.b16 %v74
  %v354 = vunpack.c.l.b16 %v75
  %v355 = vunpack.c.h.b16 %v75
  %v356 = vunpack.c.l.b16 %v76
  %v357 = vunpack.c.h.b16 %v76
  %v358 = vunpack.c.l.b16 %v77
  %v359 = vunpack.c.h.b16 %v77
  %v360 = vunpack.c.l.b16 %v78
  %v361 = vunpack.c.h.b16 %v78
  %v362 = vunpack.c.l.b16 %v79
  %v363 = vunpack.c.h.b16 %v79
  %v364 = vunpack.c.l.b16 %v80
  %v365 = vunpack.c.h.b16 %v80
  %v366 = vunpack.c.l.b16 %v81
  %v367 = vunpack.c.h.b16 %v81
  %v368 = vunpack.c.l.b16 %v82
  %v369 = vunpack.c.h.b16 %v82
  %v370 = vunpack.c.l.b16 %v83
  %v371 = vunpack.c.h.b16 %v83
  %v372 = vunpack.c.l.b16 %v84
  %v373 = vunpack.c.h.b16 %v84
  %v374 = vunpack.c.l.b16 %v85
  %v375 = vunpack.c.h.b16 %v85
  %v376 = vunpack.c.l.b16 %v86
  %v377 = vunpack.c.h.b16 %v86
  %v378 = vunpack.c.l.b16 %v87
  %v379 = vunpack.c.h.b16 %v87
  %v380 = vunpack.c.l.b16 %v88
  %v381 = vunpack.c.h.b16 %v88
  %v382 = vunpack.c.l.b16 %v89
  %v383 = vunpack.c.h.b16 %v89
  %v384 = vunpack.c.l.b16 %v90
  %v385 = vunpack.c.h.b16 %v90
  %v386 = vunpack.c.l.b16 %v91
  %v387 = vunpack.c.h.b16 %v91
  %v388 = vunpack.c.l.b16 %v92
  %v389 = vunpack.c.h.b16 %v92
  %v390 = vunpack.c.l.b16 %v93
  %v391 = vunpack.c.h.b16 %v93
  %v392 = vunpack.c.l.b16 %v94
  %v393 = vunpack.c.h.b16 %v94
  %v394 = vunpack.c.l.b16 %v95
  %v395 = vunpack.c.h.b16 %v95
  %v396 = vunpack.c.l.b16 %v96
  %v397 = vunpack.c.h.b16 %v96
  %v398 = vunpack.c.l.b16 %v97
  %v399 = vunpack.c.h.b16 %v97
  %v400 = vunpack.c.l.b16 %v98
  %v401 = vunpack.c.h.b16 %v98
  %v402 = vunpack.c.l.b16 %v99
  %v403 = vunpack.c.h.b16 %v99
  %v404 = vunpack.c.l.b16 %v100
  %v405 = vunpack.c.h.b16 %v100
  %v406 = vunpack.c.l.b16 %v101
  %v407 = vunpack.c.h.b16 %v101
  %v408 = vunpack.c.l.b16 %v102
  %v409 = vunpack.c.h.b16 %v102
  %v410 = vunpack.c.l.b16 %v103
  %v411 = vunpack.c.h.b16 %v103
  %v412 = vunpack.c.l.b16 %v104
  %v413 = vunpack.c.h.b16 %v104
  %v414 = vunpack.c.l.b16 %v105
  %v415 = vunpack.c.h.b16 %v105
  %v416 = vunpack.c.l.b16 %v106
  %v417 = vunpack.c.h.b16 %v106
  %v418 = vunpack.c.l.b16 %v107
  %v419 = vunpack.c.h.b16 %v107
  %v420 = vunpack.c.l.b16 %v108
  %v421 = vunpack.c.h.b16 %v108
  %v422 = vunpack.c.l.b16 %v109
  %v423 = vunpack.c.h.b16 %v109
  %v424 = vunpack.c.l.b16 %v110
  %v425 = vunpack.c.h.b16 %v110
  %v426 = vunpack.c.l.b16 %v111
  %v427 = vunpack.c.h.b16 %v111
  %v428 = vunpack.c.l.b16 %v112
  %v429 = vunpack.c.h.b16 %v112
  %v430 = vunpack.c.l.b16 %v113
  %v431 = vunpack.c.h.b16 %v113
  %v432 = vunpack.c.l.b16 %v114
  %v433 = vunpack.c.h.b16 %v114
  %v434 = vunpack.c.l.b16 %v115
  %v435 = vunpack.c.h.b16 %v115
  %v436 = vpack.c.b16 %v250, %v244
  %v437 = vpack.c.b16 %v251, %v245
  %v438 = vpack.c.b16 %v252, %v246
  %v439 = vpack.c.b16 %v253, %v247
  %v440 = vpack.c.b16 %v254, %v248
  %v441 = vpack.c.b16 %v255, %v249
  %v442 = vpack.c.b16 %v262, %v256
  %v443 = vpack.c.b16 %v263, %v257
  %v444 = vpack.c.b16 %v264, %v258
  %v445 = vpack.c.b16 %v265, %v259
  %v446 = vpack.c.b16 %v266, %v260
  %v447 = vpack.c.b16 %v267, %v261
  %v448 = vpack.c.b16 %v274, %v268
  %v449 = vpack.c.b16 %v275, %v269
  %v450 = vpack.c.b16 %v276, %v270
  %v451 = vpack.c.b16 %v277, %v271
  %v452 = vpack.c.b16 %v278, %v272
  %v453 = vpack.c.b16 %v279, %v273
  %v454 = vpack.c.b16 %v286, %v280
  %v455 = vpack.c.b16 %v287, %v281
  %v456 = vpack.c.b16 %v288, %v282
  %v457 = vpack.c.b16 %v289, %v283
  %v458 = vpack.c.b16 %v290, %v284
  %v459 = vpack.c.b16 %v291, %v285
  %v460 = vpack.c.b16 %v298, %v292
  %v461 = vpack.c.b16 %v299, %v293
  %v462 = vpack.c.b16 %v300, %v294
  %v463 = vpack.c.b16 %v301, %v295
  %v464 = vpack.c.b16 %v302, %v296
  %v465 = vpack.c.b16 %v303, %v297
  %v466 = vpack.c.b16 %v310, %v304
  %v467 = vpack.c.b16 %v311, %v305
  %v468 = vpack.c.b16 %v312, %v306
  %v469 = vpack.c.b16 %v313, %v307
  %v470 = vpack.c.b16 %v314, %v308
  %v471 = vpack.c.b16 %v315, %v309
  %v472 = vpack.c.b16 %v322, %v316
  %v473 = vpack.c.b16 %v323, %v317
  %v474 = vpack.c.b16 %v324, %v318
  %v475 = vpack.c.b16 %v325, %v319
  %v476 = vpack.c.b16 %v326, %v320
  %v477 = vpack.c.b16 %v327, %v321
  %v478 = vpack.c.b16 %v334, %v328
  %v479 = vpack.c.b16 %v335, %v329
  %v480 = vpack.c.b16 %v336, %v330
  %v481 = vpack.c.b16 %v337, %v331
  %v482 = vpack.c.b16 %v338, %v332
  %v483 = vpack.c.b16 %v339, %v333
  %v484 = vpack.c.b16 %v346, %v340
  %v485 = vpack.c.b16 %v347, %v341
  %v486 = vpack.c.b16 %v348, %v342
  %v487 = vpack.c.b16 %v349, %v343
  %v488 = vpack.c.b16 %v350, %v344
  %v489 = vpack.c.b16 %v351, %v345
  %v490 = vpack.c.b16 %v358, %v352
  %v491 = vpack.c.b16 %v359, %v353
  %v492 = vpack.c.b16 %v360, %v354
  %v493 = vpack.c.b16 %v361, %v355
  %v494 = vpack.c.b16 %v362, %v356
  %v495 = vpack.c.b16 %v363, %v357
  %v496 = vpack.c.b16 %v370, %v364
  %v497 = vpack.c.b16 %v371, %v365
  %v498 = vpack.c.b16 %v372, %v366
  %v499 = vpack.c.b16 %v373, %v367
  %v500 = vpack.c.b16 %v374, %v368
  %v501 = vpack.c.b16 %v375, %v369
  %v502 = vpack.c.b16 %v382, %v376
  %v503 = vpack.c.b16 %v383, %v377
  %v504 = vpack.c.b16 %v384, %v378
  %v505 = vpack.c.b16 %v385, %v379
  %v506 = vpack.c.b16 %v386, %v380
  %v507 = vpack.c.b16 %v387, %v381
  %v508 = vpack.c.b16 %v394, %v388
  %v509 = vpack.c.b16 %v395, %v389
  %v510 = vpack.c.b16 %v396, %v390
  %v511 = vpack.c.b16 %v397, %v391
  %v512 = vpack.c.b16 %v398, %v392
  %v513 = vpack.c.b16 %v399, %v393
  %v514 = vpack.c.b16 %v406, %v400
  %v515 = vpack.c.b16 %v407, %v401
  %v516 = vpack.c.b16 %v408, %v402
  %v517 = vpack.c.b16 %v409, %v403
  %v518 = vpack.c.b16 %v410, %v404
  %v519 = vpack.c.b16 %v411, %v405
  %v520 = vpack.c.b16 %v418, %v412
  %v521 = vpack.c.b16 %v419, %v413
  %v522 = vpack.c.b16 %v420, %v414
  %v523 = vpack.c.b16 %v421, %v415
  %v524 = vpack.c.b16 %v422, %v416
  %v525 = vpack.c.b16 %v423, %v417
  %v526 = vpack.c.b16 %v430, %v424
  %v527 = vpack.c.b16 %v431, %v425
  %v528 = vpack.c.b16 %v432, %v426
  %v529 = vpack.c.b16 %v433, %v427
  %v530 = vpack.c.b16 %v434, %v428
  %v531 = vpack.c.b16 %v435, %v429
  %628 = vmatprep.subr.bf16.mxu0 %v437
  %629 = vmatpush1.bf16.msra.mxu0 %v436
  %630 = vmatprep.subr.bf16.mxu0 %v443
  %631 = vmatpush1.bf16.msra.mxu0 %v442
  %632 = vmatprep.subr.bf16.mxu0 %v449
  %633 = vmatpush1.bf16.msra.mxu0 %v448
  %634 = vmatprep.subr.bf16.mxu0 %v455
  %635 = vmatpush1.bf16.msra.mxu0 %v454
  %636 = vmatprep.subr.bf16.mxu0 %v461
  %637 = vmatpush1.bf16.msra.mxu0 %v460
  %638 = vmatprep.subr.bf16.mxu0 %v467
  %639 = vmatpush1.bf16.msra.mxu0 %v466
  %640 = vmatprep.subr.bf16.mxu0 %v473
  %641 = vmatpush1.bf16.msra.mxu0 %v472
  %642 = vmatprep.subr.bf16.mxu0 %v479
  %643 = vmatpush1.bf16.msra.mxu0 %v478
  %644 = vmatprep.subr.bf16.mxu0 %v485
  %645 = vmatpush1.bf16.msra.mxu0 %v484
  %646 = vmatprep.subr.bf16.mxu0 %v491
  %647 = vmatpush1.bf16.msra.mxu0 %v490
  %648 = vmatprep.subr.bf16.mxu0 %v497
  %649 = vmatpush1.bf16.msra.mxu0 %v496
  %650 = vmatprep.subr.bf16.mxu0 %v503
  %651 = vmatpush1.bf16.msra.mxu0 %v502
  %652 = vmatprep.subr.bf16.mxu0 %v509
  %653 = vmatpush1.bf16.msra.mxu0 %v508
  %654 = vmatprep.subr.bf16.mxu0 %v515
  %655 = vmatpush1.bf16.msra.mxu0 %v514
  %656 = vmatprep.subr.bf16.mxu0 %v521
  %657 = vmatpush1.bf16.msra.mxu0 %v520
  %658 = vmatprep.subr.bf16.mxu0 %v527
  %659 = vmatpush1.bf16.msra.mxu0 %v526
  %660 = vmatprep.mubr.bf16.mxu0 %v19
  %661 = vmatmul.mubr.bf16.gmra.mrb[0].mxu0 %v18
  %v662 = vpop.f32.mrb[0].mxu0
  %v663 = vadd.f32 %v121, %v662
  %v664 = vpop.f32.mrb[0].mxu0
  %v665 = vadd.f32 %v125, %v664
  %v666 = vpop.f32.mrb[0].mxu0
  %v667 = vadd.f32 %v121, %v666
  %v668 = vpop.f32.mrb[0].mxu0
  %v669 = vadd.f32 %v125, %v668
  %670 = vdwg.mxu0
  %671 = vmatprep.subr.bf16.mxu0 %v439
  %672 = vmatpush1.bf16.msra.mxu0 %v438
  %673 = vmatprep.subr.bf16.mxu0 %v445
  %674 = vmatpush1.bf16.msra.mxu0 %v444
  %675 = vmatprep.subr.bf16.mxu0 %v451
  %676 = vmatpush1.bf16.msra.mxu0 %v450
  %677 = vmatprep.subr.bf16.mxu0 %v457
  %678 = vmatpush1.bf16.msra.mxu0 %v456
  %679 = vmatprep.subr.bf16.mxu0 %v463
  %680 = vmatpush1.bf16.msra.mxu0 %v462
  %681 = vmatprep.subr.bf16.mxu0 %v469
  %682 = vmatpush1.bf16.msra.mxu0 %v468
  %683 = vmatprep.subr.bf16.mxu0 %v475
  %684 = vmatpush1.bf16.msra.mxu0 %v474
  %685 = vmatprep.subr.bf16.mxu0 %v481
  %686 = vmatpush1.bf16.msra.mxu0 %v480
  %687 = vmatprep.subr.bf16.mxu0 %v487
  %688 = vmatpush1.bf16.msra.mxu0 %v486
  %689 = vmatprep.subr.bf16.mxu0 %v493
  %690 = vmatpush1.bf16.msra.mxu0 %v492
  %691 = vmatprep.subr.bf16.mxu0 %v499
  %692 = vmatpush1.bf16.msra.mxu0 %v498
  %693 = vmatprep.subr.bf16.mxu0 %v505
  %694 = vmatpush1.bf16.msra.mxu0 %v504
  %695 = vmatprep.subr.bf16.mxu0 %v511
  %696 = vmatpush1.bf16.msra.mxu0 %v510
  %697 = vmatprep.subr.bf16.mxu0 %v517
  %698 = vmatpush1.bf16.msra.mxu0 %v516
  %699 = vmatprep.subr.bf16.mxu0 %v523
  %700 = vmatpush1.bf16.msra.mxu0 %v522
  %701 = vmatprep.subr.bf16.mxu0 %v529
  %702 = vmatpush1.bf16.msra.mxu0 %v528
  %703 = vmatprep.mubr.bf16.mxu0 %v19
  %704 = vmatmul.mubr.bf16.gmra.mrb[0].mxu0 %v18
  %v705 = vpop.f32.mrb[0].mxu0
  %v706 = vadd.f32 %v129, %v705
  %v707 = vpop.f32.mrb[0].mxu0
  %v708 = vadd.f32 %v133, %v707
  %v709 = vpop.f32.mrb[0].mxu0
  %v710 = vadd.f32 %v129, %v709
  %v711 = vpop.f32.mrb[0].mxu0
  %v712 = vadd.f32 %v133, %v711
  %713 = vdwg.mxu0
  %714 = vmatprep.subr.bf16.mxu0 %v441
  %715 = vmatpush1.bf16.msra.mxu0 %v440
  %716 = vmatprep.subr.bf16.mxu0 %v447
  %717 = vmatpush1.bf16.msra.mxu0 %v446
  %718 = vmatprep.subr.bf16.mxu0 %v453
  %719 = vmatpush1.bf16.msra.mxu0 %v452
  %720 = vmatprep.subr.bf16.mxu0 %v459
  %721 = vmatpush1.bf16.msra.mxu0 %v458
  %722 = vmatprep.subr.bf16.mxu0 %v465
  %723 = vmatpush1.bf16.msra.mxu0 %v464
  %724 = vmatprep.subr.bf16.mxu0 %v471
  %725 = vmatpush1.bf16.msra.mxu0 %v470
  %726 = vmatprep.subr.bf16.mxu0 %v477
  %727 = vmatpush1.bf16.msra.mxu0 %v476
  %728 = vmatprep.subr.bf16.mxu0 %v483
  %729 = vmatpush1.bf16.msra.mxu0 %v482
  %730 = vmatprep.subr.bf16.mxu0 %v489
  %731 = vmatpush1.bf16.msra.mxu0 %v488
  %732 = vmatprep.subr.bf16.mxu0 %v495
  %733 = vmatpush1.bf16.msra.mxu0 %v494
  %734 = vmatprep.subr.bf16.mxu0 %v501
  %735 = vmatpush1.bf16.msra.mxu0 %v500
  %736 = vmatprep.subr.bf16.mxu0 %v507
  %737 = vmatpush1.bf16.msra.mxu0 %v506
  %738 = vmatprep.subr.bf16.mxu0 %v513
  %739 = vmatpush1.bf16.msra.mxu0 %v512
  %740 = vmatprep.subr.bf16.mxu0 %v519
  %741 = vmatpush1.bf16.msra.mxu0 %v518
  %742 = vmatprep.subr.bf16.mxu0 %v525
  %743 = vmatpush1.bf16.msra.mxu0 %v524
  %744 = vmatprep.subr.bf16.mxu0 %v531
  %745 = vmatpush1.bf16.msra.mxu0 %v530
  %746 = vmatprep.mubr.bf16.mxu0 %v19
  %747 = vmatmul.mubr.bf16.gmra.mrb[0].mxu0 %v18
  %v748 = vpop.f32.mrb[0].mxu0
  %v749 = vadd.f32 %v137, %v748
  %v750 = vpop.f32.mrb[0].mxu0
  %v751 = vadd.f32 %v141, %v750
  %v752 = vpop.f32.mrb[0].mxu0
  %v753 = vadd.f32 %v137, %v752
  %v754 = vpop.f32.mrb[0].mxu0
  %v755 = vadd.f32 %v141, %v754
  %756 = vdwg.mxu0
  %v757 = vpack.c.bf16 %v667, %v663
  %v758 = vpack.c.bf16 %v669, %v665
  %v759 = vpack.c.bf16 %v710, %v706
  %v760 = vpack.c.bf16 %v712, %v708
  %v761 = vpack.c.bf16 %v753, %v749
  %v762 = vpack.c.bf16 %v755, %v751
  %v769 = vunpack.c.l.b16 %v757
  %v770 = vunpack.c.l.b16 %v758
  %v771 = vunpack.c.l.b16 %v759
  %v772 = vunpack.c.l.b16 %v760
  %v773 = vunpack.c.l.b16 %v761
  %v774 = vunpack.c.l.b16 %v762
  %v775 = vunpack.c.h.b16 %v757
  %v776 = vunpack.c.h.b16 %v758
  %v777 = vunpack.c.h.b16 %v759
  %v778 = vunpack.c.h.b16 %v760
  %v779 = vunpack.c.h.b16 %v761
  %v780 = vunpack.c.h.b16 %v762
  %v781 = vpack.c.b16 %v770, %v769
  %v782 = vpack.c.b16 %v772, %v771
  %v783 = vpack.c.b16 %v774, %v773
  %v784 = vpack.c.b16 %v776, %v775
  %v785 = vpack.c.b16 %v778, %v777
  %v786 = vpack.c.b16 %v780, %v779
  %793 = vst [vmem:[%s3] sm:$0xff] %v781
  %794 = vst [vmem:[%s3 + $0x8] sm:$0xff] %v782
  %795 = vst [vmem:[%s3 + $0x10] sm:$0xff] %v783
  %796 = vst [vmem:[%s3 + $0x18] sm:$0xff] %v784
  %797 = vst [vmem:[%s3 + $0x20] sm:$0xff] %v785
  %798 = vst [vmem:[%s3 + $0x28] sm:$0xff] %v786
  // Predicated region
  $region14: #{transformer_forward.27} parent=0 // pred_check
    _
  $region15: #{transformer_forward.27} parent=0 // pred_check_branch
    %800 = sbr.rel (0) target = $region17
  $region16: #{transformer_forward.27} parent=0 // pred_region
    _
  $region17: #{transformer_forward.27} parent=0 // pred_fallthru
    _
  // Predicated region
  $region18: #{transformer_forward.27} parent=0 // pred_check
    _
  $region19: #{transformer_forward.27} parent=0 // pred_check_branch
    %802 = sbr.rel (0) target = $region21
  $region20: #{transformer_forward.27} parent=0 // pred_region
    _
  $region21: #{transformer_forward.27} parent=0 // pred_fallthru
    _

// kernel: transformer_forward.47
$region0: #{transformer_forward.47}
  #allocation0 [shape = 'u32[]', space=smem, size = 0x4, offset = 0x4, fixed_abs, tag = 'smem constant byte address 0x4 - core index']
  #allocation1 [shape = 'u32[144,128]{1,0:T(1,128)}', space=vmem, size = 0x12000, scoped, tag = 'internal scratch']
  %s0 = inlined_call_operand.vmem [shape: f32[16,256], index: 0, kind: input, shape index: {}]
  %s1 = inlined_call_operand.vmem [shape: bf16[256,512], index: 1, kind: input, shape index: {}]
  %s2 = inlined_call_operand.vmem [shape: f32[1,512], index: 2, kind: input, shape index: {}]
  %s3 = inlined_call_operand.vmem [shape: bf16[16,512], index: 3, kind: output, shape index: {}]
  %s4 = sld [smem:[#allocation0]]
  $region22: #{transformer_forward.47} parent=0
    _
  %s6 = ssub.s32 1, %s4
  %s7 = scalar_select 0, %s6, %s4
  // Predicated region
  $region2: #{transformer_forward.47} parent=0 // pred_check
    _
  $region3: #{transformer_forward.47} parent=0 // pred_check_branch
    %9 = sbr.rel (0) target = $region5
  $region4: #{transformer_forward.47} parent=0 // pred_region
    _
  $region5: #{transformer_forward.47} parent=0 // pred_fallthru
    _
  // Predicated region
  $region6: #{transformer_forward.47} parent=0 // pred_check
    _
  $region7: #{transformer_forward.47} parent=0 // pred_check_branch
    %11 = sbr.rel (0) target = $region9
  $region8: #{transformer_forward.47} parent=0 // pred_region
    _
  $region9: #{transformer_forward.47} parent=0 // pred_fallthru
    _
  // Predicated region
  $region10: #{transformer_forward.47} parent=0 // pred_check
    _
  $region11: #{transformer_forward.47} parent=0 // pred_check_branch
    %13 = sbr.rel (0) target = $region13
  $region12: #{transformer_forward.47} parent=0 // pred_region
    _
  $region13: #{transformer_forward.47} parent=0 // pred_fallthru
    _
  %v14 = vld [vmem:[%s0] sm:$0xff]
  %v15 = vld [vmem:[%s0 + $0x8] sm:$0xff]
  %v16 = vld [vmem:[%s0 + $0x10] sm:$0xff]
  %v17 = vld [vmem:[%s0 + $0x18] sm:$0xff]
  %v18 = vpack.c.bf16 %v16, %v14
  %v19 = vpack.c.bf16 %v17, %v15
  %v20 = vld [vmem:[%s1] sm:$0xff]
  %v21 = vld [vmem:[%s1 + $0x8] sm:$0xff]
  %v22 = vld [vmem:[%s1 + $0x10] sm:$0xff]
  %v23 = vld [vmem:[%s1 + $0x18] sm:$0xff]
  %v24 = vld [vmem:[%s1 + $0x20] sm:$0xff]
  %v25 = vld [vmem:[%s1 + $0x28] sm:$0xff]
  %v26 = vld [vmem:[%s1 + $0x30] sm:$0xff]
  %v27 = vld [vmem:[%s1 + $0x38] sm:$0xff]
  %v28 = vld [vmem:[%s1 + $0x40] sm:$0xff]
  %v29 = vld [vmem:[%s1 + $0x48] sm:$0xff]
  %v30 = vld [vmem:[%s1 + $0x50] sm:$0xff]
  %v31 = vld [vmem:[%s1 + $0x58] sm:$0xff]
  %v32 = vld [vmem:[%s1 + $0x60] sm:$0xff]
  %v33 = vld [vmem:[%s1 + $0x68] sm:$0xff]
  %v34 = vld [vmem:[%s1 + $0x70] sm:$0xff]
  %v35 = vld [vmem:[%s1 + $0x78] sm:$0xff]
  %v36 = vld [vmem:[%s1 + $0x80] sm:$0xff]
  %v37 = vld [vmem:[%s1 + $0x88] sm:$0xff]
  %v38 = vld [vmem:[%s1 + $0x90] sm:$0xff]
  %v39 = vld [vmem:[%s1 + $0x98] sm:$0xff]
  %v40 = vld [vmem:[%s1 + $0xa0] sm:$0xff]
  %v41 = vld [vmem:[%s1 + $0xa8] sm:$0xff]
  %v42 = vld [vmem:[%s1 + $0xb0] sm:$0xff]
  %v43 = vld [vmem:[%s1 + $0xb8] sm:$0xff]
  %v44 = vld [vmem:[%s1 + $0xc0] sm:$0xff]
  %v45 = vld [vmem:[%s1 + $0xc8] sm:$0xff]
  %v46 = vld [vmem:[%s1 + $0xd0] sm:$0xff]
  %v47 = vld [vmem:[%s1 + $0xd8] sm:$0xff]
  %v48 = vld [vmem:[%s1 + $0xe0] sm:$0xff]
  %v49 = vld [vmem:[%s1 + $0xe8] sm:$0xff]
  %v50 = vld [vmem:[%s1 + $0xf0] sm:$0xff]
  %v51 = vld [vmem:[%s1 + $0xf8] sm:$0xff]
  %v52 = vld [vmem:[%s1 + $0x100] sm:$0xff]
  %v53 = vld [vmem:[%s1 + $0x108] sm:$0xff]
  %v54 = vld [vmem:[%s1 + $0x110] sm:$0xff]
  %v55 = vld [vmem:[%s1 + $0x118] sm:$0xff]
  %v56 = vld [vmem:[%s1 + $0x120] sm:$0xff]
  %v57 = vld [vmem:[%s1 + $0x128] sm:$0xff]
  %v58 = vld [vmem:[%s1 + $0x130] sm:$0xff]
  %v59 = vld [vmem:[%s1 + $0x138] sm:$0xff]
  %v60 = vld [vmem:[%s1 + $0x140] sm:$0xff]
  %v61 = vld [vmem:[%s1 + $0x148] sm:$0xff]
  %v62 = vld [vmem:[%s1 + $0x150] sm:$0xff]
  %v63 = vld [vmem:[%s1 + $0x158] sm:$0xff]
  %v64 = vld [vmem:[%s1 + $0x160] sm:$0xff]
  %v65 = vld [vmem:[%s1 + $0x168] sm:$0xff]
  %v66 = vld [vmem:[%s1 + $0x170] sm:$0xff]
  %v67 = vld [vmem:[%s1 + $0x178] sm:$0xff]
  %v68 = vld [vmem:[%s1 + $0x180] sm:$0xff]
  %v69 = vld [vmem:[%s1 + $0x188] sm:$0xff]
  %v70 = vld [vmem:[%s1 + $0x190] sm:$0xff]
  %v71 = vld [vmem:[%s1 + $0x198] sm:$0xff]
  %v72 = vld [vmem:[%s1 + $0x1a0] sm:$0xff]
  %v73 = vld [vmem:[%s1 + $0x1a8] sm:$0xff]
  %v74 = vld [vmem:[%s1 + $0x1b0] sm:$0xff]
  %v75 = vld [vmem:[%s1 + $0x1b8] sm:$0xff]
  %v76 = vld [vmem:[%s1 + $0x1c0] sm:$0xff]
  %v77 = vld [vmem:[%s1 + $0x1c8] sm:$0xff]
  %v78 = vld [vmem:[%s1 + $0x1d0] sm:$0xff]
  %v79 = vld [vmem:[%s1 + $0x1d8] sm:$0xff]
  %v80 = vld [vmem:[%s1 + $0x1e0] sm:$0xff]
  %v81 = vld [vmem:[%s1 + $0x1e8] sm:$0xff]
  %v82 = vld [vmem:[%s1 + $0x1f0] sm:$0xff]
  %v83 = vld [vmem:[%s1 + $0x1f8] sm:$0xff]
  %v84 = vld [vmem:[%s2] sm:$0xf]
  %v86 = vlaneseq
  %v87 = vshrl.u32 %v86, 7
  %v88 = vsub.s32 0, %v87
  %v89 = vrot.slane %v84, %v88
  %v90 = vlaneseq
  %v91 = vshrl.u32 %v90, 7
  %v92 = vsub.s32 1, %v91
  %v93 = vrot.slane %v84, %v92
  %v94 = vlaneseq
  %v95 = vshrl.u32 %v94, 7
  %v96 = vsub.s32 2, %v95
  %v97 = vrot.slane %v84, %v96
  %v98 = vlaneseq
  %v99 = vshrl.u32 %v98, 7
  %v100 = vsub.s32 3, %v99
  %v101 = vrot.slane %v84, %v100
  %v170 = vunpack.c.l.b16 %v20
  %v171 = vunpack.c.h.b16 %v20
  %v172 = vunpack.c.l.b16 %v21
  %v173 = vunpack.c.h.b16 %v21
  %v174 = vunpack.c.l.b16 %v22
  %v175 = vunpack.c.h.b16 %v22
  %v176 = vunpack.c.l.b16 %v23
  %v177 = vunpack.c.h.b16 %v23
  %v178 = vunpack.c.l.b16 %v24
  %v179 = vunpack.c.h.b16 %v24
  %v180 = vunpack.c.l.b16 %v25
  %v181 = vunpack.c.h.b16 %v25
  %v182 = vunpack.c.l.b16 %v26
  %v183 = vunpack.c.h.b16 %v26
  %v184 = vunpack.c.l.b16 %v27
  %v185 = vunpack.c.h.b16 %v27
  %v186 = vunpack.c.l.b16 %v28
  %v187 = vunpack.c.h.b16 %v28
  %v188 = vunpack.c.l.b16 %v29
  %v189 = vunpack.c.h.b16 %v29
  %v190 = vunpack.c.l.b16 %v30
  %v191 = vunpack.c.h.b16 %v30
  %v192 = vunpack.c.l.b16 %v31
  %v193 = vunpack.c.h.b16 %v31
  %v194 = vunpack.c.l.b16 %v32
  %v195 = vunpack.c.h.b16 %v32
  %v196 = vunpack.c.l.b16 %v33
  %v197 = vunpack.c.h.b16 %v33
  %v198 = vunpack.c.l.b16 %v34
  %v199 = vunpack.c.h.b16 %v34
  %v200 = vunpack.c.l.b16 %v35
  %v201 = vunpack.c.h.b16 %v35
  %v202 = vunpack.c.l.b16 %v36
  %v203 = vunpack.c.h.b16 %v36
  %v204 = vunpack.c.l.b16 %v37
  %v205 = vunpack.c.h.b16 %v37
  %v206 = vunpack.c.l.b16 %v38
  %v207 = vunpack.c.h.b16 %v38
  %v208 = vunpack.c.l.b16 %v39
  %v209 = vunpack.c.h.b16 %v39
  %v210 = vunpack.c.l.b16 %v40
  %v211 = vunpack.c.h.b16 %v40
  %v212 = vunpack.c.l.b16 %v41
  %v213 = vunpack.c.h.b16 %v41
  %v214 = vunpack.c.l.b16 %v42
  %v215 = vunpack.c.h.b16 %v42
  %v216 = vunpack.c.l.b16 %v43
  %v217 = vunpack.c.h.b16 %v43
  %v218 = vunpack.c.l.b16 %v44
  %v219 = vunpack.c.h.b16 %v44
  %v220 = vunpack.c.l.b16 %v45
  %v221 = vunpack.c.h.b16 %v45
  %v222 = vunpack.c.l.b16 %v46
  %v223 = vunpack.c.h.b16 %v46
  %v224 = vunpack.c.l.b16 %v47
  %v225 = vunpack.c.h.b16 %v47
  %v226 = vunpack.c.l.b16 %v48
  %v227 = vunpack.c.h.b16 %v48
  %v228 = vunpack.c.l.b16 %v49
  %v229 = vunpack.c.h.b16 %v49
  %v230 = vunpack.c.l.b16 %v50
  %v231 = vunpack.c.h.b16 %v50
  %v232 = vunpack.c.l.b16 %v51
  %v233 = vunpack.c.h.b16 %v51
  %v234 = vunpack.c.l.b16 %v52
  %v235 = vunpack.c.h.b16 %v52
  %v236 = vunpack.c.l.b16 %v53
  %v237 = vunpack.c.h.b16 %v53
  %v238 = vunpack.c.l.b16 %v54
  %v239 = vunpack.c.h.b16 %v54
  %v240 = vunpack.c.l.b16 %v55
  %v241 = vunpack.c.h.b16 %v55
  %v242 = vunpack.c.l.b16 %v56
  %v243 = vunpack.c.h.b16 %v56
  %v244 = vunpack.c.l.b16 %v57
  %v245 = vunpack.c.h.b16 %v57
  %v246 = vunpack.c.l.b16 %v58
  %v247 = vunpack.c.h.b16 %v58
  %v248 = vunpack.c.l.b16 %v59
  %v249 = vunpack.c.h.b16 %v59
  %v250 = vunpack.c.l.b16 %v60
  %v251 = vunpack.c.h.b16 %v60
  %v252 = vunpack.c.l.b16 %v61
  %v253 = vunpack.c.h.b16 %v61
  %v254 = vunpack.c.l.b16 %v62
  %v255 = vunpack.c.h.b16 %v62
  %v256 = vunpack.c.l.b16 %v63
  %v257 = vunpack.c.h.b16 %v63
  %v258 = vunpack.c.l.b16 %v64
  %v259 = vunpack.c.h.b16 %v64
  %v260 = vunpack.c.l.b16 %v65
  %v261 = vunpack.c.h.b16 %v65
  %v262 = vunpack.c.l.b16 %v66
  %v263 = vunpack.c.h.b16 %v66
  %v264 = vunpack.c.l.b16 %v67
  %v265 = vunpack.c.h.b16 %v67
  %v266 = vunpack.c.l.b16 %v68
  %v267 = vunpack.c.h.b16 %v68
  %v268 = vunpack.c.l.b16 %v69
  %v269 = vunpack.c.h.b16 %v69
  %v270 = vunpack.c.l.b16 %v70
  %v271 = vunpack.c.h.b16 %v70
  %v272 = vunpack.c.l.b16 %v71
  %v273 = vunpack.c.h.b16 %v71
  %v274 = vunpack.c.l.b16 %v72
  %v275 = vunpack.c.h.b16 %v72
  %v276 = vunpack.c.l.b16 %v73
  %v277 = vunpack.c.h.b16 %v73
  %v278 = vunpack.c.l.b16 %v74
  %v279 = vunpack.c.h.b16 %v74
  %v280 = vunpack.c.l.b16 %v75
  %v281 = vunpack.c.h.b16 %v75
  %v282 = vunpack.c.l.b16 %v76
  %v283 = vunpack.c.h.b16 %v76
  %v284 = vunpack.c.l.b16 %v77
  %v285 = vunpack.c.h.b16 %v77
  %v286 = vunpack.c.l.b16 %v78
  %v287 = vunpack.c.h.b16 %v78
  %v288 = vunpack.c.l.b16 %v79
  %v289 = vunpack.c.h.b16 %v79
  %v290 = vunpack.c.l.b16 %v80
  %v291 = vunpack.c.h.b16 %v80
  %v292 = vunpack.c.l.b16 %v81
  %v293 = vunpack.c.h.b16 %v81
  %v294 = vunpack.c.l.b16 %v82
  %v295 = vunpack.c.h.b16 %v82
  %v296 = vunpack.c.l.b16 %v83
  %v297 = vunpack.c.h.b16 %v83
  %v298 = vpack.c.b16 %v174, %v170
  %v299 = vpack.c.b16 %v175, %v171
  %v300 = vpack.c.b16 %v176, %v172
  %v301 = vpack.c.b16 %v177, %v173
  %v302 = vpack.c.b16 %v182, %v178
  %v303 = vpack.c.b16 %v183, %v179
  %v304 = vpack.c.b16 %v184, %v180
  %v305 = vpack.c.b16 %v185, %v181
  %v306 = vpack.c.b16 %v190, %v186
  %v307 = vpack.c.b16 %v191, %v187
  %v308 = vpack.c.b16 %v192, %v188
  %v309 = vpack.c.b16 %v193, %v189
  %v310 = vpack.c.b16 %v198, %v194
  %v311 = vpack.c.b16 %v199, %v195
  %v312 = vpack.c.b16 %v200, %v196
  %v313 = vpack.c.b16 %v201, %v197
  %v314 = vpack.c.b16 %v206, %v202
  %v315 = vpack.c.b16 %v207, %v203
  %v316 = vpack.c.b16 %v208, %v204
  %v317 = vpack.c.b16 %v209, %v205
  %v318 = vpack.c.b16 %v214, %v210
  %v319 = vpack.c.b16 %v215, %v211
  %v320 = vpack.c.b16 %v216, %v212
  %v321 = vpack.c.b16 %v217, %v213
  %v322 = vpack.c.b16 %v222, %v218
  %v323 = vpack.c.b16 %v223, %v219
  %v324 = vpack.c.b16 %v224, %v220
  %v325 = vpack.c.b16 %v225, %v221
  %v326 = vpack.c.b16 %v230, %v226
  %v327 = vpack.c.b16 %v231, %v227
  %v328 = vpack.c.b16 %v232, %v228
  %v329 = vpack.c.b16 %v233, %v229
  %v330 = vpack.c.b16 %v238, %v234
  %v331 = vpack.c.b16 %v239, %v235
  %v332 = vpack.c.b16 %v240, %v236
  %v333 = vpack.c.b16 %v241, %v237
  %v334 = vpack.c.b16 %v246, %v242
  %v335 = vpack.c.b16 %v247, %v243
  %v336 = vpack.c.b16 %v248, %v244
  %v337 = vpack.c.b16 %v249, %v245
  %v338 = vpack.c.b16 %v254, %v250
  %v339 = vpack.c.b16 %v255, %v251
  %v340 = vpack.c.b16 %v256, %v252
  %v341 = vpack.c.b16 %v257, %v253
  %v342 = vpack.c.b16 %v262, %v258
  %v343 = vpack.c.b16 %v263, %v259
  %v344 = vpack.c.b16 %v264, %v260
  %v345 = vpack.c.b16 %v265, %v261
  %v346 = vpack.c.b16 %v270, %v266
  %v347 = vpack.c.b16 %v271, %v267
  %v348 = vpack.c.b16 %v272, %v268
  %v349 = vpack.c.b16 %v273, %v269
  %v350 = vpack.c.b16 %v278, %v274
  %v351 = vpack.c.b16 %v279, %v275
  %v352 = vpack.c.b16 %v280, %v276
  %v353 = vpack.c.b16 %v281, %v277
  %v354 = vpack.c.b16 %v286, %v282
  %v355 = vpack.c.b16 %v287, %v283
  %v356 = vpack.c.b16 %v288, %v284
  %v357 = vpack.c.b16 %v289, %v285
  %v358 = vpack.c.b16 %v294, %v290
  %v359 = vpack.c.b16 %v295, %v291
  %v360 = vpack.c.b16 %v296, %v292
  %v361 = vpack.c.b16 %v297, %v293
  %426 = vmatprep.subr.bf16.mxu0 %v299
  %427 = vmatpush1.bf16.msra.mxu0 %v298
  %428 = vmatprep.subr.bf16.mxu0 %v303
  %429 = vmatpush1.bf16.msra.mxu0 %v302
  %430 = vmatprep.subr.bf16.mxu0 %v307
  %431 = vmatpush1.bf16.msra.mxu0 %v306
  %432 = vmatprep.subr.bf16.mxu0 %v311
  %433 = vmatpush1.bf16.msra.mxu0 %v310
  %434 = vmatprep.subr.bf16.mxu0 %v315
  %435 = vmatpush1.bf16.msra.mxu0 %v314
  %436 = vmatprep.subr.bf16.mxu0 %v319
  %437 = vmatpush1.bf16.msra.mxu0 %v318
  %438 = vmatprep.subr.bf16.mxu0 %v323
  %439 = vmatpush1.bf16.msra.mxu0 %v322
  %440 = vmatprep.subr.bf16.mxu0 %v327
  %441 = vmatpush1.bf16.msra.mxu0 %v326
  %442 = vmatprep.subr.bf16.mxu0 %v331
  %443 = vmatpush1.bf16.msra.mxu0 %v330
  %444 = vmatprep.subr.bf16.mxu0 %v335
  %445 = vmatpush1.bf16.msra.mxu0 %v334
  %446 = vmatprep.subr.bf16.mxu0 %v339
  %447 = vmatpush1.bf16.msra.mxu0 %v338
  %448 = vmatprep.subr.bf16.mxu0 %v343
  %449 = vmatpush1.bf16.msra.mxu0 %v342
  %450 = vmatprep.subr.bf16.mxu0 %v347
  %451 = vmatpush1.bf16.msra.mxu0 %v346
  %452 = vmatprep.subr.bf16.mxu0 %v351
  %453 = vmatpush1.bf16.msra.mxu0 %v350
  %454 = vmatprep.subr.bf16.mxu0 %v355
  %455 = vmatpush1.bf16.msra.mxu0 %v354
  %456 = vmatprep.subr.bf16.mxu0 %v359
  %457 = vmatpush1.bf16.msra.mxu0 %v358
  %458 = vmatprep.mubr.bf16.mxu0 %v19
  %459 = vmatmul.mubr.bf16.gmra.mrb[0].mxu0 %v18
  %v460 = vpop.f32.mrb[0].mxu0
  %v461 = vadd.f32 %v89, %v460
  %v462 = vpop.f32.mrb[0].mxu0
  %v463 = vadd.f32 %v93, %v462
  %v464 = vpop.f32.mrb[0].mxu0
  %v465 = vadd.f32 %v89, %v464
  %v466 = vpop.f32.mrb[0].mxu0
  %v467 = vadd.f32 %v93, %v466
  %468 = vdwg.mxu0
  %469 = vmatprep.subr.bf16.mxu0 %v301
  %470 = vmatpush1.bf16.msra.mxu0 %v300
  %471 = vmatprep.subr.bf16.mxu0 %v305
  %472 = vmatpush1.bf16.msra.mxu0 %v304
  %473 = vmatprep.subr.bf16.mxu0 %v309
  %474 = vmatpush1.bf16.msra.mxu0 %v308
  %475 = vmatprep.subr.bf16.mxu0 %v313
  %476 = vmatpush1.bf16.msra.mxu0 %v312
  %477 = vmatprep.subr.bf16.mxu0 %v317
  %478 = vmatpush1.bf16.msra.mxu0 %v316
  %479 = vmatprep.subr.bf16.mxu0 %v321
  %480 = vmatpush1.bf16.msra.mxu0 %v320
  %481 = vmatprep.subr.bf16.mxu0 %v325
  %482 = vmatpush1.bf16.msra.mxu0 %v324
  %483 = vmatprep.subr.bf16.mxu0 %v329
  %484 = vmatpush1.bf16.msra.mxu0 %v328
  %485 = vmatprep.subr.bf16.mxu0 %v333
  %486 = vmatpush1.bf16.msra.mxu0 %v332
  %487 = vmatprep.subr.bf16.mxu0 %v337
  %488 = vmatpush1.bf16.msra.mxu0 %v336
  %489 = vmatprep.subr.bf16.mxu0 %v341
  %490 = vmatpush1.bf16.msra.mxu0 %v340
  %491 = vmatprep.subr.bf16.mxu0 %v345
  %492 = vmatpush1.bf16.msra.mxu0 %v344
  %493 = vmatprep.subr.bf16.mxu0 %v349
  %494 = vmatpush1.bf16.msra.mxu0 %v348
  %495 = vmatprep.subr.bf16.mxu0 %v353
  %496 = vmatpush1.bf16.msra.mxu0 %v352
  %497 = vmatprep.subr.bf16.mxu0 %v357
  %498 = vmatpush1.bf16.msra.mxu0 %v356
  %499 = vmatprep.subr.bf16.mxu0 %v361
  %500 = vmatpush1.bf16.msra.mxu0 %v360
  %501 = vmatprep.mubr.bf16.mxu0 %v19
  %502 = vmatmul.mubr.bf16.gmra.mrb[0].mxu0 %v18
  %v503 = vpop.f32.mrb[0].mxu0
  %v504 = vadd.f32 %v97, %v503
  %v505 = vpop.f32.mrb[0].mxu0
  %v506 = vadd.f32 %v101, %v505
  %v507 = vpop.f32.mrb[0].mxu0
  %v508 = vadd.f32 %v97, %v507
  %v509 = vpop.f32.mrb[0].mxu0
  %v510 = vadd.f32 %v101, %v509
  %511 = vdwg.mxu0
  %v512 = vpack.c.bf16 %v465, %v461
  %v513 = vpack.c.bf16 %v467, %v463
  %v514 = vpack.c.bf16 %v508, %v504
  %v515 = vpack.c.bf16 %v510, %v506
  %v520 = vunpack.c.l.b16 %v512
  %v521 = vunpack.c.l.b16 %v513
  %v522 = vunpack.c.l.b16 %v514
  %v523 = vunpack.c.l.b16 %v515
  %v524 = vunpack.c.h.b16 %v512
  %v525 = vunpack.c.h.b16 %v513
  %v526 = vunpack.c.h.b16 %v514
  %v527 = vunpack.c.h.b16 %v515
  %v528 = vpack.c.b16 %v521, %v520
  %v529 = vpack.c.b16 %v523, %v522
  %v530 = vpack.c.b16 %v525, %v524
  %v531 = vpack.c.b16 %v527, %v526
  %536 = vst [vmem:[%s3] sm:$0xff] %v528
  %537 = vst [vmem:[%s3 + $0x8] sm:$0xff] %v529
  %538 = vst [vmem:[%s3 + $0x10] sm:$0xff] %v530
  %539 = vst [vmem:[%s3 + $0x18] sm:$0xff] %v531
  // Predicated region
  $region14: #{transformer_forward.47} parent=0 // pred_check
    _
  $region15: #{transformer_forward.47} parent=0 // pred_check_branch
    %541 = sbr.rel (0) target = $region17
  $region16: #{transformer_forward.47} parent=0 // pred_region
    _
  $region17: #{transformer_forward.47} parent=0 // pred_fallthru
    _
  // Predicated region
  $region18: #{transformer_forward.47} parent=0 // pred_check
    _
  $region19: #{transformer_forward.47} parent=0 // pred_check_branch
    %543 = sbr.rel (0) target = $region21
  $region20: #{transformer_forward.47} parent=0 // pred_region
    _
  $region21: #{transformer_forward.47} parent=0 // pred_fallthru
    _

// kernel: transformer_forward.40
$region0: #{transformer_forward.40}
  #allocation0 [shape = 'u32[]', space=smem, size = 0x4, offset = 0x4, fixed_abs, tag = 'smem constant byte address 0x4 - core index']
  #allocation1 [shape = 'u32[144,128]{1,0:T(1,128)}', space=vmem, size = 0x12000, scoped, tag = 'internal scratch']
  %s0 = inlined_call_operand.vmem [shape: bf16[2,5,256], index: 0, kind: input, shape index: {}]
  %s1 = inlined_call_operand.vmem [shape: bf16[2,8,512], index: 1, kind: input, shape index: {}, may-alias: {1,2}]
  %s2 = inlined_call_operand.vmem [shape: bf16[2,8,512], index: 2, kind: input, shape index: {}, may-alias: {1,2}]
  %s3 = inlined_call_operand.vmem [shape: bf16[2,5,256], index: 3, kind: output, shape index: {}]
  %s4 = sld [smem:[#allocation0]]
  $region45: #{transformer_forward.40} parent=0
    _
  %s6 = ssub.s32 1, %s4
  %s7 = scalar_select 0, %s6, %s4
  loop: start=0, step=1, limit=6
  $region2: #{transformer_forward.40} parent=0 // loop_pre_header
    _
  $region3: #{transformer_forward.40} parent=0 // loop_header
    %s9 = sphi 0, %s13
    %p10 = scmp.ge.s32.totalorder %s9, 6
    %s16 = sphi 0, %s28
    %s17 = sphi 0, %s24
    %s18 = sphi 0, %s16
    %s19 = sphi 0, %s17
    %s20 = sphi 0, %s18
    %s21 = sphi 0, %s19
    %s33 = sphi 0, %s35
    %s36 = sphi 0, %s33
    %s37 = sphi 0, %s36
    %s53 = sphi 0, %s37
    %s61 = sphi 0, %s63
    %s64 = sphi 0, %s61
    %s65 = sphi 0, %s64
    %s81 = sphi 0, %s65
    %s91 = sphi 0, %s93
    %s94 = sphi 0, %s91
    %s95 = sphi 0, %s94
    %s111 = sphi 0, %s95
    %s119 = sphi 0, %s121
    %s122 = sphi 0, %s119
    %s123 = sphi 0, %s122
    %s139 = sphi 0, %s123
  $region4: #{transformer_forward.40} parent=0 // loop_header_branch
    %12 = sbr.rel (%p10) target = $region8
  $region5: #{transformer_forward.40} parent=0 // loop_body
    %s14 = ssub.s32 %s9, 1
    %s15 = ssub.s32 %s9, 2
    %s22 = sadd.s32 1, %s17
    %p23 = scmp.ge.s32.totalorder %s22, 2
    %s24 = scalar_select %p23, 0, %s22
    %s25 = sadd.s32 1, %s16
    %s26 = scalar_select %p23, %s25, %s16
    %p27 = scmp.ge.s32.totalorder %s26, 2
    %s28 = scalar_select %p27, 0, %s26
    %s29 = ssub.s32 %s16, %s28
    %s30 = ssub.s32 %s17, %s24
    %s31 = sor.u32 %s29, %s30
    %p32 = scmp.eq.s32.totalorder %s31, 0
    %s34 = sadd.s32 %s33, 1
    %s35 = scalar_select %p32, %s33, %s34
    %p38 = pneg %p32
    %p39 = scmp.eq.s32.totalorder %s9, 3
    %p40 = por %p38, %p39
    %p41 = scmp.ne.s32.totalorder %s33, %s36
    %p42 = scmp.eq.s32.totalorder %s9, 0
    %p43 = por %p41, %p42
    %p44 = scmp.ne.s32.totalorder %s33, %s36
    %p45 = scmp.eq.s32.totalorder %s14, 3
    %p46 = por %p44, %p45
    %p47 = scmp.ne.s32.totalorder %s36, %s37
    %p48 = scmp.eq.s32.totalorder %s14, 0
    %p49 = por %p47, %p48
    %p50 = scmp.ne.s32.totalorder %s36, %s37
    %p51 = scmp.eq.s32.totalorder %s15, 3
    %p52 = por %p50, %p51
    %p54 = scmp.ne.s32.totalorder %s37, %s53
    %p55 = scmp.eq.s32.totalorder %s15, 0
    %p56 = por %p54, %p55
    %s57 = ssub.s32 %s16, %s28
    %s58 = ssub.s32 %s17, %s24
    %s59 = sor.u32 %s57, %s58
    %p60 = scmp.eq.s32.totalorder %s59, 0
    %s62 = sadd.s32 %s61, 1
    %s63 = scalar_select %p60, %s61, %s62
    %p66 = pneg %p60
    %p67 = scmp.eq.s32.totalorder %s9, 3
    %p68 = por %p66, %p67
    %p69 = scmp.ne.s32.totalorder %s61, %s64
    %p70 = scmp.eq.s32.totalorder %s9, 0
    %p71 = por %p69, %p70
    %p72 = scmp.ne.s32.totalorder %s61, %s64
    %p73 = scmp.eq.s32.totalorder %s14, 3
    %p74 = por %p72, %p73
    %p75 = scmp.ne.s32.totalorder %s64, %s65
    %p76 = scmp.eq.s32.totalorder %s14, 0
    %p77 = por %p75, %p76
    %p78 = scmp.ne.s32.totalorder %s64, %s65
    %p79 = scmp.eq.s32.totalorder %s15, 3
    %p80 = por %p78, %p79
    %p82 = scmp.ne.s32.totalorder %s65, %s81
    %p83 = scmp.eq.s32.totalorder %s15, 0
    %p84 = por %p82, %p83
    %s85 = sadd.s32 %s17, 2
    %s86 = sadd.s32 %s24, 2
    %s87 = ssub.s32 %s16, %s28
    %s88 = ssub.s32 %s85, %s86
    %s89 = sor.u32 %s87, %s88
    %p90 = scmp.eq.s32.totalorder %s89, 0
    %s92 = sadd.s32 %s91, 1
    %s93 = scalar_select %p90, %s91, %s92
    %p96 = pneg %p90
    %p97 = scmp.eq.s32.totalorder %s9, 3
    %p98 = por %p96, %p97
    %p99 = scmp.ne.s32.totalorder %s91, %s94
    %p100 = scmp.eq.s32.totalorder %s9, 0
    %p101 = por %p99, %p100
    %p102 = scmp.ne.s32.totalorder %s91, %s94
    %p103 = scmp.eq.s32.totalorder %s14, 3
    %p104 = por %p102, %p103
    %p105 = scmp.ne.s32.totalorder %s94, %s95
    %p106 = scmp.eq.s32.totalorder %s14, 0
    %p107 = por %p105, %p106
    %p108 = scmp.ne.s32.totalorder %s94, %s95
    %p109 = scmp.eq.s32.totalorder %s15, 3
    %p110 = por %p108, %p109
    %p112 = scmp.ne.s32.totalorder %s95, %s111
    %p113 = scmp.eq.s32.totalorder %s15, 0
    %p114 = por %p112, %p113
    %s115 = ssub.s32 %s16, %s28
    %s116 = ssub.s32 %s17, %s24
    %s117 = sor.u32 %s115, %s116
    %p118 = scmp.eq.s32.totalorder %s117, 0
    %s120 = sadd.s32 %s119, 1
    %s121 = scalar_select %p118, %s119, %s120
    %p124 = pneg %p118
    %p125 = scmp.eq.s32.totalorder %s9, 3
    %p126 = por %p124, %p125
    %p127 = scmp.ne.s32.totalorder %s119, %s122
    %p128 = scmp.eq.s32.totalorder %s9, 0
    %p129 = por %p127, %p128
    %p130 = scmp.ne.s32.totalorder %s119, %s122
    %p131 = scmp.eq.s32.totalorder %s14, 3
    %p132 = por %p130, %p131
    %p133 = scmp.ne.s32.totalorder %s122, %s123
    %p134 = scmp.eq.s32.totalorder %s14, 0
    %p135 = por %p133, %p134
    %p136 = scmp.ne.s32.totalorder %s122, %s123
    %p137 = scmp.eq.s32.totalorder %s15, 3
    %p138 = por %p136, %p137
    %p140 = scmp.ne.s32.totalorder %s123, %s139
    %p141 = scmp.eq.s32.totalorder %s15, 0
    %p142 = por %p140, %p141
    %p143 = scmp.le.s32.totalorder 1, %s9
    %p144 = scmp.lt.s32.totalorder %s9, 5
    %p145 = pnand %p143, %p144
    %p146 = pneg %p145
    // Predicated region
    $region9: #{transformer_forward.40} parent=5 // pred_check
      _
    $region10: #{transformer_forward.40} parent=5 // pred_check_branch
      %148 = sbr.rel (%p145) target = $region12
    $region11: #{transformer_forward.40} parent=5 // pred_region
      %s149 = ssub.s32 %s9, 1
    $region12: #{transformer_forward.40} parent=5 // pred_fallthru
      _
    %p150 = scmp.lt.s32.totalorder %s9, 4
    // Predicated region
    $region13: #{transformer_forward.40} parent=5 // pred_check
      %p151 = pneg %p150
    $region14: #{transformer_forward.40} parent=5 // pred_check_branch
      %153 = sbr.rel (%p151) target = $region16
    $region15: #{transformer_forward.40} parent=5 // pred_region
      // Predicated region
      $region17: #{transformer_forward.40} parent=15 // pred_check
        %p154 = pneg %p43
      $region18: #{transformer_forward.40} parent=15 // pred_check_branch
        %156 = sbr.rel (%p154) target = $region20
      $region19: #{transformer_forward.40} parent=15 // pred_region
        %p157 = scmp.lt.s32.totalorder %s16, 1
        %s158 = scalar_select %p157, %s16, 1
        %p159 = scmp.lt.s32.totalorder %s17, 1
        %s160 = scalar_select %p159, %s17, 1
        %s161 = smul.addr %s158, 2
        %s162 = sadd.s32 %s160, %s161
        %s163 = smul.addr %s162, 4
        %s164 = scalar_lea.vmem %s0, %s163
      $region20: #{transformer_forward.40} parent=15 // pred_fallthru
        _
      // Predicated region
      $region21: #{transformer_forward.40} parent=15 // pred_check
        %p165 = pneg %p71
      $region22: #{transformer_forward.40} parent=15 // pred_check_branch
        %167 = sbr.rel (%p165) target = $region24
      $region23: #{transformer_forward.40} parent=15 // pred_region
        %p168 = scmp.lt.s32.totalorder %s16, 1
        %s169 = scalar_select %p168, %s16, 1
        %p170 = scmp.lt.s32.totalorder %s17, 3
        %s171 = scalar_select %p170, %s17, 3
        %s172 = smul.addr %s169, 4
        %s173 = sadd.s32 %s171, %s172
        %s174 = smul.addr %s173, 4
        %s175 = scalar_lea.vmem %s1, %s174
      $region24: #{transformer_forward.40} parent=15 // pred_fallthru
        _
      // Predicated region
      $region25: #{transformer_forward.40} parent=15 // pred_check
        %p176 = pneg %p101
      $region26: #{transformer_forward.40} parent=15 // pred_check_branch
        %178 = sbr.rel (%p176) target = $region28
      $region27: #{transformer_forward.40} parent=15 // pred_region
        %s179 = sadd.s32 %s17, 2
        %p180 = scmp.lt.s32.totalorder %s16, 1
        %s181 = scalar_select %p180, %s16, 1
        %p182 = scmp.lt.s32.totalorder %s179, 3
        %s183 = scalar_select %p182, %s179, 3
        %s184 = smul.addr %s181, 4
        %s185 = sadd.s32 %s183, %s184
        %s186 = smul.addr %s185, 4
        %s187 = scalar_lea.vmem %s2, %s186
        %s188 = sadd.s32 %s17, 2
      $region28: #{transformer_forward.40} parent=15 // pred_fallthru
        _
    $region16: #{transformer_forward.40} parent=5 // pred_fallthru
      _
    %p189 = scmp.le.s32.totalorder 1, %s9
    %p190 = scmp.lt.s32.totalorder %s9, 5
    %p191 = pnand %p189, %p190
    %p192 = pneg %p191
    // Predicated region
    $region29: #{transformer_forward.40} parent=5 // pred_check
      _
    $region30: #{transformer_forward.40} parent=5 // pred_check_branch
      %194 = sbr.rel (%p191) target = $region32
    $region31: #{transformer_forward.40} parent=5 // pred_region
      %s195 = ssub.s32 %s9, 1
      %p196 = scmp.lt.s32.totalorder %s18, 1
      %s197 = scalar_select %p196, %s18, 1
      %p198 = scmp.lt.s32.totalorder %s19, 1
      %s199 = scalar_select %p198, %s19, 1
      %s200 = smul.addr %s197, 2
      %s201 = sadd.s32 %s199, %s200
      %s202 = smul.addr %s201, 4
      %s203 = scalar_lea.vmem %s0, %s202
      %p204 = pneg %p49
      %p205 = pneg %p46
      %p206 = scmp.lt.s32.totalorder %s18, 1
      %s207 = scalar_select %p206, %s18, 1
      %p208 = scmp.lt.s32.totalorder %s19, 3
      %s209 = scalar_select %p208, %s19, 3
      %s210 = smul.addr %s207, 4
      %s211 = sadd.s32 %s209, %s210
      %s212 = smul.addr %s211, 4
      %s213 = scalar_lea.vmem %s1, %s212
      %p214 = pneg %p77
      %p215 = pneg %p74
      %s216 = sadd.s32 %s19, 2
      %p217 = scmp.lt.s32.totalorder %s18, 1
      %s218 = scalar_select %p217, %s18, 1
      %p219 = scmp.lt.s32.totalorder %s216, 3
      %s220 = scalar_select %p219, %s216, 3
      %s221 = smul.addr %s218, 4
      %s222 = sadd.s32 %s220, %s221
      %s223 = smul.addr %s222, 4
      %s224 = scalar_lea.vmem %s2, %s223
      %p225 = pneg %p107
      %p226 = pneg %p104
      %p227 = pneg %p135
      %p228 = pneg %p132
      %p229 = scmp.lt.s32.totalorder %s18, 1
      %s230 = scalar_select %p229, %s18, 1
      %p231 = scmp.lt.s32.totalorder %s19, 1
      %s232 = scalar_select %p231, %s19, 1
      %s233 = smul.addr %s230, 2
      %s234 = sadd.s32 %s232, %s233
      %s235 = smul.addr %s234, 4
      %s236 = scalar_lea.vmem %s3, %s235
      %p237 = scmp.lt.s32.totalorder %s18, 1
      %s238 = scalar_select %p237, %s18, 1
      %p239 = scmp.lt.s32.totalorder %s19, 1
      %s240 = scalar_select %p239, %s19, 1
      %s241 = smul.addr %s238, 2
      %s242 = sadd.s32 %s240, %s241
      %s243 = smul.addr %s242, 4
      %s244 = scalar_lea.vmem %s0, %s243
      %p245 = scmp.lt.s32.totalorder %s18, 1
      %s246 = scalar_select %p245, %s18, 1
      %p247 = scmp.lt.s32.totalorder %s19, 3
      %s248 = scalar_select %p247, %s19, 3
      %s249 = smul.addr %s246, 4
      %s250 = sadd.s32 %s248, %s249
      %s251 = smul.addr %s250, 4
      %s252 = scalar_lea.vmem %s1, %s251
      %s253 = sadd.s32 %s19, 2
      %p254 = scmp.lt.s32.totalorder %s18, 1
      %s255 = scalar_select %p254, %s18, 1
      %p256 = scmp.lt.s32.totalorder %s253, 3
      %s257 = scalar_select %p256, %s253, 3
      %s258 = smul.addr %s255, 4
      %s259 = sadd.s32 %s257, %s258
      %s260 = smul.addr %s259, 4
      %s261 = scalar_lea.vmem %s2, %s260
      %s262 = sadd.s32 %s19, 2
      %p263 = scmp.lt.s32.totalorder %s18, 1
      %s264 = scalar_select %p263, %s18, 1
      %p265 = scmp.lt.s32.totalorder %s19, 1
      %s266 = scalar_select %p265, %s19, 1
      %s267 = smul.addr %s264, 2
      %s268 = sadd.s32 %s266, %s267
      %s269 = smul.addr %s268, 4
      %s270 = scalar_lea.vmem %s3, %s269
      %v272 = vld [vmem:[%s244] sm:$0x7]
      %v273 = vld [vmem:[%s252] sm:$0xf]
      %v274 = vld [vmem:[%s261] sm:$0xf]
      %275 = vmatprep.subr.bf16.mxu0 0
      %276 = vmatpush1.bf16.xpose.msra.mxu0 %v273
      %277 = vmatprep.subr.bf16.mxu0 0
      %278 = vmatpush1.bf16.xpose.msra.mxu0 0
      %279 = vmatprep.subr.bf16.mxu0 0
      %280 = vmatpush1.bf16.xpose.msra.mxu0 0
      %281 = vmatprep.subr.bf16.mxu0 0
      %282 = vmatpush1.bf16.xpose.msra.mxu0 0
      %283 = vmatprep.subr.bf16.mxu0 0
      %284 = vmatpush1.bf16.xpose.msra.mxu0 0
      %285 = vmatprep.subr.bf16.mxu0 0
      %286 = vmatpush1.bf16.xpose.msra.mxu0 0
      %287 = vmatprep.subr.bf16.mxu0 0
      %288 = vmatpush1.bf16.xpose.msra.mxu0 0
      %289 = vmatprep.subr.bf16.mxu0 0
      %290 = vmatpush1.bf16.xpose.msra.mxu0 0
      %291 = vmatprep.subr.bf16.mxu0 0
      %292 = vmatpush1.bf16.xpose.msra.mxu0 0
      %293 = vmatprep.subr.bf16.mxu0 0
      %294 = vmatpush1.bf16.xpose.msra.mxu0 0
      %295 = vmatprep.subr.bf16.mxu0 0
      %296 = vmatpush1.bf16.xpose.msra.mxu0 0
      %297 = vmatprep.subr.bf16.mxu0 0
      %298 = vmatpush1.bf16.xpose.msra.mxu0 0
      %299 = vmatprep.subr.bf16.mxu0 0
      %300 = vmatpush1.bf16.xpose.msra.mxu0 0
      %301 = vmatprep.subr.bf16.mxu0 0
      %302 = vmatpush1.bf16.xpose.msra.mxu0 0
      %303 = vmatprep.subr.bf16.mxu0 0
      %304 = vmatpush1.bf16.xpose.msra.mxu0 0
      %305 = vmatprep.subr.bf16.mxu0 0
      %306 = vmatpush1.bf16.xpose.msra.mxu0 0
      %307 = vmatprep.mubr.bf16.mxu0 0
      %308 = vmatmul.mubr.bf16.gmra.mrb[0].mxu0 %v272
      %v309 = vpop.f32.mrb[0].mxu0
      %v310 = vadd.f32 0.0, %v309
      %v311 = vpop.f32.mrb[0].mxu0
      %v312 = vpop.f32.mrb[0].mxu0
      %v313 = vpop.f32.mrb[0].mxu0
      %314 = vdwg.mxu0
      %vm315 = vcmask 61440
      %v316 = vsel %vm315, %v310, -inf
      %317 = vmax.xlane.f32.xlu0 %v316
      %v318 = vpop.xlane.xlu0 %317
      %v319 = vsub.f32 %v310, %v318
      %v320 = vmul.f32 %v319, 1.442695
      %v321 = vpow.pop %v320
      %v322 = vsel %vm315, %v321, 0.0
      %323 = vadd.xlane.f32.xlu0 %v322
      %v324 = vpop.xlane.xlu0 %323
      %v325 = vpack.c.bf16 %v321, %v321
      %vm326 = vcmask 64512
      %v328 = vsel %vm326, %v325, 0
      %vm330 = vcmask 1043456
      %v332 = vsel %vm330, %v274, 0
      %334 = vmatprep.subr.bf16.mxu0 0
      %335 = vmatpush1.bf16.msra.mxu0 %v332
      %336 = vmatprep.subr.bf16.mxu0 0
      %337 = vmatpush1.bf16.msra.mxu0 0
      %338 = vmatprep.subr.bf16.mxu0 0
      %339 = vmatpush1.bf16.msra.mxu0 0
      %340 = vmatprep.subr.bf16.mxu0 0
      %341 = vmatpush1.bf16.msra.mxu0 0
      %342 = vmatprep.subr.bf16.mxu0 0
      %343 = vmatpush1.bf16.msra.mxu0 0
      %344 = vmatprep.subr.bf16.mxu0 0
      %345 = vmatpush1.bf16.msra.mxu0 0
      %346 = vmatprep.subr.bf16.mxu0 0
      %347 = vmatpush1.bf16.msra.mxu0 0
      %348 = vmatprep.subr.bf16.mxu0 0
      %349 = vmatpush1.bf16.msra.mxu0 0
      %350 = vmatprep.subr.bf16.mxu0 0
      %351 = vmatpush1.bf16.msra.mxu0 0
      %352 = vmatprep.subr.bf16.mxu0 0
      %353 = vmatpush1.bf16.msra.mxu0 0
      %354 = vmatprep.subr.bf16.mxu0 0
      %355 = vmatpush1.bf16.msra.mxu0 0
      %356 = vmatprep.subr.bf16.mxu0 0
      %357 = vmatpush1.bf16.msra.mxu0 0
      %358 = vmatprep.subr.bf16.mxu0 0
      %359 = vmatpush1.bf16.msra.mxu0 0
      %360 = vmatprep.subr.bf16.mxu0 0
      %361 = vmatpush1.bf16.msra.mxu0 0
      %362 = vmatprep.subr.bf16.mxu0 0
      %363 = vmatpush1.bf16.msra.mxu0 0
      %364 = vmatprep.subr.bf16.mxu0 0
      %365 = vmatpush1.bf16.msra.mxu0 0
      %366 = vmatprep.mubr.bf16.mxu0 0
      %367 = vmatmul.mubr.bf16.gmra.mrb[0].mxu0 %v328
      %v368 = vpop.f32.mrb[0].mxu0
      %v369 = vadd.f32 0.0, %v368
      %v370 = vpop.f32.mrb[0].mxu0
      %v371 = vpop.f32.mrb[0].mxu0
      %v372 = vpop.f32.mrb[0].mxu0
      %373 = vdwg.mxu0
      %v374 = vrcp.pop %v324
      %v375 = vmul.f32 %v369, %v374
      %v376 = vpack.c.bf16 %v375, %v375
      %vm377 = vcmask 1042432
      %vm378 = vsmask.f32 2304
      %vm379 = vmand %vm377, %vm378
      %v380 = vld [vmem:[%s270] sm:$0x7]
      %v381 = vsel %vm379, %v376, %v380
      %382 = vst [vmem:[%s270] sm:$0x7] %v381
      %p383 = scmp.lt.s32.totalorder %s18, 1
      %s384 = scalar_select %p383, %s18, 1
      %p385 = scmp.lt.s32.totalorder %s19, 1
      %s386 = scalar_select %p385, %s19, 1
      %s387 = smul.addr %s384, 2
      %s388 = sadd.s32 %s386, %s387
      %s389 = smul.addr %s388, 4
      %s390 = scalar_lea.vmem %s3, %s389
      // Predicated region
      $region33: #{transformer_forward.40} parent=31 // pred_check
        %p391 = pneg %p132
      $region34: #{transformer_forward.40} parent=31 // pred_check_branch
        %393 = sbr.rel (%p391) target = $region36
      $region35: #{transformer_forward.40} parent=31 // pred_region
        _
      $region36: #{transformer_forward.40} parent=31 // pred_fallthru
        _
    $region32: #{transformer_forward.40} parent=5 // pred_fallthru
      _
    %p394 = scmp.le.s32.totalorder 2, %s9
    // Predicated region
    $region37: #{transformer_forward.40} parent=5 // pred_check
      %p395 = pneg %p394
    $region38: #{transformer_forward.40} parent=5 // pred_check_branch
      %397 = sbr.rel (%p395) target = $region40
    $region39: #{transformer_forward.40} parent=5 // pred_region
      %s398 = ssub.s32 %s9, 2
      // Predicated region
      $region41: #{transformer_forward.40} parent=39 // pred_check
        %p399 = pneg %p138
      $region42: #{transformer_forward.40} parent=39 // pred_check_branch
        %401 = sbr.rel (%p399) target = $region44
      $region43: #{transformer_forward.40} parent=39 // pred_region
        %p402 = scmp.lt.s32.totalorder %s20, 1
        %s403 = scalar_select %p402, %s20, 1
        %p404 = scmp.lt.s32.totalorder %s21, 1
        %s405 = scalar_select %p404, %s21, 1
        %s406 = smul.addr %s403, 2
        %s407 = sadd.s32 %s405, %s406
        %s408 = smul.addr %s407, 4
        %s409 = scalar_lea.vmem %s3, %s408
      $region44: #{transformer_forward.40} parent=39 // pred_fallthru
        _
    $region40: #{transformer_forward.40} parent=5 // pred_fallthru
      _
  $region6: #{transformer_forward.40} parent=0 // loop_footer
    %s13 = sadd.s32 1, %s9
  $region7: #{transformer_forward.40} parent=0 // loop_footer_branch
    %8 = sbr.rel target = $region3
  $region8: #{transformer_forward.40} parent=0 // loop_exit
    _

// kernel: transformer_forward.30
$region0: #{transformer_forward.30}
  #allocation0 [shape = 'u32[]', space=smem, size = 0x4, offset = 0x4, fixed_abs, tag = 'smem constant byte address 0x4 - core index']
  #allocation1 [shape = 'u32[144,128]{1,0:T(1,128)}', space=vmem, size = 0x12000, scoped, tag = 'internal scratch']
  #allocation2 [shape = 'f32[16,256]{1,0:T(8,128)}', space=vmem, size = 0x4000, scoped, tag = 'scratch operand']
  %s0 = inlined_call_operand.vmem [shape: f32[16,256], index: 0, kind: input, shape index: {}, may-alias: {0,5}]
  %s1 = inlined_call_operand.vmem [shape: bf16[256,512], index: 1, kind: input, shape index: {}]
  %s2 = inlined_call_operand.vmem [shape: f32[1,512], index: 2, kind: input, shape index: {}]
  %s3 = inlined_call_operand.vmem [shape: bf16[512,256], index: 3, kind: input, shape index: {}]
  %s4 = inlined_call_operand.vmem [shape: f32[1,256], index: 4, kind: input, shape index: {}]
  %s5 = inlined_call_operand.vmem [shape: f32[16,256], index: 5, kind: input, shape index: {}, may-alias: {0,5}]
  %s6 = inlined_call_operand.vmem [shape: f32[1,256], index: 6, kind: input, shape index: {}]
  %s7 = inlined_call_operand.vmem [shape: f32[1,256], index: 7, kind: input, shape index: {}]
  %s8 = inlined_call_operand.vmem [shape: f32[16,256], index: 8, kind: output, shape index: {}]
  %s9 = sld [smem:[#allocation0]]
  $region50: #{transformer_forward.30} parent=0
    _
  %s11 = ssub.s32 1, %s9
  %s12 = scalar_select 0, %s11, %s9
  // Predicated region
  $region2: #{transformer_forward.30} parent=0 // pred_check
    _
  $region3: #{transformer_forward.30} parent=0 // pred_check_branch
    %14 = sbr.rel (0) target = $region5
  $region4: #{transformer_forward.30} parent=0 // pred_region
    _
  $region5: #{transformer_forward.30} parent=0 // pred_fallthru
    _
  // Predicated region
  $region6: #{transformer_forward.30} parent=0 // pred_check
    _
  $region7: #{transformer_forward.30} parent=0 // pred_check_branch
    %16 = sbr.rel (0) target = $region9
  $region8: #{transformer_forward.30} parent=0 // pred_region
    _
  $region9: #{transformer_forward.30} parent=0 // pred_fallthru
    _
  // Predicated region
  $region10: #{transformer_forward.30} parent=0 // pred_check
    _
  $region11: #{transformer_forward.30} parent=0 // pred_check_branch
    %18 = sbr.rel (0) target = $region13
  $region12: #{transformer_forward.30} parent=0 // pred_region
    _
  $region13: #{transformer_forward.30} parent=0 // pred_fallthru
    _
  // Predicated region
  $region14: #{transformer_forward.30} parent=0 // pred_check
    _
  $region15: #{transformer_forward.30} parent=0 // pred_check_branch
    %20 = sbr.rel (0) target = $region17
  $region16: #{transformer_forward.30} parent=0 // pred_region
    _
  $region17: #{transformer_forward.30} parent=0 // pred_fallthru
    _
  // Predicated region
  $region18: #{transformer_forward.30} parent=0 // pred_check
    _
  $region19: #{transformer_forward.30} parent=0 // pred_check_branch
    %22 = sbr.rel (0) target = $region21
  $region20: #{transformer_forward.30} parent=0 // pred_region
    _
  $region21: #{transformer_forward.30} parent=0 // pred_fallthru
    _
  // Predicated region
  $region22: #{transformer_forward.30} parent=0 // pred_check
    _
  $region23: #{transformer_forward.30} parent=0 // pred_check_branch
    %24 = sbr.rel (0) target = $region25
  $region24: #{transformer_forward.30} parent=0 // pred_region
    _
  $region25: #{transformer_forward.30} parent=0 // pred_fallthru
    _
  // Predicated region
  $region26: #{transformer_forward.30} parent=0 // pred_check
    _
  $region27: #{transformer_forward.30} parent=0 // pred_check_branch
    %26 = sbr.rel (0) target = $region29
  $region28: #{transformer_forward.30} parent=0 // pred_region
    _
  $region29: #{transformer_forward.30} parent=0 // pred_fallthru
    _
  // Predicated region
  $region30: #{transformer_forward.30} parent=0 // pred_check
    _
  $region31: #{transformer_forward.30} parent=0 // pred_check_branch
    %28 = sbr.rel (0) target = $region33
  $region32: #{transformer_forward.30} parent=0 // pred_region
    _
  $region33: #{transformer_forward.30} parent=0 // pred_fallthru
    _
  %p29 = scmp.eq.s32.totalorder 0, 0
  // Predicated region
  $region34: #{transformer_forward.30} parent=0 // pred_check
    %p30 = pneg %p29
  $region35: #{transformer_forward.30} parent=0 // pred_check_branch
    %32 = sbr.rel (%p30) target = $region37
  $region36: #{transformer_forward.30} parent=0 // pred_region
    %33 = vst [vmem:[#allocation2] sm:$0xff] 0.0
    %34 = vst [vmem:[#allocation2 + $0x8] sm:$0xff] 0.0
    %35 = vst [vmem:[#allocation2 + $0x10] sm:$0xff] 0.0
    %36 = vst [vmem:[#allocation2 + $0x18] sm:$0xff] 0.0
  $region37: #{transformer_forward.30} parent=0 // pred_fallthru
    _
  %v37 = vld [vmem:[%s0] sm:$0xff]
  %v38 = vld [vmem:[%s0 + $0x8] sm:$0xff]
  %v39 = vld [vmem:[%s0 + $0x10] sm:$0xff]
  %v40 = vld [vmem:[%s0 + $0x18] sm:$0xff]
  %v41 = vpack.c.bf16 %v39, %v37
  %v42 = vpack.c.bf16 %v40, %v38
  %v43 = vld [vmem:[%s1] sm:$0xff]
  %v44 = vld [vmem:[%s1 + $0x8] sm:$0xff]
  %v45 = vld [vmem:[%s1 + $0x10] sm:$0xff]
  %v46 = vld [vmem:[%s1 + $0x18] sm:$0xff]
  %v47 = vld [vmem:[%s1 + $0x20] sm:$0xff]
  %v48 = vld [vmem:[%s1 + $0x28] sm:$0xff]
  %v49 = vld [vmem:[%s1 + $0x30] sm:$0xff]
  %v50 = vld [vmem:[%s1 + $0x38] sm:$0xff]
  %v51 = vld [vmem:[%s1 + $0x40] sm:$0xff]
  %v52 = vld [vmem:[%s1 + $0x48] sm:$0xff]
  %v53 = vld [vmem:[%s1 + $0x50] sm:$0xff]
  %v54 = vld [vmem:[%s1 + $0x58] sm:$0xff]
  %v55 = vld [vmem:[%s1 + $0x60] sm:$0xff]
  %v56 = vld [vmem:[%s1 + $0x68] sm:$0xff]
  %v57 = vld [vmem:[%s1 + $0x70] sm:$0xff]
  %v58 = vld [vmem:[%s1 + $0x78] sm:$0xff]
  %v59 = vld [vmem:[%s1 + $0x80] sm:$0xff]
  %v60 = vld [vmem:[%s1 + $0x88] sm:$0xff]
  %v61 = vld [vmem:[%s1 + $0x90] sm:$0xff]
  %v62 = vld [vmem:[%s1 + $0x98] sm:$0xff]
  %v63 = vld [vmem:[%s1 + $0xa0] sm:$0xff]
  %v64 = vld [vmem:[%s1 + $0xa8] sm:$0xff]
  %v65 = vld [vmem:[%s1 + $0xb0] sm:$0xff]
  %v66 = vld [vmem:[%s1 + $0xb8] sm:$0xff]
  %v67 = vld [vmem:[%s1 + $0xc0] sm:$0xff]
  %v68 = vld [vmem:[%s1 + $0xc8] sm:$0xff]
  %v69 = vld [vmem:[%s1 + $0xd0] sm:$0xff]
  %v70 = vld [vmem:[%s1 + $0xd8] sm:$0xff]
  %v71 = vld [vmem:[%s1 + $0xe0] sm:$0xff]
  %v72 = vld [vmem:[%s1 + $0xe8] sm:$0xff]
  %v73 = vld [vmem:[%s1 + $0xf0] sm:$0xff]
  %v74 = vld [vmem:[%s1 + $0xf8] sm:$0xff]
  %v75 = vld [vmem:[%s1 + $0x100] sm:$0xff]
  %v76 = vld [vmem:[%s1 + $0x108] sm:$0xff]
  %v77 = vld [vmem:[%s1 + $0x110] sm:$0xff]
  %v78 = vld [vmem:[%s1 + $0x118] sm:$0xff]
  %v79 = vld [vmem:[%s1 + $0x120] sm:$0xff]
  %v80 = vld [vmem:[%s1 + $0x128] sm:$0xff]
  %v81 = vld [vmem:[%s1 + $0x130] sm:$0xff]
  %v82 = vld [vmem:[%s1 + $0x138] sm:$0xff]
  %v83 = vld [vmem:[%s1 + $0x140] sm:$0xff]
  %v84 = vld [vmem:[%s1 + $0x148] sm:$0xff]
  %v85 = vld [vmem:[%s1 + $0x150] sm:$0xff]
  %v86 = vld [vmem:[%s1 + $0x158] sm:$0xff]
  %v87 = vld [vmem:[%s1 + $0x160] sm:$0xff]
  %v88 = vld [vmem:[%s1 + $0x168] sm:$0xff]
  %v89 = vld [vmem:[%s1 + $0x170] sm:$0xff]
  %v90 = vld [vmem:[%s1 + $0x178] sm:$0xff]
  %v91 = vld [vmem:[%s1 + $0x180] sm:$0xff]
  %v92 = vld [vmem:[%s1 + $0x188] sm:$0xff]
  %v93 = vld [vmem:[%s1 + $0x190] sm:$0xff]
  %v94 = vld [vmem:[%s1 + $0x198] sm:$0xff]
  %v95 = vld [vmem:[%s1 + $0x1a0] sm:$0xff]
  %v96 = vld [vmem:[%s1 + $0x1a8] sm:$0xff]
  %v97 = vld [vmem:[%s1 + $0x1b0] sm:$0xff]
  %v98 = vld [vmem:[%s1 + $0x1b8] sm:$0xff]
  %v99 = vld [vmem:[%s1 + $0x1c0] sm:$0xff]
  %v100 = vld [vmem:[%s1 + $0x1c8] sm:$0xff]
  %v101 = vld [vmem:[%s1 + $0x1d0] sm:$0xff]
  %v102 = vld [vmem:[%s1 + $0x1d8] sm:$0xff]
  %v103 = vld [vmem:[%s1 + $0x1e0] sm:$0xff]
  %v104 = vld [vmem:[%s1 + $0x1e8] sm:$0xff]
  %v105 = vld [vmem:[%s1 + $0x1f0] sm:$0xff]
  %v106 = vld [vmem:[%s1 + $0x1f8] sm:$0xff]
  %v107 = vld [vmem:[%s2] sm:$0xf]
  %v109 = vlaneseq
  %v110 = vshrl.u32 %v109, 7
  %v111 = vsub.s32 0, %v110
  %v112 = vrot.slane %v107, %v111
  %v113 = vlaneseq
  %v114 = vshrl.u32 %v113, 7
  %v115 = vsub.s32 1, %v114
  %v116 = vrot.slane %v107, %v115
  %v117 = vlaneseq
  %v118 = vshrl.u32 %v117, 7
  %v119 = vsub.s32 2, %v118
  %v120 = vrot.slane %v107, %v119
  %v121 = vlaneseq
  %v122 = vshrl.u32 %v121, 7
  %v123 = vsub.s32 3, %v122
  %v124 = vrot.slane %v107, %v123
  %v193 = vunpack.c.l.b16 %v43
  %v194 = vunpack.c.h.b16 %v43
  %v195 = vunpack.c.l.b16 %v44
  %v196 = vunpack.c.h.b16 %v44
  %v197 = vunpack.c.l.b16 %v45
  %v198 = vunpack.c.h.b16 %v45
  %v199 = vunpack.c.l.b16 %v46
  %v200 = vunpack.c.h.b16 %v46
  %v201 = vunpack.c.l.b16 %v47
  %v202 = vunpack.c.h.b16 %v47
  %v203 = vunpack.c.l.b16 %v48
  %v204 = vunpack.c.h.b16 %v48
  %v205 = vunpack.c.l.b16 %v49
  %v206 = vunpack.c.h.b16 %v49
  %v207 = vunpack.c.l.b16 %v50
  %v208 = vunpack.c.h.b16 %v50
  %v209 = vunpack.c.l.b16 %v51
  %v210 = vunpack.c.h.b16 %v51
  %v211 = vunpack.c.l.b16 %v52
  %v212 = vunpack.c.h.b16 %v52
  %v213 = vunpack.c.l.b16 %v53
  %v214 = vunpack.c.h.b16 %v53
  %v215 = vunpack.c.l.b16 %v54
  %v216 = vunpack.c.h.b16 %v54
  %v217 = vunpack.c.l.b16 %v55
  %v218 = vunpack.c.h.b16 %v55
  %v219 = vunpack.c.l.b16 %v56
  %v220 = vunpack.c.h.b16 %v56
  %v221 = vunpack.c.l.b16 %v57
  %v222 = vunpack.c.h.b16 %v57
  %v223 = vunpack.c.l.b16 %v58
  %v224 = vunpack.c.h.b16 %v58
  %v225 = vunpack.c.l.b16 %v59
  %v226 = vunpack.c.h.b16 %v59
  %v227 = vunpack.c.l.b16 %v60
  %v228 = vunpack.c.h.b16 %v60
  %v229 = vunpack.c.l.b16 %v61
  %v230 = vunpack.c.h.b16 %v61
  %v231 = vunpack.c.l.b16 %v62
  %v232 = vunpack.c.h.b16 %v62
  %v233 = vunpack.c.l.b16 %v63
  %v234 = vunpack.c.h.b16 %v63
  %v235 = vunpack.c.l.b16 %v64
  %v236 = vunpack.c.h.b16 %v64
  %v237 = vunpack.c.l.b16 %v65
  %v238 = vunpack.c.h.b16 %v65
  %v239 = vunpack.c.l.b16 %v66
  %v240 = vunpack.c.h.b16 %v66
  %v241 = vunpack.c.l.b16 %v67
  %v242 = vunpack.c.h.b16 %v67
  %v243 = vunpack.c.l.b16 %v68
  %v244 = vunpack.c.h.b16 %v68
  %v245 = vunpack.c.l.b16 %v69
  %v246 = vunpack.c.h.b16 %v69
  %v247 = vunpack.c.l.b16 %v70
  %v248 = vunpack.c.h.b16 %v70
  %v249 = vunpack.c.l.b16 %v71
  %v250 = vunpack.c.h.b16 %v71
  %v251 = vunpack.c.l.b16 %v72
  %v252 = vunpack.c.h.b16 %v72
  %v253 = vunpack.c.l.b16 %v73
  %v254 = vunpack.c.h.b16 %v73
  %v255 = vunpack.c.l.b16 %v74
  %v256 = vunpack.c.h.b16 %v74
  %v257 = vunpack.c.l.b16 %v75
  %v258 = vunpack.c.h.b16 %v75
  %v259 = vunpack.c.l.b16 %v76
  %v260 = vunpack.c.h.b16 %v76
  %v261 = vunpack.c.l.b16 %v77
  %v262 = vunpack.c.h.b16 %v77
  %v263 = vunpack.c.l.b16 %v78
  %v264 = vunpack.c.h.b16 %v78
  %v265 = vunpack.c.l.b16 %v79
  %v266 = vunpack.c.h.b16 %v79
  %v267 = vunpack.c.l.b16 %v80
  %v268 = vunpack.c.h.b16 %v80
  %v269 = vunpack.c.l.b16 %v81
  %v270 = vunpack.c.h.b16 %v81
  %v271 = vunpack.c.l.b16 %v82
  %v272 = vunpack.c.h.b16 %v82
  %v273 = vunpack.c.l.b16 %v83
  %v274 = vunpack.c.h.b16 %v83
  %v275 = vunpack.c.l.b16 %v84
  %v276 = vunpack.c.h.b16 %v84
  %v277 = vunpack.c.l.b16 %v85
  %v278 = vunpack.c.h.b16 %v85
  %v279 = vunpack.c.l.b16 %v86
  %v280 = vunpack.c.h.b16 %v86
  %v281 = vunpack.c.l.b16 %v87
  %v282 = vunpack.c.h.b16 %v87
  %v283 = vunpack.c.l.b16 %v88
  %v284 = vunpack.c.h.b16 %v88
  %v285 = vunpack.c.l.b16 %v89
  %v286 = vunpack.c.h.b16 %v89
  %v287 = vunpack.c.l.b16 %v90
  %v288 = vunpack.c.h.b16 %v90
  %v289 = vunpack.c.l.b16 %v91
  %v290 = vunpack.c.h.b16 %v91
  %v291 = vunpack.c.l.b16 %v92
  %v292 = vunpack.c.h.b16 %v92
  %v293 = vunpack.c.l.b16 %v93
  %v294 = vunpack.c.h.b16 %v93
  %v295 = vunpack.c.l.b16 %v94
  %v296 = vunpack.c.h.b16 %v94
  %v297 = vunpack.c.l.b16 %v95
  %v298 = vunpack.c.h.b16 %v95
  %v299 = vunpack.c.l.b16 %v96
  %v300 = vunpack.c.h.b16 %v96
  %v301 = vunpack.c.l.b16 %v97
  %v302 = vunpack.c.h.b16 %v97
  %v303 = vunpack.c.l.b16 %v98
  %v304 = vunpack.c.h.b16 %v98
  %v305 = vunpack.c.l.b16 %v99
  %v306 = vunpack.c.h.b16 %v99
  %v307 = vunpack.c.l.b16 %v100
  %v308 = vunpack.c.h.b16 %v100
  %v309 = vunpack.c.l.b16 %v101
  %v310 = vunpack.c.h.b16 %v101
  %v311 = vunpack.c.l.b16 %v102
  %v312 = vunpack.c.h.b16 %v102
  %v313 = vunpack.c.l.b16 %v103
  %v314 = vunpack.c.h.b16 %v103
  %v315 = vunpack.c.l.b16 %v104
  %v316 = vunpack.c.h.b16 %v104
  %v317 = vunpack.c.l.b16 %v105
  %v318 = vunpack.c.h.b16 %v105
  %v319 = vunpack.c.l.b16 %v106
  %v320 = vunpack.c.h.b16 %v106
  %v321 = vpack.c.b16 %v197, %v193
  %v322 = vpack.c.b16 %v198, %v194
  %v323 = vpack.c.b16 %v199, %v195
  %v324 = vpack.c.b16 %v200, %v196
  %v325 = vpack.c.b16 %v205, %v201
  %v326 = vpack.c.b16 %v206, %v202
  %v327 = vpack.c.b16 %v207, %v203
  %v328 = vpack.c.b16 %v208, %v204
  %v329 = vpack.c.b16 %v213, %v209
  %v330 = vpack.c.b16 %v214, %v210
  %v331 = vpack.c.b16 %v215, %v211
  %v332 = vpack.c.b16 %v216, %v212
  %v333 = vpack.c.b16 %v221, %v217
  %v334 = vpack.c.b16 %v222, %v218
  %v335 = vpack.c.b16 %v223, %v219
  %v336 = vpack.c.b16 %v224, %v220
  %v337 = vpack.c.b16 %v229, %v225
  %v338 = vpack.c.b16 %v230, %v226
  %v339 = vpack.c.b16 %v231, %v227
  %v340 = vpack.c.b16 %v232, %v228
  %v341 = vpack.c.b16 %v237, %v233
  %v342 = vpack.c.b16 %v238, %v234
  %v343 = vpack.c.b16 %v239, %v235
  %v344 = vpack.c.b16 %v240, %v236
  %v345 = vpack.c.b16 %v245, %v241
  %v346 = vpack.c.b16 %v246, %v242
  %v347 = vpack.c.b16 %v247, %v243
  %v348 = vpack.c.b16 %v248, %v244
  %v349 = vpack.c.b16 %v253, %v249
  %v350 = vpack.c.b16 %v254, %v250
  %v351 = vpack.c.b16 %v255, %v251
  %v352 = vpack.c.b16 %v256, %v252
  %v353 = vpack.c.b16 %v261, %v257
  %v354 = vpack.c.b16 %v262, %v258
  %v355 = vpack.c.b16 %v263, %v259
  %v356 = vpack.c.b16 %v264, %v260
  %v357 = vpack.c.b16 %v269, %v265
  %v358 = vpack.c.b16 %v270, %v266
  %v359 = vpack.c.b16 %v271, %v267
  %v360 = vpack.c.b16 %v272, %v268
  %v361 = vpack.c.b16 %v277, %v273
  %v362 = vpack.c.b16 %v278, %v274
  %v363 = vpack.c.b16 %v279, %v275
  %v364 = vpack.c.b16 %v280, %v276
  %v365 = vpack.c.b16 %v285, %v281
  %v366 = vpack.c.b16 %v286, %v282
  %v367 = vpack.c.b16 %v287, %v283
  %v368 = vpack.c.b16 %v288, %v284
  %v369 = vpack.c.b16 %v293, %v289
  %v370 = vpack.c.b16 %v294, %v290
  %v371 = vpack.c.b16 %v295, %v291
  %v372 = vpack.c.b16 %v296, %v292
  %v373 = vpack.c.b16 %v301, %v297
  %v374 = vpack.c.b16 %v302, %v298
  %v375 = vpack.c.b16 %v303, %v299
  %v376 = vpack.c.b16 %v304, %v300
  %v377 = vpack.c.b16 %v309, %v305
  %v378 = vpack.c.b16 %v310, %v306
  %v379 = vpack.c.b16 %v311, %v307
  %v380 = vpack.c.b16 %v312, %v308
  %v381 = vpack.c.b16 %v317, %v313
  %v382 = vpack.c.b16 %v318, %v314
  %v383 = vpack.c.b16 %v319, %v315
  %v384 = vpack.c.b16 %v320, %v316
  %449 = vmatprep.subr.bf16.mxu0 %v322
  %450 = vmatpush1.bf16.msra.mxu0 %v321
  %451 = vmatprep.subr.bf16.mxu0 %v326
  %452 = vmatpush1.bf16.msra.mxu0 %v325
  %453 = vmatprep.subr.bf16.mxu0 %v330
  %454 = vmatpush1.bf16.msra.mxu0 %v329
  %455 = vmatprep.subr.bf16.mxu0 %v334
  %456 = vmatpush1.bf16.msra.mxu0 %v333
  %457 = vmatprep.subr.bf16.mxu0 %v338
  %458 = vmatpush1.bf16.msra.mxu0 %v337
  %459 = vmatprep.subr.bf16.mxu0 %v342
  %460 = vmatpush1.bf16.msra.mxu0 %v341
  %461 = vmatprep.subr.bf16.mxu0 %v346
  %462 = vmatpush1.bf16.msra.mxu0 %v345
  %463 = vmatprep.subr.bf16.mxu0 %v350
  %464 = vmatpush1.bf16.msra.mxu0 %v349
  %465 = vmatprep.subr.bf16.mxu0 %v354
  %466 = vmatpush1.bf16.msra.mxu0 %v353
  %467 = vmatprep.subr.bf16.mxu0 %v358
  %468 = vmatpush1.bf16.msra.mxu0 %v357
  %469 = vmatprep.subr.bf16.mxu0 %v362
  %470 = vmatpush1.bf16.msra.mxu0 %v361
  %471 = vmatprep.subr.bf16.mxu0 %v366
  %472 = vmatpush1.bf16.msra.mxu0 %v365
  %473 = vmatprep.subr.bf16.mxu0 %v370
  %474 = vmatpush1.bf16.msra.mxu0 %v369
  %475 = vmatprep.subr.bf16.mxu0 %v374
  %476 = vmatpush1.bf16.msra.mxu0 %v373
  %477 = vmatprep.subr.bf16.mxu0 %v378
  %478 = vmatpush1.bf16.msra.mxu0 %v377
  %479 = vmatprep.subr.bf16.mxu0 %v382
  %480 = vmatpush1.bf16.msra.mxu0 %v381
  %481 = vmatprep.mubr.bf16.mxu0 %v42
  %482 = vmatmul.mubr.bf16.gmra.mrb[0].mxu0 %v41
  %v483 = vpop.f32.mrb[0].mxu0
  %v484 = vadd.f32 %v112, %v483
  %v485 = vpop.f32.mrb[0].mxu0
  %v486 = vadd.f32 %v116, %v485
  %v487 = vpop.f32.mrb[0].mxu0
  %v488 = vadd.f32 %v112, %v487
  %v489 = vpop.f32.mrb[0].mxu0
  %v490 = vadd.f32 %v116, %v489
  %491 = vdwg.mxu0
  %492 = vmatprep.subr.bf16.mxu0 %v324
  %493 = vmatpush1.bf16.msra.mxu0 %v323
  %494 = vmatprep.subr.bf16.mxu0 %v328
  %495 = vmatpush1.bf16.msra.mxu0 %v327
  %496 = vmatprep.subr.bf16.mxu0 %v332
  %497 = vmatpush1.bf16.msra.mxu0 %v331
  %498 = vmatprep.subr.bf16.mxu0 %v336
  %499 = vmatpush1.bf16.msra.mxu0 %v335
  %500 = vmatprep.subr.bf16.mxu0 %v340
  %501 = vmatpush1.bf16.msra.mxu0 %v339
  %502 = vmatprep.subr.bf16.mxu0 %v344
  %503 = vmatpush1.bf16.msra.mxu0 %v343
  %504 = vmatprep.subr.bf16.mxu0 %v348
  %505 = vmatpush1.bf16.msra.mxu0 %v347
  %506 = vmatprep.subr.bf16.mxu0 %v352
  %507 = vmatpush1.bf16.msra.mxu0 %v351
  %508 = vmatprep.subr.bf16.mxu0 %v356
  %509 = vmatpush1.bf16.msra.mxu0 %v355
  %510 = vmatprep.subr.bf16.mxu0 %v360
  %511 = vmatpush1.bf16.msra.mxu0 %v359
  %512 = vmatprep.subr.bf16.mxu0 %v364
  %513 = vmatpush1.bf16.msra.mxu0 %v363
  %514 = vmatprep.subr.bf16.mxu0 %v368
  %515 = vmatpush1.bf16.msra.mxu0 %v367
  %516 = vmatprep.subr.bf16.mxu0 %v372
  %517 = vmatpush1.bf16.msra.mxu0 %v371
  %518 = vmatprep.subr.bf16.mxu0 %v376
  %519 = vmatpush1.bf16.msra.mxu0 %v375
  %520 = vmatprep.subr.bf16.mxu0 %v380
  %521 = vmatpush1.bf16.msra.mxu0 %v379
  %522 = vmatprep.subr.bf16.mxu0 %v384
  %523 = vmatpush1.bf16.msra.mxu0 %v383
  %524 = vmatprep.mubr.bf16.mxu0 %v42
  %525 = vmatmul.mubr.bf16.gmra.mrb[0].mxu0 %v41
  %v526 = vpop.f32.mrb[0].mxu0
  %v527 = vadd.f32 %v120, %v526
  %v528 = vpop.f32.mrb[0].mxu0
  %v529 = vadd.f32 %v124, %v528
  %v530 = vpop.f32.mrb[0].mxu0
  %v531 = vadd.f32 %v120, %v530
  %v532 = vpop.f32.mrb[0].mxu0
  %v533 = vadd.f32 %v124, %v532
  %534 = vdwg.mxu0
  %v535 = vmax.f32 %v484, 0.0
  %v536 = vmax.f32 %v486, 0.0
  %v537 = vmax.f32 %v527, 0.0
  %v538 = vmax.f32 %v529, 0.0
  %v539 = vmax.f32 %v488, 0.0
  %v540 = vmax.f32 %v490, 0.0
  %v541 = vmax.f32 %v531, 0.0
  %v542 = vmax.f32 %v533, 0.0
  %v543 = vld [vmem:[#allocation2] sm:$0xff]
  %v544 = vld [vmem:[#allocation2 + $0x8] sm:$0xff]
  %v545 = vld [vmem:[#allocation2 + $0x10] sm:$0xff]
  %v546 = vld [vmem:[#allocation2 + $0x18] sm:$0xff]
  %v547 = vpack.c.bf16 %v539, %v535
  %v548 = vpack.c.bf16 %v540, %v536
  %v549 = vpack.c.bf16 %v541, %v537
  %v550 = vpack.c.bf16 %v542, %v538
  %v551 = vld [vmem:[%s3] sm:$0xff]
  %v552 = vld [vmem:[%s3 + $0x8] sm:$0xff]
  %v553 = vld [vmem:[%s3 + $0x10] sm:$0xff]
  %v554 = vld [vmem:[%s3 + $0x18] sm:$0xff]
  %v555 = vld [vmem:[%s3 + $0x20] sm:$0xff]
  %v556 = vld [vmem:[%s3 + $0x28] sm:$0xff]
  %v557 = vld [vmem:[%s3 + $0x30] sm:$0xff]
  %v558 = vld [vmem:[%s3 + $0x38] sm:$0xff]
  %v559 = vld [vmem:[%s3 + $0x40] sm:$0xff]
  %v560 = vld [vmem:[%s3 + $0x48] sm:$0xff]
  %v561 = vld [vmem:[%s3 + $0x50] sm:$0xff]
  %v562 = vld [vmem:[%s3 + $0x58] sm:$0xff]
  %v563 = vld [vmem:[%s3 + $0x60] sm:$0xff]
  %v564 = vld [vmem:[%s3 + $0x68] sm:$0xff]
  %v565 = vld [vmem:[%s3 + $0x70] sm:$0xff]
  %v566 = vld [vmem:[%s3 + $0x78] sm:$0xff]
  %v567 = vld [vmem:[%s3 + $0x80] sm:$0xff]
  %v568 = vld [vmem:[%s3 + $0x88] sm:$0xff]
  %v569 = vld [vmem:[%s3 + $0x90] sm:$0xff]
  %v570 = vld [vmem:[%s3 + $0x98] sm:$0xff]
  %v571 = vld [vmem:[%s3 + $0xa0] sm:$0xff]
  %v572 = vld [vmem:[%s3 + $0xa8] sm:$0xff]
  %v573 = vld [vmem:[%s3 + $0xb0] sm:$0xff]
  %v574 = vld [vmem:[%s3 + $0xb8] sm:$0xff]
  %v575 = vld [vmem:[%s3 + $0xc0] sm:$0xff]
  %v576 = vld [vmem:[%s3 + $0xc8] sm:$0xff]
  %v577 = vld [vmem:[%s3 + $0xd0] sm:$0xff]
  %v578 = vld [vmem:[%s3 + $0xd8] sm:$0xff]
  %v579 = vld [vmem:[%s3 + $0xe0] sm:$0xff]
  %v580 = vld [vmem:[%s3 + $0xe8] sm:$0xff]
  %v581 = vld [vmem:[%s3 + $0xf0] sm:$0xff]
  %v582 = vld [vmem:[%s3 + $0xf8] sm:$0xff]
  %v583 = vld [vmem:[%s3 + $0x100] sm:$0xff]
  %v584 = vld [vmem:[%s3 + $0x108] sm:$0xff]
  %v585 = vld [vmem:[%s3 + $0x110] sm:$0xff]
  %v586 = vld [vmem:[%s3 + $0x118] sm:$0xff]
  %v587 = vld [vmem:[%s3 + $0x120] sm:$0xff]
  %v588 = vld [vmem:[%s3 + $0x128] sm:$0xff]
  %v589 = vld [vmem:[%s3 + $0x130] sm:$0xff]
  %v590 = vld [vmem:[%s3 + $0x138] sm:$0xff]
  %v591 = vld [vmem:[%s3 + $0x140] sm:$0xff]
  %v592 = vld [vmem:[%s3 + $0x148] sm:$0xff]
  %v593 = vld [vmem:[%s3 + $0x150] sm:$0xff]
  %v594 = vld [vmem:[%s3 + $0x158] sm:$0xff]
  %v595 = vld [vmem:[%s3 + $0x160] sm:$0xff]
  %v596 = vld [vmem:[%s3 + $0x168] sm:$0xff]
  %v597 = vld [vmem:[%s3 + $0x170] sm:$0xff]
  %v598 = vld [vmem:[%s3 + $0x178] sm:$0xff]
  %v599 = vld [vmem:[%s3 + $0x180] sm:$0xff]
  %v600 = vld [vmem:[%s3 + $0x188] sm:$0xff]
  %v601 = vld [vmem:[%s3 + $0x190] sm:$0xff]
  %v602 = vld [vmem:[%s3 + $0x198] sm:$0xff]
  %v603 = vld [vmem:[%s3 + $0x1a0] sm:$0xff]
  %v604 = vld [vmem:[%s3 + $0x1a8] sm:$0xff]
  %v605 = vld [vmem:[%s3 + $0x1b0] sm:$0xff]
  %v606 = vld [vmem:[%s3 + $0x1b8] sm:$0xff]
  %v607 = vld [vmem:[%s3 + $0x1c0] sm:$0xff]
  %v608 = vld [vmem:[%s3 + $0x1c8] sm:$0xff]
  %v609 = vld [vmem:[%s3 + $0x1d0] sm:$0xff]
  %v610 = vld [vmem:[%s3 + $0x1d8] sm:$0xff]
  %v611 = vld [vmem:[%s3 + $0x1e0] sm:$0xff]
  %v612 = vld [vmem:[%s3 + $0x1e8] sm:$0xff]
  %v613 = vld [vmem:[%s3 + $0x1f0] sm:$0xff]
  %v614 = vld [vmem:[%s3 + $0x1f8] sm:$0xff]
  %v679 = vunpack.c.l.b16 %v551
  %v680 = vunpack.c.h.b16 %v551
  %v681 = vunpack.c.l.b16 %v552
  %v682 = vunpack.c.h.b16 %v552
  %v683 = vunpack.c.l.b16 %v553
  %v684 = vunpack.c.h.b16 %v553
  %v685 = vunpack.c.l.b16 %v554
  %v686 = vunpack.c.h.b16 %v554
  %v687 = vunpack.c.l.b16 %v555
  %v688 = vunpack.c.h.b16 %v555
  %v689 = vunpack.c.l.b16 %v556
  %v690 = vunpack.c.h.b16 %v556
  %v691 = vunpack.c.l.b16 %v557
  %v692 = vunpack.c.h.b16 %v557
  %v693 = vunpack.c.l.b16 %v558
  %v694 = vunpack.c.h.b16 %v558
  %v695 = vunpack.c.l.b16 %v559
  %v696 = vunpack.c.h.b16 %v559
  %v697 = vunpack.c.l.b16 %v560
  %v698 = vunpack.c.h.b16 %v560
  %v699 = vunpack.c.l.b16 %v561
  %v700 = vunpack.c.h.b16 %v561
  %v701 = vunpack.c.l.b16 %v562
  %v702 = vunpack.c.h.b16 %v562
  %v703 = vunpack.c.l.b16 %v563
  %v704 = vunpack.c.h.b16 %v563
  %v705 = vunpack.c.l.b16 %v564
  %v706 = vunpack.c.h.b16 %v564
  %v707 = vunpack.c.l.b16 %v565
  %v708 = vunpack.c.h.b16 %v565
  %v709 = vunpack.c.l.b16 %v566
  %v710 = vunpack.c.h.b16 %v566
  %v711 = vunpack.c.l.b16 %v567
  %v712 = vunpack.c.h.b16 %v567
  %v713 = vunpack.c.l.b16 %v568
  %v714 = vunpack.c.h.b16 %v568
  %v715 = vunpack.c.l.b16 %v569
  %v716 = vunpack.c.h.b16 %v569
  %v717 = vunpack.c.l.b16 %v570
  %v718 = vunpack.c.h.b16 %v570
  %v719 = vunpack.c.l.b16 %v571
  %v720 = vunpack.c.h.b16 %v571
  %v721 = vunpack.c.l.b16 %v572
  %v722 = vunpack.c.h.b16 %v572
  %v723 = vunpack.c.l.b16 %v573
  %v724 = vunpack.c.h.b16 %v573
  %v725 = vunpack.c.l.b16 %v574
  %v726 = vunpack.c.h.b16 %v574
  %v727 = vunpack.c.l.b16 %v575
  %v728 = vunpack.c.h.b16 %v575
  %v729 = vunpack.c.l.b16 %v576
  %v730 = vunpack.c.h.b16 %v576
  %v731 = vunpack.c.l.b16 %v577
  %v732 = vunpack.c.h.b16 %v577
  %v733 = vunpack.c.l.b16 %v578
  %v734 = vunpack.c.h.b16 %v578
  %v735 = vunpack.c.l.b16 %v579
  %v736 = vunpack.c.h.b16 %v579
  %v737 = vunpack.c.l.b16 %v580
  %v738 = vunpack.c.h.b16 %v580
  %v739 = vunpack.c.l.b16 %v581
  %v740 = vunpack.c.h.b16 %v581
  %v741 = vunpack.c.l.b16 %v582
  %v742 = vunpack.c.h.b16 %v582
  %v743 = vunpack.c.l.b16 %v583
  %v744 = vunpack.c.h.b16 %v583
  %v745 = vunpack.c.l.b16 %v584
  %v746 = vunpack.c.h.b16 %v584
  %v747 = vunpack.c.l.b16 %v585
  %v748 = vunpack.c.h.b16 %v585
  %v749 = vunpack.c.l.b16 %v586
  %v750 = vunpack.c.h.b16 %v586
  %v751 = vunpack.c.l.b16 %v587
  %v752 = vunpack.c.h.b16 %v587
  %v753 = vunpack.c.l.b16 %v588
  %v754 = vunpack.c.h.b16 %v588
  %v755 = vunpack.c.l.b16 %v589
  %v756 = vunpack.c.h.b16 %v589
  %v757 = vunpack.c.l.b16 %v590
  %v758 = vunpack.c.h.b16 %v590
  %v759 = vunpack.c.l.b16 %v591
  %v760 = vunpack.c.h.b16 %v591
  %v761 = vunpack.c.l.b16 %v592
  %v762 = vunpack.c.h.b16 %v592
  %v763 = vunpack.c.l.b16 %v593
  %v764 = vunpack.c.h.b16 %v593
  %v765 = vunpack.c.l.b16 %v594
  %v766 = vunpack.c.h.b16 %v594
  %v767 = vunpack.c.l.b16 %v595
  %v768 = vunpack.c.h.b16 %v595
  %v769 = vunpack.c.l.b16 %v596
  %v770 = vunpack.c.h.b16 %v596
  %v771 = vunpack.c.l.b16 %v597
  %v772 = vunpack.c.h.b16 %v597
  %v773 = vunpack.c.l.b16 %v598
  %v774 = vunpack.c.h.b16 %v598
  %v775 = vunpack.c.l.b16 %v599
  %v776 = vunpack.c.h.b16 %v599
  %v777 = vunpack.c.l.b16 %v600
  %v778 = vunpack.c.h.b16 %v600
  %v779 = vunpack.c.l.b16 %v601
  %v780 = vunpack.c.h.b16 %v601
  %v781 = vunpack.c.l.b16 %v602
  %v782 = vunpack.c.h.b16 %v602
  %v783 = vunpack.c.l.b16 %v603
  %v784 = vunpack.c.h.b16 %v603
  %v785 = vunpack.c.l.b16 %v604
  %v786 = vunpack.c.h.b16 %v604
  %v787 = vunpack.c.l.b16 %v605
  %v788 = vunpack.c.h.b16 %v605
  %v789 = vunpack.c.l.b16 %v606
  %v790 = vunpack.c.h.b16 %v606
  %v791 = vunpack.c.l.b16 %v607
  %v792 = vunpack.c.h.b16 %v607
  %v793 = vunpack.c.l.b16 %v608
  %v794 = vunpack.c.h.b16 %v608
  %v795 = vunpack.c.l.b16 %v609
  %v796 = vunpack.c.h.b16 %v609
  %v797 = vunpack.c.l.b16 %v610
  %v798 = vunpack.c.h.b16 %v610
  %v799 = vunpack.c.l.b16 %v611
  %v800 = vunpack.c.h.b16 %v611
  %v801 = vunpack.c.l.b16 %v612
  %v802 = vunpack.c.h.b16 %v612
  %v803 = vunpack.c.l.b16 %v613
  %v804 = vunpack.c.h.b16 %v613
  %v805 = vunpack.c.l.b16 %v614
  %v806 = vunpack.c.h.b16 %v614
  %v807 = vpack.c.b16 %v681, %v679
  %v808 = vpack.c.b16 %v682, %v680
  %v809 = vpack.c.b16 %v685, %v683
  %v810 = vpack.c.b16 %v686, %v684
  %v811 = vpack.c.b16 %v689, %v687
  %v812 = vpack.c.b16 %v690, %v688
  %v813 = vpack.c.b16 %v693, %v691
  %v814 = vpack.c.b16 %v694, %v692
  %v815 = vpack.c.b16 %v697, %v695
  %v816 = vpack.c.b16 %v698, %v696
  %v817 = vpack.c.b16 %v701, %v699
  %v818 = vpack.c.b16 %v702, %v700
  %v819 = vpack.c.b16 %v705, %v703
  %v820 = vpack.c.b16 %v706, %v704
  %v821 = vpack.c.b16 %v709, %v707
  %v822 = vpack.c.b16 %v710, %v708
  %v823 = vpack.c.b16 %v713, %v711
  %v824 = vpack.c.b16 %v714, %v712
  %v825 = vpack.c.b16 %v717, %v715
  %v826 = vpack.c.b16 %v718, %v716
  %v827 = vpack.c.b16 %v721, %v719
  %v828 = vpack.c.b16 %v722, %v720
  %v829 = vpack.c.b16 %v725, %v723
  %v830 = vpack.c.b16 %v726, %v724
  %v831 = vpack.c.b16 %v729, %v727
  %v832 = vpack.c.b16 %v730, %v728
  %v833 = vpack.c.b16 %v733, %v731
  %v834 = vpack.c.b16 %v734, %v732
  %v835 = vpack.c.b16 %v737, %v735
  %v836 = vpack.c.b16 %v738, %v736
  %v837 = vpack.c.b16 %v741, %v739
  %v838 = vpack.c.b16 %v742, %v740
  %v839 = vpack.c.b16 %v745, %v743
  %v840 = vpack.c.b16 %v746, %v744
  %v841 = vpack.c.b16 %v749, %v747
  %v842 = vpack.c.b16 %v750, %v748
  %v843 = vpack.c.b16 %v753, %v751
  %v844 = vpack.c.b16 %v754, %v752
  %v845 = vpack.c.b16 %v757, %v755
  %v846 = vpack.c.b16 %v758, %v756
  %v847 = vpack.c.b16 %v761, %v759
  %v848 = vpack.c.b16 %v762, %v760
  %v849 = vpack.c.b16 %v765, %v763
  %v850 = vpack.c.b16 %v766, %v764
  %v851 = vpack.c.b16 %v769, %v767
  %v852 = vpack.c.b16 %v770, %v768
  %v853 = vpack.c.b16 %v773, %v771
  %v854 = vpack.c.b16 %v774, %v772
  %v855 = vpack.c.b16 %v777, %v775
  %v856 = vpack.c.b16 %v778, %v776
  %v857 = vpack.c.b16 %v781, %v779
  %v858 = vpack.c.b16 %v782, %v780
  %v859 = vpack.c.b16 %v785, %v783
  %v860 = vpack.c.b16 %v786, %v784
  %v861 = vpack.c.b16 %v789, %v787
  %v862 = vpack.c.b16 %v790, %v788
  %v863 = vpack.c.b16 %v793, %v791
  %v864 = vpack.c.b16 %v794, %v792
  %v865 = vpack.c.b16 %v797, %v795
  %v866 = vpack.c.b16 %v798, %v796
  %v867 = vpack.c.b16 %v801, %v799
  %v868 = vpack.c.b16 %v802, %v800
  %v869 = vpack.c.b16 %v805, %v803
  %v870 = vpack.c.b16 %v806, %v804
  %935 = vmatprep.subr.bf16.mxu0 %v808
  %936 = vmatpush1.bf16.msra.mxu0 %v807
  %937 = vmatprep.subr.bf16.mxu0 %v810
  %938 = vmatpush1.bf16.msra.mxu0 %v809
  %939 = vmatprep.subr.bf16.mxu0 %v812
  %940 = vmatpush1.bf16.msra.mxu0 %v811
  %941 = vmatprep.subr.bf16.mxu0 %v814
  %942 = vmatpush1.bf16.msra.mxu0 %v813
  %943 = vmatprep.subr.bf16.mxu0 %v816
  %944 = vmatpush1.bf16.msra.mxu0 %v815
  %945 = vmatprep.subr.bf16.mxu0 %v818
  %946 = vmatpush1.bf16.msra.mxu0 %v817
  %947 = vmatprep.subr.bf16.mxu0 %v820
  %948 = vmatpush1.bf16.msra.mxu0 %v819
  %949 = vmatprep.subr.bf16.mxu0 %v822
  %950 = vmatpush1.bf16.msra.mxu0 %v821
  %951 = vmatprep.subr.bf16.mxu0 %v824
  %952 = vmatpush1.bf16.msra.mxu0 %v823
  %953 = vmatprep.subr.bf16.mxu0 %v826
  %954 = vmatpush1.bf16.msra.mxu0 %v825
  %955 = vmatprep.subr.bf16.mxu0 %v828
  %956 = vmatpush1.bf16.msra.mxu0 %v827
  %957 = vmatprep.subr.bf16.mxu0 %v830
  %958 = vmatpush1.bf16.msra.mxu0 %v829
  %959 = vmatprep.subr.bf16.mxu0 %v832
  %960 = vmatpush1.bf16.msra.mxu0 %v831
  %961 = vmatprep.subr.bf16.mxu0 %v834
  %962 = vmatpush1.bf16.msra.mxu0 %v833
  %963 = vmatprep.subr.bf16.mxu0 %v836
  %964 = vmatpush1.bf16.msra.mxu0 %v835
  %965 = vmatprep.subr.bf16.mxu0 %v838
  %966 = vmatpush1.bf16.msra.mxu0 %v837
  %967 = vmatprep.mubr.bf16.mxu0 %v548
  %968 = vmatmul.mubr.bf16.gmra.mrb[0].mxu0 %v547
  %v969 = vpop.f32.mrb[0].mxu0
  %v970 = vadd.f32 0.0, %v969
  %v971 = vpop.f32.mrb[0].mxu0
  %v972 = vadd.f32 0.0, %v971
  %v973 = vpop.f32.mrb[0].mxu0
  %v974 = vadd.f32 0.0, %v973
  %v975 = vpop.f32.mrb[0].mxu0
  %v976 = vadd.f32 0.0, %v975
  %977 = vdwg.mxu0
  %978 = vmatprep.subr.bf16.mxu0 %v840
  %979 = vmatpush1.bf16.msra.mxu0 %v839
  %980 = vmatprep.subr.bf16.mxu0 %v842
  %981 = vmatpush1.bf16.msra.mxu0 %v841
  %982 = vmatprep.subr.bf16.mxu0 %v844
  %983 = vmatpush1.bf16.msra.mxu0 %v843
  %984 = vmatprep.subr.bf16.mxu0 %v846
  %985 = vmatpush1.bf16.msra.mxu0 %v845
  %986 = vmatprep.subr.bf16.mxu0 %v848
  %987 = vmatpush1.bf16.msra.mxu0 %v847
  %988 = vmatprep.subr.bf16.mxu0 %v850
  %989 = vmatpush1.bf16.msra.mxu0 %v849
  %990 = vmatprep.subr.bf16.mxu0 %v852
  %991 = vmatpush1.bf16.msra.mxu0 %v851
  %992 = vmatprep.subr.bf16.mxu0 %v854
  %993 = vmatpush1.bf16.msra.mxu0 %v853
  %994 = vmatprep.subr.bf16.mxu0 %v856
  %995 = vmatpush1.bf16.msra.mxu0 %v855
  %996 = vmatprep.subr.bf16.mxu0 %v858
  %997 = vmatpush1.bf16.msra.mxu0 %v857
  %998 = vmatprep.subr.bf16.mxu0 %v860
  %999 = vmatpush1.bf16.msra.mxu0 %v859
  %1000 = vmatprep.subr.bf16.mxu0 %v862
  %1001 = vmatpush1.bf16.msra.mxu0 %v861
  %1002 = vmatprep.subr.bf16.mxu0 %v864
  %1003 = vmatpush1.bf16.msra.mxu0 %v863
  %1004 = vmatprep.subr.bf16.mxu0 %v866
  %1005 = vmatpush1.bf16.msra.mxu0 %v865
  %1006 = vmatprep.subr.bf16.mxu0 %v868
  %1007 = vmatpush1.bf16.msra.mxu0 %v867
  %1008 = vmatprep.subr.bf16.mxu0 %v870
  %1009 = vmatpush1.bf16.msra.mxu0 %v869
  %1010 = vmatprep.mubr.bf16.mxu0 %v550
  %1011 = vmatmul.mubr.bf16.gmra.mrb[0].mxu0 %v549
  %v1012 = vpop.f32.mrb[0].mxu0
  %v1013 = vadd.f32 %v970, %v1012
  %v1014 = vpop.f32.mrb[0].mxu0
  %v1015 = vadd.f32 %v972, %v1014
  %v1016 = vpop.f32.mrb[0].mxu0
  %v1017 = vadd.f32 %v974, %v1016
  %v1018 = vpop.f32.mrb[0].mxu0
  %v1019 = vadd.f32 %v976, %v1018
  %1020 = vdwg.mxu0
  %v1021 = vadd.f32 %v543, %v1013
  %v1022 = vadd.f32 %v544, %v1015
  %v1023 = vadd.f32 %v545, %v1017
  %v1024 = vadd.f32 %v546, %v1019
  %1025 = vst [vmem:[#allocation2] sm:$0xff] %v1021
  %1026 = vst [vmem:[#allocation2 + $0x8] sm:$0xff] %v1022
  %1027 = vst [vmem:[#allocation2 + $0x10] sm:$0xff] %v1023
  %1028 = vst [vmem:[#allocation2 + $0x18] sm:$0xff] %v1024
  // Predicated region
  $region38: #{transformer_forward.30} parent=0 // pred_check
    %p1029 = pneg %p29
  $region39: #{transformer_forward.30} parent=0 // pred_check_branch
    %1031 = sbr.rel (%p1029) target = $region41
  $region40: #{transformer_forward.30} parent=0 // pred_region
    %v1032 = vld [vmem:[#allocation2] sm:$0xff]
    %v1033 = vld [vmem:[#allocation2 + $0x8] sm:$0xff]
    %v1034 = vld [vmem:[#allocation2 + $0x10] sm:$0xff]
    %v1035 = vld [vmem:[#allocation2 + $0x18] sm:$0xff]
    %v1036 = vld [vmem:[%s4] sm:$0x3]
    %v1038 = vlaneseq
    %v1039 = vshrl.u32 %v1038, 7
    %v1040 = vsub.s32 0, %v1039
    %v1041 = vrot.slane %v1036, %v1040
    %v1042 = vlaneseq
    %v1043 = vshrl.u32 %v1042, 7
    %v1044 = vsub.s32 1, %v1043
    %v1045 = vrot.slane %v1036, %v1044
    %v1048 = vadd.f32 %v1032, %v1041
    %v1049 = vadd.f32 %v1033, %v1045
    %v1050 = vadd.f32 %v1034, %v1041
    %v1051 = vadd.f32 %v1035, %v1045
    %v1052 = vld [vmem:[%s5] sm:$0xff]
    %v1053 = vld [vmem:[%s5 + $0x8] sm:$0xff]
    %v1054 = vld [vmem:[%s5 + $0x10] sm:$0xff]
    %v1055 = vld [vmem:[%s5 + $0x18] sm:$0xff]
    %v1056 = vadd.f32 %v1048, %v1052
    %v1057 = vadd.f32 %v1049, %v1053
    %v1058 = vadd.f32 %v1050, %v1054
    %v1059 = vadd.f32 %v1051, %v1055
    %v1060 = vadd.f32 %v1056, %v1057
    %1061 = vadd.xlane.f32.xlu0 %v1060
    %v1062 = vpop.xlane.xlu0 %1061
    %v1063 = vadd.f32 %v1058, %v1059
    %1064 = vadd.xlane.f32.xlu0 %v1063
    %v1065 = vpop.xlane.xlu0 %1064
    %v1066 = vrcp.pop 256.0
    %v1067 = vmul.f32 %v1062, %v1066
    %v1068 = vmul.f32 %v1065, %v1066
    %v1069 = vsub.f32 %v1056, %v1067
    %v1070 = vsub.f32 %v1057, %v1067
    %v1071 = vsub.f32 %v1058, %v1068
    %v1072 = vsub.f32 %v1059, %v1068
    %v1073 = vmul.f32 %v1069, %v1069
    %v1074 = vmul.f32 %v1070, %v1070
    %v1075 = vmul.f32 %v1071, %v1071
    %v1076 = vmul.f32 %v1072, %v1072
    %v1077 = vadd.f32 %v1073, %v1074
    %1078 = vadd.xlane.f32.xlu0 %v1077
    %v1079 = vpop.xlane.xlu0 %1078
    %v1080 = vadd.f32 %v1075, %v1076
    %1081 = vadd.xlane.f32.xlu0 %v1080
    %v1082 = vpop.xlane.xlu0 %1081
    %v1083 = vmul.f32 %v1079, %v1066
    %v1084 = vmul.f32 %v1082, %v1066
    %v1085 = vadd.f32 %v1083, 1e-05
    %v1086 = vadd.f32 %v1084, 1e-05
    %v1087 = vrsqrt.pop %v1085
    %v1088 = vrsqrt.pop %v1086
    %v1089 = vmul.f32 %v1069, %v1087
    %v1090 = vmul.f32 %v1070, %v1087
    %v1091 = vmul.f32 %v1071, %v1088
    %v1092 = vmul.f32 %v1072, %v1088
    %v1093 = vld [vmem:[%s6] sm:$0x3]
    %v1095 = vlaneseq
    %v1096 = vshrl.u32 %v1095, 7
    %v1097 = vsub.s32 0, %v1096
    %v1098 = vrot.slane %v1093, %v1097
    %v1099 = vlaneseq
    %v1100 = vshrl.u32 %v1099, 7
    %v1101 = vsub.s32 1, %v1100
    %v1102 = vrot.slane %v1093, %v1101
    %v1105 = vmul.f32 %v1089, %v1098
    %v1106 = vmul.f32 %v1090, %v1102
    %v1107 = vmul.f32 %v1091, %v1098
    %v1108 = vmul.f32 %v1092, %v1102
    %v1109 = vld [vmem:[%s7] sm:$0x3]
    %v1111 = vlaneseq
    %v1112 = vshrl.u32 %v1111, 7
    %v1113 = vsub.s32 0, %v1112
    %v1114 = vrot.slane %v1109, %v1113
    %v1115 = vlaneseq
    %v1116 = vshrl.u32 %v1115, 7
    %v1117 = vsub.s32 1, %v1116
    %v1118 = vrot.slane %v1109, %v1117
    %v1121 = vadd.f32 %v1105, %v1114
    %v1122 = vadd.f32 %v1106, %v1118
    %v1123 = vadd.f32 %v1107, %v1114
    %v1124 = vadd.f32 %v1108, %v1118
    %1125 = vst [vmem:[%s8] sm:$0xff] %v1121
    %1126 = vst [vmem:[%s8 + $0x8] sm:$0xff] %v1122
    %1127 = vst [vmem:[%s8 + $0x10] sm:$0xff] %v1123
    %1128 = vst [vmem:[%s8 + $0x18] sm:$0xff] %v1124
  $region41: #{transformer_forward.30} parent=0 // pred_fallthru
    _
  // Predicated region
  $region42: #{transformer_forward.30} parent=0 // pred_check
    _
  $region43: #{transformer_forward.30} parent=0 // pred_check_branch
    %1130 = sbr.rel (0) target = $region45
  $region44: #{transformer_forward.30} parent=0 // pred_region
    _
  $region45: #{transformer_forward.30} parent=0 // pred_fallthru
    _
  // Predicated region
  $region46: #{transformer_forward.30} parent=0 // pred_check
    _
  $region47: #{transformer_forward.30} parent=0 // pred_check_branch
    %1132 = sbr.rel (0) target = $region49
  $region48: #{transformer_forward.30} parent=0 // pred_region
    _
  $region49: #{transformer_forward.30} parent=0 // pred_fallthru
    _

// kernel: transformer_forward.51
$region0: #{transformer_forward.51}
  #allocation0 [shape = 'u32[]', space=smem, size = 0x4, offset = 0x4, fixed_abs, tag = 'smem constant byte address 0x4 - core index']
  #allocation1 [shape = 'u32[144,128]{1,0:T(1,128)}', space=vmem, size = 0x12000, scoped, tag = 'internal scratch']
  %s0 = inlined_call_operand.vmem [shape: f32[16,256], index: 0, kind: input, shape index: {}]
  %s1 = inlined_call_operand.vmem [shape: bf16[256,128], index: 1, kind: input, shape index: {}]
  %s2 = inlined_call_operand.vmem [shape: f32[1,128], index: 2, kind: input, shape index: {}]
  %s3 = inlined_call_operand.vmem [shape: f32[16,128], index: 3, kind: output, shape index: {}]
  %s4 = sld [smem:[#allocation0]]
  $region22: #{transformer_forward.51} parent=0
    _
  %s6 = ssub.s32 1, %s4
  %s7 = scalar_select 0, %s6, %s4
  // Predicated region
  $region2: #{transformer_forward.51} parent=0 // pred_check
    _
  $region3: #{transformer_forward.51} parent=0 // pred_check_branch
    %9 = sbr.rel (0) target = $region5
  $region4: #{transformer_forward.51} parent=0 // pred_region
    _
  $region5: #{transformer_forward.51} parent=0 // pred_fallthru
    _
  // Predicated region
  $region6: #{transformer_forward.51} parent=0 // pred_check
    _
  $region7: #{transformer_forward.51} parent=0 // pred_check_branch
    %11 = sbr.rel (0) target = $region9
  $region8: #{transformer_forward.51} parent=0 // pred_region
    _
  $region9: #{transformer_forward.51} parent=0 // pred_fallthru
    _
  // Predicated region
  $region10: #{transformer_forward.51} parent=0 // pred_check
    _
  $region11: #{transformer_forward.51} parent=0 // pred_check_branch
    %13 = sbr.rel (0) target = $region13
  $region12: #{transformer_forward.51} parent=0 // pred_region
    _
  $region13: #{transformer_forward.51} parent=0 // pred_fallthru
    _
  %v15 = vld [vmem:[%s0] sm:$0xff]
  %v16 = vld [vmem:[%s0 + $0x8] sm:$0xff]
  %v17 = vld [vmem:[%s0 + $0x10] sm:$0xff]
  %v18 = vld [vmem:[%s0 + $0x18] sm:$0xff]
  %v19 = vmax.f32 %v15, 0.0
  %v20 = vmax.f32 %v16, 0.0
  %v21 = vmax.f32 %v17, 0.0
  %v22 = vmax.f32 %v18, 0.0
  %v23 = vpack.c.bf16 %v21, %v19
  %v24 = vpack.c.bf16 %v22, %v20
  %v25 = vld [vmem:[%s1] sm:$0xf]
  %v26 = vld [vmem:[%s1 + $0x4] sm:$0xf]
  %v27 = vld [vmem:[%s1 + $0x8] sm:$0xf]
  %v28 = vld [vmem:[%s1 + $0xc] sm:$0xf]
  %v29 = vld [vmem:[%s1 + $0x10] sm:$0xf]
  %v30 = vld [vmem:[%s1 + $0x14] sm:$0xf]
  %v31 = vld [vmem:[%s1 + $0x18] sm:$0xf]
  %v32 = vld [vmem:[%s1 + $0x1c] sm:$0xf]
  %v33 = vld [vmem:[%s1 + $0x20] sm:$0xf]
  %v34 = vld [vmem:[%s1 + $0x24] sm:$0xf]
  %v35 = vld [vmem:[%s1 + $0x28] sm:$0xf]
  %v36 = vld [vmem:[%s1 + $0x2c] sm:$0xf]
  %v37 = vld [vmem:[%s1 + $0x30] sm:$0xf]
  %v38 = vld [vmem:[%s1 + $0x34] sm:$0xf]
  %v39 = vld [vmem:[%s1 + $0x38] sm:$0xf]
  %v40 = vld [vmem:[%s1 + $0x3c] sm:$0xf]
  %v41 = vld [vmem:[%s1 + $0x40] sm:$0xf]
  %v42 = vld [vmem:[%s1 + $0x44] sm:$0xf]
  %v43 = vld [vmem:[%s1 + $0x48] sm:$0xf]
  %v44 = vld [vmem:[%s1 + $0x4c] sm:$0xf]
  %v45 = vld [vmem:[%s1 + $0x50] sm:$0xf]
  %v46 = vld [vmem:[%s1 + $0x54] sm:$0xf]
  %v47 = vld [vmem:[%s1 + $0x58] sm:$0xf]
  %v48 = vld [vmem:[%s1 + $0x5c] sm:$0xf]
  %v49 = vld [vmem:[%s1 + $0x60] sm:$0xf]
  %v50 = vld [vmem:[%s1 + $0x64] sm:$0xf]
  %v51 = vld [vmem:[%s1 + $0x68] sm:$0xf]
  %v52 = vld [vmem:[%s1 + $0x6c] sm:$0xf]
  %v53 = vld [vmem:[%s1 + $0x70] sm:$0xf]
  %v54 = vld [vmem:[%s1 + $0x74] sm:$0xf]
  %v55 = vld [vmem:[%s1 + $0x78] sm:$0xf]
  %v56 = vld [vmem:[%s1 + $0x7c] sm:$0xf]
  %v57 = vld [vmem:[%s2] sm:$0x1]
  %v59 = vlaneseq
  %v60 = vshrl.u32 %v59, 7
  %v61 = vsub.s32 0, %v60
  %v62 = vrot.slane %v57, %v61
  %v96 = vunpack.c.l.b16 %v25
  %v97 = vunpack.c.l.b16 %v26
  %v98 = vunpack.c.l.b16 %v27
  %v99 = vunpack.c.l.b16 %v28
  %v100 = vunpack.c.l.b16 %v29
  %v101 = vunpack.c.l.b16 %v30
  %v102 = vunpack.c.l.b16 %v31
  %v103 = vunpack.c.l.b16 %v32
  %v104 = vunpack.c.l.b16 %v33
  %v105 = vunpack.c.l.b16 %v34
  %v106 = vunpack.c.l.b16 %v35
  %v107 = vunpack.c.l.b16 %v36
  %v108 = vunpack.c.l.b16 %v37
  %v109 = vunpack.c.l.b16 %v38
  %v110 = vunpack.c.l.b16 %v39
  %v111 = vunpack.c.l.b16 %v40
  %v112 = vunpack.c.l.b16 %v41
  %v113 = vunpack.c.l.b16 %v42
  %v114 = vunpack.c.l.b16 %v43
  %v115 = vunpack.c.l.b16 %v44
  %v116 = vunpack.c.l.b16 %v45
  %v117 = vunpack.c.l.b16 %v46
  %v118 = vunpack.c.l.b16 %v47
  %v119 = vunpack.c.l.b16 %v48
  %v120 = vunpack.c.l.b16 %v49
  %v121 = vunpack.c.l.b16 %v50
  %v122 = vunpack.c.l.b16 %v51
  %v123 = vunpack.c.l.b16 %v52
  %v124 = vunpack.c.l.b16 %v53
  %v125 = vunpack.c.l.b16 %v54
  %v126 = vunpack.c.l.b16 %v55
  %v127 = vunpack.c.l.b16 %v56
  %v128 = vpack.c.b16 %v97, %v96
  %v129 = vpack.c.b16 %v99, %v98
  %v130 = vpack.c.b16 %v101, %v100
  %v131 = vpack.c.b16 %v103, %v102
  %v132 = vpack.c.b16 %v105, %v104
  %v133 = vpack.c.b16 %v107, %v106
  %v134 = vpack.c.b16 %v109, %v108
  %v135 = vpack.c.b16 %v111, %v110
  %v136 = vpack.c.b16 %v113, %v112
  %v137 = vpack.c.b16 %v115, %v114
  %v138 = vpack.c.b16 %v117, %v116
  %v139 = vpack.c.b16 %v119, %v118
  %v140 = vpack.c.b16 %v121, %v120
  %v141 = vpack.c.b16 %v123, %v122
  %v142 = vpack.c.b16 %v125, %v124
  %v143 = vpack.c.b16 %v127, %v126
  %160 = vmatprep.subr.bf16.mxu0 0
  %161 = vmatpush1.bf16.msra.mxu0 %v128
  %162 = vmatprep.subr.bf16.mxu0 0
  %163 = vmatpush1.bf16.msra.mxu0 %v129
  %164 = vmatprep.subr.bf16.mxu0 0
  %165 = vmatpush1.bf16.msra.mxu0 %v130
  %166 = vmatprep.subr.bf16.mxu0 0
  %167 = vmatpush1.bf16.msra.mxu0 %v131
  %168 = vmatprep.subr.bf16.mxu0 0
  %169 = vmatpush1.bf16.msra.mxu0 %v132
  %170 = vmatprep.subr.bf16.mxu0 0
  %171 = vmatpush1.bf16.msra.mxu0 %v133
  %172 = vmatprep.subr.bf16.mxu0 0
  %173 = vmatpush1.bf16.msra.mxu0 %v134
  %174 = vmatprep.subr.bf16.mxu0 0
  %175 = vmatpush1.bf16.msra.mxu0 %v135
  %176 = vmatprep.subr.bf16.mxu0 0
  %177 = vmatpush1.bf16.msra.mxu0 %v136
  %178 = vmatprep.subr.bf16.mxu0 0
  %179 = vmatpush1.bf16.msra.mxu0 %v137
  %180 = vmatprep.subr.bf16.mxu0 0
  %181 = vmatpush1.bf16.msra.mxu0 %v138
  %182 = vmatprep.subr.bf16.mxu0 0
  %183 = vmatpush1.bf16.msra.mxu0 %v139
  %184 = vmatprep.subr.bf16.mxu0 0
  %185 = vmatpush1.bf16.msra.mxu0 %v140
  %186 = vmatprep.subr.bf16.mxu0 0
  %187 = vmatpush1.bf16.msra.mxu0 %v141
  %188 = vmatprep.subr.bf16.mxu0 0
  %189 = vmatpush1.bf16.msra.mxu0 %v142
  %190 = vmatprep.subr.bf16.mxu0 0
  %191 = vmatpush1.bf16.msra.mxu0 %v143
  %192 = vmatprep.mubr.bf16.mxu0 %v24
  %193 = vmatmul.mubr.bf16.gmra.mrb[0].mxu0 %v23
  %v194 = vpop.f32.mrb[0].mxu0
  %v195 = vadd.f32 %v62, %v194
  %v196 = vpop.f32.mrb[0].mxu0
  %v197 = vpop.f32.mrb[0].mxu0
  %v198 = vadd.f32 %v62, %v197
  %v199 = vpop.f32.mrb[0].mxu0
  %200 = vdwg.mxu0
  %201 = vst [vmem:[%s3] sm:$0xff] %v195
  %202 = vst [vmem:[%s3 + $0x8] sm:$0xff] %v198
  // Predicated region
  $region14: #{transformer_forward.51} parent=0 // pred_check
    _
  $region15: #{transformer_forward.51} parent=0 // pred_check_branch
    %204 = sbr.rel (0) target = $region17
  $region16: #{transformer_forward.51} parent=0 // pred_region
    _
  $region17: #{transformer_forward.51} parent=0 // pred_fallthru
    _
  // Predicated region
  $region18: #{transformer_forward.51} parent=0 // pred_check
    _
  $region19: #{transformer_forward.51} parent=0 // pred_check_branch
    %206 = sbr.rel (0) target = $region21
  $region20: #{transformer_forward.51} parent=0 // pred_region
    _
  $region21: #{transformer_forward.51} parent=0 // pred_fallthru
    _

</llo_original>
